<compile_context>
chip_gen: v7x
topology: tpu7x:2x2x1
jax: 0.10.0
libtpu: 0.0.40
codegen_flags: <defaults>
</compile_context>

<pallas_src>
import functools

import jax
import jax.numpy as jnp
from jax.experimental import pallas as pl
from jax.experimental.pallas import tpu as pltpu


# -----------------------------------------------------------------------------
# Fused kernel: conv1+BN+ReLU -> conv2+BN -> SE -> +residual -> ReLU
# -----------------------------------------------------------------------------
def _se_basic_block_kernel(x_ref, w1_ref, s1_ref, b1_ref, w2_ref, s2_ref,
                           b2_ref, fc1_ref, fc2_ref, o_ref, xpad, h1pad,
                           *, H, W, Cin, Cout, Cr, compute_dtype):
    # x_ref : (1, H, W, Cin)   one batch element (also the identity residual)
    # w1_ref: (9*Cin, Cout)    conv1 weights, im2col-reshaped (dy, dx, ci major->minor)
    # w2_ref: (9*Cout, Cout)   conv2 weights, im2col-reshaped
    # s*/b* : (1, Cout)        folded BatchNorm scale / bias
    # fc1   : (Cout, Cr) ; fc2: (Cr, Cout)   SE weights
    # xpad  : VMEM (H+2, W+2, Cin)   zero-halo copy of the input
    # h1pad : VMEM (H+2, W+2, Cout)  zero-halo conv1 output
    del Cr  # shape is implied by fc1_ref

    # Zero the halo every grid step (scratch persists across steps/cores, so we
    # cannot rely on a program_id==0 init under "parallel" semantics).
    xpad[...] = jnp.zeros_like(xpad)
    h1pad[...] = jnp.zeros_like(h1pad)

    x = x_ref[0].astype(jnp.float32)                        # (H, W, Cin)
    xpad[1:H + 1, 1:W + 1, :] = x

    def conv3x3(src_pad, w_ref, cin):
        # im2col: one (H*W, 9*cin) x (9*cin, Cout) MXU matmul.
        pieces = [src_pad[dy:dy + H, dx:dx + W, :].reshape(H * W, cin)
                  for dy in range(3) for dx in range(3)]
        patches = jnp.concatenate(pieces, axis=-1)          # (H*W, 9*cin)
        return jnp.dot(patches.astype(compute_dtype), w_ref[...],
                       preferred_element_type=jnp.float32)  # (H*W, Cout) f32

    # conv1 + folded BN + ReLU  (stays in VMEM)
    h1 = conv3x3(xpad, w1_ref, Cin)
    h1 = jnp.maximum(h1 * s1_ref[0] + b1_ref[0], 0.0)
    h1pad[1:H + 1, 1:W + 1, :] = h1.reshape(H, W, Cout)

    # conv2 + folded BN (no activation)
    h2 = conv3x3(h1pad, w2_ref, Cout)
    h2 = h2 * s2_ref[0] + b2_ref[0]

    # SE epilogue: squeeze -> fc1 -> ReLU -> fc2 -> sigmoid -> channel scale
    y = jnp.mean(h2, axis=0, keepdims=True)                 # (1, Cout)
    h = jnp.maximum(
        jnp.dot(y.astype(compute_dtype), fc1_ref[...],
                preferred_element_type=jnp.float32), 0.0)   # (1, Cr)
    gate = jax.nn.sigmoid(
        jnp.dot(h.astype(compute_dtype), fc2_ref[...],
                preferred_element_type=jnp.float32))        # (1, Cout)

    # scale + identity residual + ReLU, single HBM write
    out = h2 * gate + x.reshape(H * W, Cin)
    o_ref[...] = jnp.maximum(out, 0.0).reshape(1, H, W, Cout)


def se_basic_block_forward(x_nchw, p, *, compute_dtype=jnp.float32):
    """SeBasicBlock forward. x_nchw: (N, C, H, W) f32, PyTorch layout."""
    x = jnp.transpose(x_nchw, (0, 2, 3, 1)).astype(jnp.float32)  # NCHW -> NHWC
    N, H, W, Cin = x.shape
    Cout = p["w1"].shape[-1]
    Cr = p["fc1"].shape[-1]
    assert Cin == Cout, "identity residual requires in_channels == out_channels"

    # im2col-reshape conv weights; MXU operands in compute_dtype (bf16 on v6e/v7x).
    w1 = p["w1"].reshape(9 * Cin, Cout).astype(compute_dtype)
    w2 = p["w2"].reshape(9 * Cout, Cout).astype(compute_dtype)
    fc1 = p["fc1"].astype(compute_dtype)
    fc2 = p["fc2"].astype(compute_dtype)

    kernel = functools.partial(_se_basic_block_kernel, H=H, W=W, Cin=Cin,
                               Cout=Cout, Cr=Cr, compute_dtype=compute_dtype)
    out = pl.pallas_call(
        kernel,
        out_shape=jax.ShapeDtypeStruct((N, H, W, Cout), jnp.float32),
        grid_spec=pltpu.PrefetchScalarGridSpec(
            num_scalar_prefetch=0,
            grid=(N,),
            in_specs=[
                pl.BlockSpec((1, H, W, Cin), lambda n: (n, 0, 0, 0)),
                pl.BlockSpec((9 * Cin, Cout), lambda n: (0, 0)),
                pl.BlockSpec((1, Cout), lambda n: (0, 0)),
                pl.BlockSpec((1, Cout), lambda n: (0, 0)),
                pl.BlockSpec((9 * Cout, Cout), lambda n: (0, 0)),
                pl.BlockSpec((1, Cout), lambda n: (0, 0)),
                pl.BlockSpec((1, Cout), lambda n: (0, 0)),
                pl.BlockSpec((Cout, Cr), lambda n: (0, 0)),
                pl.BlockSpec((Cr, Cout), lambda n: (0, 0)),
            ],
            out_specs=pl.BlockSpec((1, H, W, Cout), lambda n: (n, 0, 0, 0)),
            scratch_shapes=[
                pltpu.VMEM((H + 2, W + 2, Cin), jnp.float32),   # padded input
                pltpu.VMEM((H + 2, W + 2, Cout), jnp.float32),  # padded conv1 out
            ],
        ),
        compiler_params=pltpu.CompilerParams(
            dimension_semantics=("parallel",),
            vmem_limit_bytes=32 * 1024 * 1024,
        ),
    )(x, w1, p["s1"], p["b1"], w2, p["s2"], p["b2"], fc1, fc2)
    return jnp.transpose(out, (0, 3, 1, 2))  # back to NCHW


# -----------------------------------------------------------------------------
# Deterministic parameter construction (folded inference BN)
# -----------------------------------------------------------------------------
def init_params(key, in_channels, out_channels, reduction):
    ks = jax.random.split(key, 8)
    cr = out_channels // reduction
    eps = 1e-5

    def bn_fold(kg, kb, km, kv, c):
        gamma = 1.0 + 0.1 * jax.random.normal(kg, (c,), jnp.float32)
        beta = 0.1 * jax.random.normal(kb, (c,), jnp.float32)
        mean = 0.05 * jax.random.normal(km, (c,), jnp.float32)
        var = jnp.abs(0.5 + 0.1 * jax.random.normal(kv, (c,), jnp.float32))
        scale = gamma / jnp.sqrt(var + eps)
        bias = beta - mean * scale
        return scale.reshape(1, c), bias.reshape(1, c)

    # conv weights in HWIO layout (PyTorch OIHW transposed)
    w1 = 0.1 * jax.random.normal(ks[0], (3, 3, in_channels, out_channels), jnp.float32)
    w2 = 0.1 * jax.random.normal(ks[1], (3, 3, out_channels, out_channels), jnp.float32)
    kbn = jax.random.split(ks[2], 8)
    s1, b1 = bn_fold(kbn[0], kbn[1], kbn[2], kbn[3], out_channels)
    s2, b2 = bn_fold(kbn[4], kbn[5], kbn[6], kbn[7], out_channels)
    # SE fc weights: Linear(C, C/r, bias=False), Linear(C/r, C, bias=False)
    fc1 = 0.2 * jax.random.normal(ks[3], (out_channels, cr), jnp.float32)
    fc2 = 0.2 * jax.random.normal(ks[4], (cr, out_channels), jnp.float32)
    return dict(w1=w1, s1=s1, b1=b1, w2=w2, s2=s2, b2=b2, fc1=fc1, fc2=fc2)


# pure-JAX reference (sanity check for the Pallas path)
def _reference(x_nchw, p):
    x = jnp.transpose(x_nchw, (0, 2, 3, 1)).astype(jnp.float32)

    def conv_bn(xx, w, s, b, relu):
        y = jax.lax.conv_general_dilated(
            xx, w, window_strides=(1, 1), padding="SAME",
            dimension_numbers=("NHWC", "HWIO", "NHWC"))
        y = y * s.reshape(1, 1, 1, -1) + b.reshape(1, 1, 1, -1)
        return jnp.maximum(y, 0.0) if relu else y

    out = conv_bn(x, p["w1"], p["s1"], p["b1"], True)
    out = conv_bn(out, p["w2"], p["s2"], p["b2"], False)
    y = jnp.mean(out, axis=(1, 2))                      # (N, C)
    h = jnp.maximum(y @ p["fc1"], 0.0)
    s = jax.nn.sigmoid(h @ p["fc2"])
    out = out * s[:, None, None, :] + x
    out = jnp.maximum(out, 0.0)
    return jnp.transpose(out, (0, 3, 1, 2))


if __name__ == "__main__":
    N, C, H, W = 2, 16, 16, 16
    reduction = 4
    key = jax.random.PRNGKey(0)
    kx, kp = jax.random.split(key)
    x = jax.random.normal(kx, (N, C, H, W), jnp.float32)
    params = init_params(kp, in_channels=C, out_channels=C, reduction=reduction)

    # f32 path (default) vs XLA reference
    out = jax.block_until_ready(se_basic_block_forward(x, params))
    ref = jax.block_until_ready(_reference(x, params))
    assert out.shape == (N, C, H, W)
    assert jnp.allclose(out, ref, atol=2e-2, rtol=2e-2), "f32 mismatch vs reference"

    # bf16 MXU-operand path (v6e/v7x recommendation); compared against the f32
    # kernel output so the check isolates the bf16 cast error only.
    out_bf16 = jax.block_until_ready(
        se_basic_block_forward(x, params, compute_dtype=jnp.bfloat16))
    assert jnp.allclose(out_bf16, out, atol=7e-2, rtol=7e-2), "bf16 path mismatch"

    print("KERNEL_OK")
</pallas_src>

<mosaic_0001>
module attributes {stable_mosaic.version = 11 : i64} {
  func.func @_se_basic_block_kernel(%arg0: i32, %arg1: memref<1x16x16x16xf32, #tpu.memory_space<vmem>>, %arg2: memref<144x16xf32, #tpu.memory_space<vmem>>, %arg3: memref<1x16xf32, #tpu.memory_space<vmem>>, %arg4: memref<1x16xf32, #tpu.memory_space<vmem>>, %arg5: memref<144x16xf32, #tpu.memory_space<vmem>>, %arg6: memref<1x16xf32, #tpu.memory_space<vmem>>, %arg7: memref<1x16xf32, #tpu.memory_space<vmem>>, %arg8: memref<16x4xf32, #tpu.memory_space<vmem>>, %arg9: memref<4x16xf32, #tpu.memory_space<vmem>>, %arg10: memref<1x16x16x16xf32, #tpu.memory_space<vmem>>, %arg11: memref<18x18x16xf32, #tpu.memory_space<vmem>>, %arg12: memref<18x18x16xf32, #tpu.memory_space<vmem>>) attributes {dimension_semantics = [#tpu.dimension_semantics<parallel>], iteration_bounds = array<i64: 2>, scalar_prefetch = 0 : i64, scratch_operands = 2 : i64, tpu.core_type = #tpu.core_type<tc>, window_params = [{transform_indices = @transform_0, window_bounds = array<i64: 1, 16, 16, 16>}, {pipeline_mode = #tpu.pipeline_mode<synchronous>, transform_indices = @transform_1, window_bounds = array<i64: 144, 16>}, {pipeline_mode = #tpu.pipeline_mode<synchronous>, transform_indices = @transform_2, window_bounds = array<i64: 1, 16>}, {pipeline_mode = #tpu.pipeline_mode<synchronous>, transform_indices = @transform_3, window_bounds = array<i64: 1, 16>}, {pipeline_mode = #tpu.pipeline_mode<synchronous>, transform_indices = @transform_4, window_bounds = array<i64: 144, 16>}, {pipeline_mode = #tpu.pipeline_mode<synchronous>, transform_indices = @transform_5, window_bounds = array<i64: 1, 16>}, {pipeline_mode = #tpu.pipeline_mode<synchronous>, transform_indices = @transform_6, window_bounds = array<i64: 1, 16>}, {pipeline_mode = #tpu.pipeline_mode<synchronous>, transform_indices = @transform_7, window_bounds = array<i64: 16, 4>}, {pipeline_mode = #tpu.pipeline_mode<synchronous>, transform_indices = @transform_8, window_bounds = array<i64: 4, 16>}, {transform_indices = @transform_9, window_bounds = array<i64: 1, 16, 16, 16>}]} {
    %cst = arith.constant 0.000000e+00 : f32
    %0 = vector.broadcast %cst : f32 to vector<18x18x16xf32>
    %c0 = arith.constant 0 : index
    %c0_0 = arith.constant 0 : index
    %c0_1 = arith.constant 0 : index
    %1 = vector.load %arg11[%c0, %c0_0, %c0_1] : memref<18x18x16xf32, #tpu.memory_space<vmem>>, vector<18x18x16xf32>
    tpu.vector_store %arg11[%c0, %c0_0, %c0_1], %0 {strides = array<i32>} : memref<18x18x16xf32, #tpu.memory_space<vmem>>, vector<18x18x16xf32>,
    %cst_2 = arith.constant 0.000000e+00 : f32
    %2 = vector.broadcast %cst_2 : f32 to vector<18x18x16xf32>
    %c0_3 = arith.constant 0 : index
    %c0_4 = arith.constant 0 : index
    %c0_5 = arith.constant 0 : index
    %3 = vector.load %arg12[%c0_3, %c0_4, %c0_5] : memref<18x18x16xf32, #tpu.memory_space<vmem>>, vector<18x18x16xf32>
    tpu.vector_store %arg12[%c0_3, %c0_4, %c0_5], %2 {strides = array<i32>} : memref<18x18x16xf32, #tpu.memory_space<vmem>>, vector<18x18x16xf32>,
    %c0_6 = arith.constant 0 : index
    %c0_7 = arith.constant 0 : index
    %c0_8 = arith.constant 0 : index
    %c0_9 = arith.constant 0 : index
    %4 = vector.load %arg1[%c0_6, %c0_7, %c0_8, %c0_9] : memref<1x16x16x16xf32, #tpu.memory_space<vmem>>, vector<1x16x16x16xf32>
    %5 = vector.shape_cast %4 : vector<1x16x16x16xf32> to vector<16x16x16xf32>
    %c1 = arith.constant 1 : index
    %c1_10 = arith.constant 1 : index
    %c0_11 = arith.constant 0 : index
    %6 = vector.load %arg11[%c1, %c1_10, %c0_11] : memref<18x18x16xf32, #tpu.memory_space<vmem>>, vector<16x16x16xf32>
    tpu.vector_store %arg11[%c1, %c1_10, %c0_11], %5 {strides = array<i32>} : memref<18x18x16xf32, #tpu.memory_space<vmem>>, vector<16x16x16xf32>,
    %c0_12 = arith.constant 0 : index
    %c0_13 = arith.constant 0 : index
    %c0_14 = arith.constant 0 : index
    %7 = vector.load %arg11[%c0_12, %c0_13, %c0_14] : memref<18x18x16xf32, #tpu.memory_space<vmem>>, vector<16x16x16xf32>
    %8 = vector.shape_cast %7 : vector<16x16x16xf32> to vector<256x16xf32>
    %c0_15 = arith.constant 0 : index
    %c1_16 = arith.constant 1 : index
    %c0_17 = arith.constant 0 : index
    %9 = vector.load %arg11[%c0_15, %c1_16, %c0_17] : memref<18x18x16xf32, #tpu.memory_space<vmem>>, vector<16x16x16xf32>
    %10 = vector.shape_cast %9 : vector<16x16x16xf32> to vector<256x16xf32>
    %c0_18 = arith.constant 0 : index
    %c2 = arith.constant 2 : index
    %c0_19 = arith.constant 0 : index
    %11 = vector.load %arg11[%c0_18, %c2, %c0_19] : memref<18x18x16xf32, #tpu.memory_space<vmem>>, vector<16x16x16xf32>
    %12 = vector.shape_cast %11 : vector<16x16x16xf32> to vector<256x16xf32>
    %c1_20 = arith.constant 1 : index
    %c0_21 = arith.constant 0 : index
    %c0_22 = arith.constant 0 : index
    %13 = vector.load %arg11[%c1_20, %c0_21, %c0_22] : memref<18x18x16xf32, #tpu.memory_space<vmem>>, vector<16x16x16xf32>
    %14 = vector.shape_cast %13 : vector<16x16x16xf32> to vector<256x16xf32>
    %c1_23 = arith.constant 1 : index
    %c1_24 = arith.constant 1 : index
    %c0_25 = arith.constant 0 : index
    %15 = vector.load %arg11[%c1_23, %c1_24, %c0_25] : memref<18x18x16xf32, #tpu.memory_space<vmem>>, vector<16x16x16xf32>
    %16 = vector.shape_cast %15 : vector<16x16x16xf32> to vector<256x16xf32>
    %c1_26 = arith.constant 1 : index
    %c2_27 = arith.constant 2 : index
    %c0_28 = arith.constant 0 : index
    %17 = vector.load %arg11[%c1_26, %c2_27, %c0_28] : memref<18x18x16xf32, #tpu.memory_space<vmem>>, vector<16x16x16xf32>
    %18 = vector.shape_cast %17 : vector<16x16x16xf32> to vector<256x16xf32>
    %c2_29 = arith.constant 2 : index
    %c0_30 = arith.constant 0 : index
    %c0_31 = arith.constant 0 : index
    %19 = vector.load %arg11[%c2_29, %c0_30, %c0_31] : memref<18x18x16xf32, #tpu.memory_space<vmem>>, vector<16x16x16xf32>
    %20 = vector.shape_cast %19 : vector<16x16x16xf32> to vector<256x16xf32>
    %c2_32 = arith.constant 2 : index
    %c1_33 = arith.constant 1 : index
    %c0_34 = arith.constant 0 : index
    %21 = vector.load %arg11[%c2_32, %c1_33, %c0_34] : memref<18x18x16xf32, #tpu.memory_space<vmem>>, vector<16x16x16xf32>
    %22 = vector.shape_cast %21 : vector<16x16x16xf32> to vector<256x16xf32>
    %c2_35 = arith.constant 2 : index
    %c2_36 = arith.constant 2 : index
    %c0_37 = arith.constant 0 : index
    %23 = vector.load %arg11[%c2_35, %c2_36, %c0_37] : memref<18x18x16xf32, #tpu.memory_space<vmem>>, vector<16x16x16xf32>
    %24 = vector.shape_cast %23 : vector<16x16x16xf32> to vector<256x16xf32>
    %25 = tpu.concatenate %8, %10, %12, %14, %16, %18, %20, %22, %24 in 1 : vector<256x16xf32>, vector<256x16xf32>, vector<256x16xf32>, vector<256x16xf32>, vector<256x16xf32>, vector<256x16xf32>, vector<256x16xf32>, vector<256x16xf32>, vector<256x16xf32> -> vector<256x144xf32>
    %c0_38 = arith.constant 0 : index
    %c0_39 = arith.constant 0 : index
    %26 = vector.load %arg2[%c0_38, %c0_39] : memref<144x16xf32, #tpu.memory_space<vmem>>, vector<144x16xf32>
    %cst_40 = arith.constant dense<0.000000e+00> : vector<256x16xf32>
    %27 = tpu.matmul %25, %26, %cst_40 {dimension_numbers = #tpu.dot_dimension_numbers<[1], [0], [0], [1], [0, 0, 1, 1], [], []>} : vector<256x144xf32>, vector<144x16xf32>, vector<256x16xf32> -> vector<256x16xf32>
    %c0_41 = arith.constant 0 : index
    %c0_42 = arith.constant 0 : index
    %28 = vector.load %arg3[%c0_41, %c0_42] : memref<1x16xf32, #tpu.memory_space<vmem>>, vector<1x16xf32>
    %29 = vector.shape_cast %28 : vector<1x16xf32> to vector<16xf32>
    %30 = vector.shape_cast %29 : vector<16xf32> to vector<1x16xf32>
    %31 = vector.broadcast %30 : vector<1x16xf32> to vector<256x16xf32>
    %32 = arith.mulf %27, %31 : vector<256x16xf32>
    %c0_43 = arith.constant 0 : index
    %c0_44 = arith.constant 0 : index
    %33 = vector.load %arg4[%c0_43, %c0_44] : memref<1x16xf32, #tpu.memory_space<vmem>>, vector<1x16xf32>
    %34 = vector.shape_cast %33 : vector<1x16xf32> to vector<16xf32>
    %35 = vector.shape_cast %34 : vector<16xf32> to vector<1x16xf32>
    %36 = vector.broadcast %35 : vector<1x16xf32> to vector<256x16xf32>
    %37 = arith.addf %32, %36 : vector<256x16xf32>
    %cst_45 = arith.constant 0.000000e+00 : f32
    %38 = vector.broadcast %cst_45 : f32 to vector<256x16xf32>
    %39 = arith.maximumf %37, %38 : vector<256x16xf32>
    %40 = vector.shape_cast %39 : vector<256x16xf32> to vector<16x16x16xf32>
    %c1_46 = arith.constant 1 : index
    %c1_47 = arith.constant 1 : index
    %c0_48 = arith.constant 0 : index
    %41 = vector.load %arg12[%c1_46, %c1_47, %c0_48] : memref<18x18x16xf32, #tpu.memory_space<vmem>>, vector<16x16x16xf32>
    tpu.vector_store %arg12[%c1_46, %c1_47, %c0_48], %40 {strides = array<i32>} : memref<18x18x16xf32, #tpu.memory_space<vmem>>, vector<16x16x16xf32>,
    %c0_49 = arith.constant 0 : index
    %c0_50 = arith.constant 0 : index
    %c0_51 = arith.constant 0 : index
    %42 = vector.load %arg12[%c0_49, %c0_50, %c0_51] : memref<18x18x16xf32, #tpu.memory_space<vmem>>, vector<16x16x16xf32>
    %43 = vector.shape_cast %42 : vector<16x16x16xf32> to vector<256x16xf32>
    %c0_52 = arith.constant 0 : index
    %c1_53 = arith.constant 1 : index
    %c0_54 = arith.constant 0 : index
    %44 = vector.load %arg12[%c0_52, %c1_53, %c0_54] : memref<18x18x16xf32, #tpu.memory_space<vmem>>, vector<16x16x16xf32>
    %45 = vector.shape_cast %44 : vector<16x16x16xf32> to vector<256x16xf32>
    %c0_55 = arith.constant 0 : index
    %c2_56 = arith.constant 2 : index
    %c0_57 = arith.constant 0 : index
    %46 = vector.load %arg12[%c0_55, %c2_56, %c0_57] : memref<18x18x16xf32, #tpu.memory_space<vmem>>, vector<16x16x16xf32>
    %47 = vector.shape_cast %46 : vector<16x16x16xf32> to vector<256x16xf32>
    %c1_58 = arith.constant 1 : index
    %c0_59 = arith.constant 0 : index
    %c0_60 = arith.constant 0 : index
    %48 = vector.load %arg12[%c1_58, %c0_59, %c0_60] : memref<18x18x16xf32, #tpu.memory_space<vmem>>, vector<16x16x16xf32>
    %49 = vector.shape_cast %48 : vector<16x16x16xf32> to vector<256x16xf32>
    %c1_61 = arith.constant 1 : index
    %c1_62 = arith.constant 1 : index
    %c0_63 = arith.constant 0 : index
    %50 = vector.load %arg12[%c1_61, %c1_62, %c0_63] : memref<18x18x16xf32, #tpu.memory_space<vmem>>, vector<16x16x16xf32>
    %51 = vector.shape_cast %50 : vector<16x16x16xf32> to vector<256x16xf32>
    %c1_64 = arith.constant 1 : index
    %c2_65 = arith.constant 2 : index
    %c0_66 = arith.constant 0 : index
    %52 = vector.load %arg12[%c1_64, %c2_65, %c0_66] : memref<18x18x16xf32, #tpu.memory_space<vmem>>, vector<16x16x16xf32>
    %53 = vector.shape_cast %52 : vector<16x16x16xf32> to vector<256x16xf32>
    %c2_67 = arith.constant 2 : index
    %c0_68 = arith.constant 0 : index
    %c0_69 = arith.constant 0 : index
    %54 = vector.load %arg12[%c2_67, %c0_68, %c0_69] : memref<18x18x16xf32, #tpu.memory_space<vmem>>, vector<16x16x16xf32>
    %55 = vector.shape_cast %54 : vector<16x16x16xf32> to vector<256x16xf32>
    %c2_70 = arith.constant 2 : index
    %c1_71 = arith.constant 1 : index
    %c0_72 = arith.constant 0 : index
    %56 = vector.load %arg12[%c2_70, %c1_71, %c0_72] : memref<18x18x16xf32, #tpu.memory_space<vmem>>, vector<16x16x16xf32>
    %57 = vector.shape_cast %56 : vector<16x16x16xf32> to vector<256x16xf32>
    %c2_73 = arith.constant 2 : index
    %c2_74 = arith.constant 2 : index
    %c0_75 = arith.constant 0 : index
    %58 = vector.load %arg12[%c2_73, %c2_74, %c0_75] : memref<18x18x16xf32, #tpu.memory_space<vmem>>, vector<16x16x16xf32>
    %59 = vector.shape_cast %58 : vector<16x16x16xf32> to vector<256x16xf32>
    %60 = tpu.concatenate %43, %45, %47, %49, %51, %53, %55, %57, %59 in 1 : vector<256x16xf32>, vector<256x16xf32>, vector<256x16xf32>, vector<256x16xf32>, vector<256x16xf32>, vector<256x16xf32>, vector<256x16xf32>, vector<256x16xf32>, vector<256x16xf32> -> vector<256x144xf32>
    %c0_76 = arith.constant 0 : index
    %c0_77 = arith.constant 0 : index
    %61 = vector.load %arg5[%c0_76, %c0_77] : memref<144x16xf32, #tpu.memory_space<vmem>>, vector<144x16xf32>
    %cst_78 = arith.constant dense<0.000000e+00> : vector<256x16xf32>
    %62 = tpu.matmul %60, %61, %cst_78 {dimension_numbers = #tpu.dot_dimension_numbers<[1], [0], [0], [1], [0, 0, 1, 1], [], []>} : vector<256x144xf32>, vector<144x16xf32>, vector<256x16xf32> -> vector<256x16xf32>
    %c0_79 = arith.constant 0 : index
    %c0_80 = arith.constant 0 : index
    %63 = vector.load %arg6[%c0_79, %c0_80] : memref<1x16xf32, #tpu.memory_space<vmem>>, vector<1x16xf32>
    %64 = vector.shape_cast %63 : vector<1x16xf32> to vector<16xf32>
    %65 = vector.shape_cast %64 : vector<16xf32> to vector<1x16xf32>
    %66 = vector.broadcast %65 : vector<1x16xf32> to vector<256x16xf32>
    %67 = arith.mulf %62, %66 : vector<256x16xf32>
    %c0_81 = arith.constant 0 : index
    %c0_82 = arith.constant 0 : index
    %68 = vector.load %arg7[%c0_81, %c0_82] : memref<1x16xf32, #tpu.memory_space<vmem>>, vector<1x16xf32>
    %69 = vector.shape_cast %68 : vector<1x16xf32> to vector<16xf32>
    %70 = vector.shape_cast %69 : vector<16xf32> to vector<1x16xf32>
    %71 = vector.broadcast %70 : vector<1x16xf32> to vector<256x16xf32>
    %72 = arith.addf %67, %71 : vector<256x16xf32>
    %cst_83 = arith.constant dense<0.000000e+00> : vector<16xf32>
    %73 = vector.multi_reduction <add>, %72, %cst_83 [0] : vector<256x16xf32> to vector<16xf32>
    %74 = vector.shape_cast %73 : vector<16xf32> to vector<1x16xf32>
    %cst_84 = arith.constant 2.560000e+02 : f32
    %75 = vector.broadcast %cst_84 : f32 to vector<1x16xf32>
    %76 = arith.divf %74, %75 : vector<1x16xf32>
    %c0_85 = arith.constant 0 : index
    %c0_86 = arith.constant 0 : index
    %77 = vector.load %arg8[%c0_85, %c0_86] : memref<16x4xf32, #tpu.memory_space<vmem>>, vector<16x4xf32>
    %cst_87 = arith.constant dense<0.000000e+00> : vector<1x4xf32>
    %78 = tpu.matmul %76, %77, %cst_87 {dimension_numbers = #tpu.dot_dimension_numbers<[1], [0], [0], [1], [0, 0, 1, 1], [], []>} : vector<1x16xf32>, vector<16x4xf32>, vector<1x4xf32> -> vector<1x4xf32>
    %cst_88 = arith.constant 0.000000e+00 : f32
    %79 = vector.broadcast %cst_88 : f32 to vector<1x4xf32>
    %80 = arith.maximumf %78, %79 : vector<1x4xf32>
    %c0_89 = arith.constant 0 : index
    %c0_90 = arith.constant 0 : index
    %81 = vector.load %arg9[%c0_89, %c0_90] : memref<4x16xf32, #tpu.memory_space<vmem>>, vector<4x16xf32>
    %cst_91 = arith.constant dense<0.000000e+00> : vector<1x16xf32>
    %82 = tpu.matmul %80, %81, %cst_91 {dimension_numbers = #tpu.dot_dimension_numbers<[1], [0], [0], [1], [0, 0, 1, 1], [], []>} : vector<1x4xf32>, vector<4x16xf32>, vector<1x16xf32> -> vector<1x16xf32>
    %83 = arith.negf %82 : vector<1x16xf32>
    %84 = math.exp %83 : vector<1x16xf32>
    %cst_92 = arith.constant 1.000000e+00 : f32
    %85 = vector.broadcast %cst_92 : f32 to vector<1x16xf32>
    %86 = arith.addf %85, %84 : vector<1x16xf32>
    %87 = arith.divf %85, %86 : vector<1x16xf32>
    %88 = vector.broadcast %87 : vector<1x16xf32> to vector<256x16xf32>
    %89 = arith.mulf %72, %88 : vector<256x16xf32>
    %90 = vector.shape_cast %5 : vector<16x16x16xf32> to vector<256x16xf32>
    %91 = arith.addf %89, %90 : vector<256x16xf32>
    %cst_93 = arith.constant 0.000000e+00 : f32
    %92 = vector.broadcast %cst_93 : f32 to vector<256x16xf32>
    %93 = arith.maximumf %91, %92 : vector<256x16xf32>
    %94 = vector.shape_cast %93 : vector<256x16xf32> to vector<1x16x16x16xf32>
    %c0_94 = arith.constant 0 : index
    %c0_95 = arith.constant 0 : index
    %c0_96 = arith.constant 0 : index
    %c0_97 = arith.constant 0 : index
    %95 = vector.load %arg10[%c0_94, %c0_95, %c0_96, %c0_97] : memref<1x16x16x16xf32, #tpu.memory_space<vmem>>, vector<1x16x16x16xf32>
    tpu.vector_store %arg10[%c0_94, %c0_95, %c0_96, %c0_97], %94 {strides = array<i32>} : memref<1x16x16x16xf32, #tpu.memory_space<vmem>>, vector<1x16x16x16xf32>,
    return
  }
  func.func @transform_0(%arg0: i32) -> (i32, i32, i32, i32) {
    %c0_i32 = arith.constant 0 : i32
    %c0_i32_0 = arith.constant 0 : i32
    %c0_i32_1 = arith.constant 0 : i32
    %c0_i32_2 = arith.constant 0 : i32
    return %arg0, %c0_i32, %c0_i32_0, %c0_i32_1 : i32, i32, i32, i32
  }
  func.func @transform_1(%arg0: i32) -> (i32, i32) {
    %c0_i32 = arith.constant 0 : i32
    %c0_i32_0 = arith.constant 0 : i32
    %c0_i32_1 = arith.constant 0 : i32
    return %c0_i32, %c0_i32_0 : i32, i32
  }
  func.func @transform_2(%arg0: i32) -> (i32, i32) {
    %c0_i32 = arith.constant 0 : i32
    %c0_i32_0 = arith.constant 0 : i32
    %c0_i32_1 = arith.constant 0 : i32
    return %c0_i32, %c0_i32_0 : i32, i32
  }
  func.func @transform_3(%arg0: i32) -> (i32, i32) {
    %c0_i32 = arith.constant 0 : i32
    %c0_i32_0 = arith.constant 0 : i32
    %c0_i32_1 = arith.constant 0 : i32
    return %c0_i32, %c0_i32_0 : i32, i32
  }
  func.func @transform_4(%arg0: i32) -> (i32, i32) {
    %c0_i32 = arith.constant 0 : i32
    %c0_i32_0 = arith.constant 0 : i32
    %c0_i32_1 = arith.constant 0 : i32
    return %c0_i32, %c0_i32_0 : i32, i32
  }
  func.func @transform_5(%arg0: i32) -> (i32, i32) {
    %c0_i32 = arith.constant 0 : i32
    %c0_i32_0 = arith.constant 0 : i32
    %c0_i32_1 = arith.constant 0 : i32
    return %c0_i32, %c0_i32_0 : i32, i32
  }
  func.func @transform_6(%arg0: i32) -> (i32, i32) {
    %c0_i32 = arith.constant 0 : i32
    %c0_i32_0 = arith.constant 0 : i32
    %c0_i32_1 = arith.constant 0 : i32
    return %c0_i32, %c0_i32_0 : i32, i32
  }
  func.func @transform_7(%arg0: i32) -> (i32, i32) {
    %c0_i32 = arith.constant 0 : i32
    %c0_i32_0 = arith.constant 0 : i32
    %c0_i32_1 = arith.constant 0 : i32
    return %c0_i32, %c0_i32_0 : i32, i32
  }
  func.func @transform_8(%arg0: i32) -> (i32, i32) {
    %c0_i32 = arith.constant 0 : i32
    %c0_i32_0 = arith.constant 0 : i32
    %c0_i32_1 = arith.constant 0 : i32
    return %c0_i32, %c0_i32_0 : i32, i32
  }
  func.func @transform_9(%arg0: i32) -> (i32, i32, i32, i32) {
    %c0_i32 = arith.constant 0 : i32
    %c0_i32_0 = arith.constant 0 : i32
    %c0_i32_1 = arith.constant 0 : i32
    %c0_i32_2 = arith.constant 0 : i32
    return %arg0, %c0_i32, %c0_i32_0, %c0_i32_1 : i32, i32, i32, i32
  }
}

</mosaic_0001>

<llo_original>
// kernel: tpu_custom_call.1
$region0: #{tpu_custom_call.1}
  #allocation0 [shape = 'u32[]', space=smem, size = 0x4, offset = 0x4, fixed_abs, tag = 'smem constant byte address 0x4 - core index']
  #allocation1 [shape = 'u32[144,128]{1,0:T(1,128)}', space=vmem, size = 0x12000, scoped, tag = 'internal scratch']
  #allocation2 [shape = 'f32[18,18,16]{2,1,0:T(8,128)}', space=vmem, size = 0x36000, scoped, tag = 'scratch operand']
  #allocation3 [shape = 'f32[18,18,16]{2,1,0:T(8,128)}', space=vmem, size = 0x36000, scoped, tag = 'scratch operand']
  %s0 = inlined_call_operand.hbm [shape: f32[2,16,16,16], index: 0, kind: input, shape index: {}]
  %s1 = inlined_call_operand.vmem [shape: f32[144,16], index: 1, kind: input, shape index: {}]
  %s2 = inlined_call_operand.vmem [shape: f32[1,16], index: 2, kind: input, shape index: {}]
  %s3 = inlined_call_operand.vmem [shape: f32[1,16], index: 3, kind: input, shape index: {}]
  %s4 = inlined_call_operand.vmem [shape: f32[144,16], index: 4, kind: input, shape index: {}]
  %s5 = inlined_call_operand.vmem [shape: f32[1,16], index: 5, kind: input, shape index: {}]
  %s6 = inlined_call_operand.vmem [shape: f32[1,16], index: 6, kind: input, shape index: {}]
  %s7 = inlined_call_operand.vmem [shape: f32[16,4], index: 7, kind: input, shape index: {}]
  %s8 = inlined_call_operand.vmem [shape: f32[4,16], index: 8, kind: input, shape index: {}]
  %s9 = inlined_call_operand.hbm [shape: f32[2,16,16,16], index: 9, kind: output, shape index: {}]
  %s10 = sld [smem:[#allocation0]]
  $region73: #{tpu_custom_call.1} parent=0
    _
  %s12 = ssub.s32 1, %s10
  %s13 = scalar_select 0, %s12, %s10
  $region1: #{tpu_custom_call.1} parent=0
    #allocation4 [shape = 'u8[262144]{0}', space=vmem, size = 0x40000, scoped, tag = 'input window, operand 0']
    #allocation5 [shape = 's32[2]{0}', space=sflag, size = 0x8, scoped, tag = 'scoped memory for tpu_custom_call.1']
    #allocation6 [shape = 's32[2]{0}', space=sflag, size = 0x8, scoped, tag = 'scoped memory for tpu_custom_call.1']
    #allocation7 [shape = 'u8[262144]{0}', space=vmem, size = 0x40000, scoped, tag = 'output window, operand 0']
    %14 = vsyncpa [#allocation5], 0
    %s15 = scalar_lea.sflag [#allocation5], 1
    %16 = vsyncpa %s15, 0
    %17 = vsyncpa [#allocation6], 0
    %s18 = scalar_lea.sflag [#allocation6], 1
    %19 = vsyncpa %s18, 0
    loop: start=0, step=1, limit=4
    $region2: #{tpu_custom_call.1} parent=1 // loop_pre_header
      _
    $region3: #{tpu_custom_call.1} parent=1 // loop_header
      %s21 = sphi 0, %s25
      %p22 = scmp.ge.s32.totalorder %s21, 4
      %s31 = sphi 0, %s33
      %s34 = sphi 0, %s31
      %s35 = sphi 0, %s34
      %s51 = sphi 0, %s35
      %s55 = sphi 0, %s55
      %s57 = sphi 0, %s55
      %s58 = sphi 0, %s57
      %s72 = sphi 0, %s58
      %s76 = sphi 0, %s76
      %s78 = sphi 0, %s76
      %s79 = sphi 0, %s78
      %s93 = sphi 0, %s79
      %s97 = sphi 0, %s97
      %s99 = sphi 0, %s97
      %s100 = sphi 0, %s99
      %s114 = sphi 0, %s100
      %s118 = sphi 0, %s118
      %s120 = sphi 0, %s118
      %s121 = sphi 0, %s120
      %s135 = sphi 0, %s121
      %s139 = sphi 0, %s139
      %s141 = sphi 0, %s139
      %s142 = sphi 0, %s141
      %s156 = sphi 0, %s142
      %s160 = sphi 0, %s160
      %s162 = sphi 0, %s160
      %s163 = sphi 0, %s162
      %s177 = sphi 0, %s163
      %s181 = sphi 0, %s181
      %s183 = sphi 0, %s181
      %s184 = sphi 0, %s183
      %s198 = sphi 0, %s184
      %s202 = sphi 0, %s202
      %s204 = sphi 0, %s202
      %s205 = sphi 0, %s204
      %s219 = sphi 0, %s205
      %s225 = sphi 0, %s227
      %s228 = sphi 0, %s225
      %s229 = sphi 0, %s228
      %s245 = sphi 0, %s229
    $region4: #{tpu_custom_call.1} parent=1 // loop_header_branch
      %24 = sbr.rel (%p22) target = $region8
    $region5: #{tpu_custom_call.1} parent=1 // loop_body
      %s26 = ssub.s32 %s21, 1
      %s27 = ssub.s32 %s21, 2
      %s28 = sadd.s32 %s21, 1
      %s29 = ssub.s32 %s21, %s28
      %p30 = scmp.eq.s32.totalorder %s29, 0
      %s32 = sadd.s32 %s31, 1
      %s33 = scalar_select %p30, %s31, %s32
      %p36 = pneg %p30
      %p37 = scmp.eq.s32.totalorder %s21, 1
      %p38 = por %p36, %p37
      %p39 = scmp.ne.s32.totalorder %s31, %s34
      %p40 = scmp.eq.s32.totalorder %s21, 0
      %p41 = por %p39, %p40
      %p42 = scmp.ne.s32.totalorder %s31, %s34
      %p43 = scmp.eq.s32.totalorder %s26, 1
      %p44 = por %p42, %p43
      %p45 = scmp.ne.s32.totalorder %s34, %s35
      %p46 = scmp.eq.s32.totalorder %s26, 0
      %p47 = por %p45, %p46
      %p48 = scmp.ne.s32.totalorder %s34, %s35
      %p49 = scmp.eq.s32.totalorder %s27, 1
      %p50 = por %p48, %p49
      %p52 = scmp.ne.s32.totalorder %s35, %s51
      %p53 = scmp.eq.s32.totalorder %s27, 0
      %p54 = por %p52, %p53
      %s56 = sadd.s32 %s55, 1
      %p59 = scmp.eq.s32.totalorder %s21, 1
      %p60 = scmp.ne.s32.totalorder %s55, %s57
      %p61 = scmp.eq.s32.totalorder %s21, 0
      %p62 = por %p60, %p61
      %p63 = scmp.ne.s32.totalorder %s55, %s57
      %p64 = scmp.eq.s32.totalorder %s26, 1
      %p65 = por %p63, %p64
      %p66 = scmp.ne.s32.totalorder %s57, %s58
      %p67 = scmp.eq.s32.totalorder %s26, 0
      %p68 = por %p66, %p67
      %p69 = scmp.ne.s32.totalorder %s57, %s58
      %p70 = scmp.eq.s32.totalorder %s27, 1
      %p71 = por %p69, %p70
      %p73 = scmp.ne.s32.totalorder %s58, %s72
      %p74 = scmp.eq.s32.totalorder %s27, 0
      %p75 = por %p73, %p74
      %s77 = sadd.s32 %s76, 1
      %p80 = scmp.eq.s32.totalorder %s21, 1
      %p81 = scmp.ne.s32.totalorder %s76, %s78
      %p82 = scmp.eq.s32.totalorder %s21, 0
      %p83 = por %p81, %p82
      %p84 = scmp.ne.s32.totalorder %s76, %s78
      %p85 = scmp.eq.s32.totalorder %s26, 1
      %p86 = por %p84, %p85
      %p87 = scmp.ne.s32.totalorder %s78, %s79
      %p88 = scmp.eq.s32.totalorder %s26, 0
      %p89 = por %p87, %p88
      %p90 = scmp.ne.s32.totalorder %s78, %s79
      %p91 = scmp.eq.s32.totalorder %s27, 1
      %p92 = por %p90, %p91
      %p94 = scmp.ne.s32.totalorder %s79, %s93
      %p95 = scmp.eq.s32.totalorder %s27, 0
      %p96 = por %p94, %p95
      %s98 = sadd.s32 %s97, 1
      %p101 = scmp.eq.s32.totalorder %s21, 1
      %p102 = scmp.ne.s32.totalorder %s97, %s99
      %p103 = scmp.eq.s32.totalorder %s21, 0
      %p104 = por %p102, %p103
      %p105 = scmp.ne.s32.totalorder %s97, %s99
      %p106 = scmp.eq.s32.totalorder %s26, 1
      %p107 = por %p105, %p106
      %p108 = scmp.ne.s32.totalorder %s99, %s100
      %p109 = scmp.eq.s32.totalorder %s26, 0
      %p110 = por %p108, %p109
      %p111 = scmp.ne.s32.totalorder %s99, %s100
      %p112 = scmp.eq.s32.totalorder %s27, 1
      %p113 = por %p111, %p112
      %p115 = scmp.ne.s32.totalorder %s100, %s114
      %p116 = scmp.eq.s32.totalorder %s27, 0
      %p117 = por %p115, %p116
      %s119 = sadd.s32 %s118, 1
      %p122 = scmp.eq.s32.totalorder %s21, 1
      %p123 = scmp.ne.s32.totalorder %s118, %s120
      %p124 = scmp.eq.s32.totalorder %s21, 0
      %p125 = por %p123, %p124
      %p126 = scmp.ne.s32.totalorder %s118, %s120
      %p127 = scmp.eq.s32.totalorder %s26, 1
      %p128 = por %p126, %p127
      %p129 = scmp.ne.s32.totalorder %s120, %s121
      %p130 = scmp.eq.s32.totalorder %s26, 0
      %p131 = por %p129, %p130
      %p132 = scmp.ne.s32.totalorder %s120, %s121
      %p133 = scmp.eq.s32.totalorder %s27, 1
      %p134 = por %p132, %p133
      %p136 = scmp.ne.s32.totalorder %s121, %s135
      %p137 = scmp.eq.s32.totalorder %s27, 0
      %p138 = por %p136, %p137
      %s140 = sadd.s32 %s139, 1
      %p143 = scmp.eq.s32.totalorder %s21, 1
      %p144 = scmp.ne.s32.totalorder %s139, %s141
      %p145 = scmp.eq.s32.totalorder %s21, 0
      %p146 = por %p144, %p145
      %p147 = scmp.ne.s32.totalorder %s139, %s141
      %p148 = scmp.eq.s32.totalorder %s26, 1
      %p149 = por %p147, %p148
      %p150 = scmp.ne.s32.totalorder %s141, %s142
      %p151 = scmp.eq.s32.totalorder %s26, 0
      %p152 = por %p150, %p151
      %p153 = scmp.ne.s32.totalorder %s141, %s142
      %p154 = scmp.eq.s32.totalorder %s27, 1
      %p155 = por %p153, %p154
      %p157 = scmp.ne.s32.totalorder %s142, %s156
      %p158 = scmp.eq.s32.totalorder %s27, 0
      %p159 = por %p157, %p158
      %s161 = sadd.s32 %s160, 1
      %p164 = scmp.eq.s32.totalorder %s21, 1
      %p165 = scmp.ne.s32.totalorder %s160, %s162
      %p166 = scmp.eq.s32.totalorder %s21, 0
      %p167 = por %p165, %p166
      %p168 = scmp.ne.s32.totalorder %s160, %s162
      %p169 = scmp.eq.s32.totalorder %s26, 1
      %p170 = por %p168, %p169
      %p171 = scmp.ne.s32.totalorder %s162, %s163
      %p172 = scmp.eq.s32.totalorder %s26, 0
      %p173 = por %p171, %p172
      %p174 = scmp.ne.s32.totalorder %s162, %s163
      %p175 = scmp.eq.s32.totalorder %s27, 1
      %p176 = por %p174, %p175
      %p178 = scmp.ne.s32.totalorder %s163, %s177
      %p179 = scmp.eq.s32.totalorder %s27, 0
      %p180 = por %p178, %p179
      %s182 = sadd.s32 %s181, 1
      %p185 = scmp.eq.s32.totalorder %s21, 1
      %p186 = scmp.ne.s32.totalorder %s181, %s183
      %p187 = scmp.eq.s32.totalorder %s21, 0
      %p188 = por %p186, %p187
      %p189 = scmp.ne.s32.totalorder %s181, %s183
      %p190 = scmp.eq.s32.totalorder %s26, 1
      %p191 = por %p189, %p190
      %p192 = scmp.ne.s32.totalorder %s183, %s184
      %p193 = scmp.eq.s32.totalorder %s26, 0
      %p194 = por %p192, %p193
      %p195 = scmp.ne.s32.totalorder %s183, %s184
      %p196 = scmp.eq.s32.totalorder %s27, 1
      %p197 = por %p195, %p196
      %p199 = scmp.ne.s32.totalorder %s184, %s198
      %p200 = scmp.eq.s32.totalorder %s27, 0
      %p201 = por %p199, %p200
      %s203 = sadd.s32 %s202, 1
      %p206 = scmp.eq.s32.totalorder %s21, 1
      %p207 = scmp.ne.s32.totalorder %s202, %s204
      %p208 = scmp.eq.s32.totalorder %s21, 0
      %p209 = por %p207, %p208
      %p210 = scmp.ne.s32.totalorder %s202, %s204
      %p211 = scmp.eq.s32.totalorder %s26, 1
      %p212 = por %p210, %p211
      %p213 = scmp.ne.s32.totalorder %s204, %s205
      %p214 = scmp.eq.s32.totalorder %s26, 0
      %p215 = por %p213, %p214
      %p216 = scmp.ne.s32.totalorder %s204, %s205
      %p217 = scmp.eq.s32.totalorder %s27, 1
      %p218 = por %p216, %p217
      %p220 = scmp.ne.s32.totalorder %s205, %s219
      %p221 = scmp.eq.s32.totalorder %s27, 0
      %p222 = por %p220, %p221
      %s223 = ssub.s32 %s21, %s28
      %p224 = scmp.eq.s32.totalorder %s223, 0
      %s226 = sadd.s32 %s225, 1
      %s227 = scalar_select %p224, %s225, %s226
      %p230 = pneg %p224
      %p231 = scmp.eq.s32.totalorder %s21, 1
      %p232 = por %p230, %p231
      %p233 = scmp.ne.s32.totalorder %s225, %s228
      %p234 = scmp.eq.s32.totalorder %s21, 0
      %p235 = por %p233, %p234
      %p236 = scmp.ne.s32.totalorder %s225, %s228
      %p237 = scmp.eq.s32.totalorder %s26, 1
      %p238 = por %p236, %p237
      %p239 = scmp.ne.s32.totalorder %s228, %s229
      %p240 = scmp.eq.s32.totalorder %s26, 0
      %p241 = por %p239, %p240
      %p242 = scmp.ne.s32.totalorder %s228, %s229
      %p243 = scmp.eq.s32.totalorder %s27, 1
      %p244 = por %p242, %p243
      %p246 = scmp.ne.s32.totalorder %s229, %s245
      %p247 = scmp.eq.s32.totalorder %s27, 0
      %p248 = por %p246, %p247
      %p249 = scmp.le.s32.totalorder 1, %s21
      %p250 = scmp.lt.s32.totalorder %s21, 3
      %p251 = pnand %p249, %p250
      %p252 = pneg %p251
      // Predicated region
      $region9: #{tpu_custom_call.1} parent=5 // pred_check
        _
      $region10: #{tpu_custom_call.1} parent=5 // pred_check_branch
        %254 = sbr.rel (%p251) target = $region12
      $region11: #{tpu_custom_call.1} parent=5 // pred_region
        %s255 = ssub.s32 %s21, 1
        // Predicated region
        $region13: #{tpu_custom_call.1} parent=11 // pred_check
          %p256 = pneg %p68
        $region14: #{tpu_custom_call.1} parent=11 // pred_check_branch
          %258 = sbr.rel (%p256) target = $region16
        $region15: #{tpu_custom_call.1} parent=11 // pred_region
          _
        $region16: #{tpu_custom_call.1} parent=11 // pred_fallthru
          _
        // Predicated region
        $region17: #{tpu_custom_call.1} parent=11 // pred_check
          %p259 = pneg %p89
        $region18: #{tpu_custom_call.1} parent=11 // pred_check_branch
          %261 = sbr.rel (%p259) target = $region20
        $region19: #{tpu_custom_call.1} parent=11 // pred_region
          _
        $region20: #{tpu_custom_call.1} parent=11 // pred_fallthru
          _
        // Predicated region
        $region21: #{tpu_custom_call.1} parent=11 // pred_check
          %p262 = pneg %p110
        $region22: #{tpu_custom_call.1} parent=11 // pred_check_branch
          %264 = sbr.rel (%p262) target = $region24
        $region23: #{tpu_custom_call.1} parent=11 // pred_region
          _
        $region24: #{tpu_custom_call.1} parent=11 // pred_fallthru
          _
        // Predicated region
        $region25: #{tpu_custom_call.1} parent=11 // pred_check
          %p265 = pneg %p131
        $region26: #{tpu_custom_call.1} parent=11 // pred_check_branch
          %267 = sbr.rel (%p265) target = $region28
        $region27: #{tpu_custom_call.1} parent=11 // pred_region
          _
        $region28: #{tpu_custom_call.1} parent=11 // pred_fallthru
          _
        // Predicated region
        $region29: #{tpu_custom_call.1} parent=11 // pred_check
          %p268 = pneg %p152
        $region30: #{tpu_custom_call.1} parent=11 // pred_check_branch
          %270 = sbr.rel (%p268) target = $region32
        $region31: #{tpu_custom_call.1} parent=11 // pred_region
          _
        $region32: #{tpu_custom_call.1} parent=11 // pred_fallthru
          _
        // Predicated region
        $region33: #{tpu_custom_call.1} parent=11 // pred_check
          %p271 = pneg %p173
        $region34: #{tpu_custom_call.1} parent=11 // pred_check_branch
          %273 = sbr.rel (%p271) target = $region36
        $region35: #{tpu_custom_call.1} parent=11 // pred_region
          _
        $region36: #{tpu_custom_call.1} parent=11 // pred_fallthru
          _
        // Predicated region
        $region37: #{tpu_custom_call.1} parent=11 // pred_check
          %p274 = pneg %p194
        $region38: #{tpu_custom_call.1} parent=11 // pred_check_branch
          %276 = sbr.rel (%p274) target = $region40
        $region39: #{tpu_custom_call.1} parent=11 // pred_region
          _
        $region40: #{tpu_custom_call.1} parent=11 // pred_fallthru
          _
        // Predicated region
        $region41: #{tpu_custom_call.1} parent=11 // pred_check
          %p277 = pneg %p215
        $region42: #{tpu_custom_call.1} parent=11 // pred_check_branch
          %279 = sbr.rel (%p277) target = $region44
        $region43: #{tpu_custom_call.1} parent=11 // pred_region
          _
        $region44: #{tpu_custom_call.1} parent=11 // pred_fallthru
          _
      $region12: #{tpu_custom_call.1} parent=5 // pred_fallthru
        _
      %p280 = scmp.lt.s32.totalorder %s21, 2
      // Predicated region
      $region45: #{tpu_custom_call.1} parent=5 // pred_check
        %p281 = pneg %p280
      $region46: #{tpu_custom_call.1} parent=5 // pred_check_branch
        %283 = sbr.rel (%p281) target = $region48
      $region47: #{tpu_custom_call.1} parent=5 // pred_region
        // Predicated region
        $region49: #{tpu_custom_call.1} parent=47 // pred_check
          %p284 = pneg %p41
        $region50: #{tpu_custom_call.1} parent=47 // pred_check_branch
          %286 = sbr.rel (%p284) target = $region52
        $region51: #{tpu_custom_call.1} parent=47 // pred_region
          %s287 = sand.u32 %s31, 1
          %s288 = scalar_lea.sflag [#allocation5], %s287
          %s289 = sand.u32 %s31, 1
          %s290 = smul.addr %s289, 256
          %s291 = scalar_lea.vmem [#allocation4], %s290
          %s293 = ssub.s32 4096, 4096
          %294 = vsyncadd %s288, %s293
          %s295 = smul.addr %s21, 32
          %s296 = smul.addr %s295, 128
          %s297 = scalar_lea.hbm %s0, %s296
          %s298 = sshll.u32 %s291, 4
          %s299 = int_to_ptr.vmem [resolvable:$true] %s298
          %304 = dma.hbm_to_vmem [thread:$0]  %s297, 4096, %s299, %s288, 128, 128, 8
        $region52: #{tpu_custom_call.1} parent=47 // pred_fallthru
          _
      $region48: #{tpu_custom_call.1} parent=5 // pred_fallthru
        _
      %p305 = scmp.le.s32.totalorder 1, %s21
      %p306 = scmp.lt.s32.totalorder %s21, 3
      %p307 = pnand %p305, %p306
      %p308 = pneg %p307
      // Predicated region
      $region53: #{tpu_custom_call.1} parent=5 // pred_check
        _
      $region54: #{tpu_custom_call.1} parent=5 // pred_check_branch
        %310 = sbr.rel (%p307) target = $region56
      $region55: #{tpu_custom_call.1} parent=5 // pred_region
        %s311 = ssub.s32 %s21, 1
        %s312 = sand.u32 %s34, 1
        %s313 = scalar_lea.sflag [#allocation5], %s312
        %s314 = sand.u32 %s34, 1
        %s315 = smul.addr %s314, 256
        %s316 = scalar_lea.vmem [#allocation4], %s315
        // Predicated region
        $region57: #{tpu_custom_call.1} parent=55 // pred_check
          %p317 = pneg %p47
        $region58: #{tpu_custom_call.1} parent=55 // pred_check_branch
          %319 = sbr.rel (%p317) target = $region60
        $region59: #{tpu_custom_call.1} parent=55 // pred_region
          %320 = dma.done %s313, 4096
        $region60: #{tpu_custom_call.1} parent=55 // pred_fallthru
          _
        %s321 = sand.u32 %s34, 1
        %s322 = scalar_lea.sflag [#allocation5], %s321
        %s323 = sand.u32 %s34, 1
        %s324 = smul.addr %s323, 256
        %s325 = scalar_lea.vmem [#allocation4], %s324
        %p326 = pneg %p47
        %p327 = pneg %p44
        %p328 = pneg %p68
        %p329 = pneg %p65
        %p330 = pneg %p89
        %p331 = pneg %p86
        %p332 = pneg %p110
        %p333 = pneg %p107
        %p334 = pneg %p131
        %p335 = pneg %p128
        %p336 = pneg %p152
        %p337 = pneg %p149
        %p338 = pneg %p173
        %p339 = pneg %p170
        %p340 = pneg %p194
        %p341 = pneg %p191
        %p342 = pneg %p215
        %p343 = pneg %p212
        %p344 = pneg %p241
        %p345 = pneg %p238
        %s346 = sand.u32 %s228, 1
        %s347 = scalar_lea.sflag [#allocation6], %s346
        %s348 = sand.u32 %s228, 1
        %s349 = smul.addr %s348, 256
        %s350 = scalar_lea.vmem [#allocation7], %s349
        %vm351 = vcmask 130048
        %352 = vst.msk [vmem:[#allocation2] sm:$0xff] %vm351, 0.0
        %353 = vst.msk [vmem:[#allocation2 + $0x8] sm:$0xff] %vm351, 0.0
        %vm354 = vcmask 123904
        %355 = vst.msk [vmem:[#allocation2 + $0x10] sm:$0x3] %vm354, 0.0
        %356 = vst.msk [vmem:[#allocation2 + $0x18] sm:$0xff] %vm351, 0.0
        %357 = vst.msk [vmem:[#allocation2 + $0x20] sm:$0xff] %vm351, 0.0
        %358 = vst.msk [vmem:[#allocation2 + $0x28] sm:$0x3] %vm354, 0.0
        %359 = vst.msk [vmem:[#allocation2 + $0x30] sm:$0xff] %vm351, 0.0
        %360 = vst.msk [vmem:[#allocation2 + $0x38] sm:$0xff] %vm351, 0.0
        %361 = vst.msk [vmem:[#allocation2 + $0x40] sm:$0x3] %vm354, 0.0
        %362 = vst.msk [vmem:[#allocation2 + $0x48] sm:$0xff] %vm351, 0.0
        %363 = vst.msk [vmem:[#allocation2 + $0x50] sm:$0xff] %vm351, 0.0
        %364 = vst.msk [vmem:[#allocation2 + $0x58] sm:$0x3] %vm354, 0.0
        %365 = vst.msk [vmem:[#allocation2 + $0x60] sm:$0xff] %vm351, 0.0
        %366 = vst.msk [vmem:[#allocation2 + $0x68] sm:$0xff] %vm351, 0.0
        %367 = vst.msk [vmem:[#allocation2 + $0x70] sm:$0x3] %vm354, 0.0
        %368 = vst.msk [vmem:[#allocation2 + $0x78] sm:$0xff] %vm351, 0.0
        %369 = vst.msk [vmem:[#allocation2 + $0x80] sm:$0xff] %vm351, 0.0
        %370 = vst.msk [vmem:[#allocation2 + $0x88] sm:$0x3] %vm354, 0.0
        %371 = vst.msk [vmem:[#allocation2 + $0x90] sm:$0xff] %vm351, 0.0
        %372 = vst.msk [vmem:[#allocation2 + $0x98] sm:$0xff] %vm351, 0.0
        %373 = vst.msk [vmem:[#allocation2 + $0xa0] sm:$0x3] %vm354, 0.0
        %374 = vst.msk [vmem:[#allocation2 + $0xa8] sm:$0xff] %vm351, 0.0
        %375 = vst.msk [vmem:[#allocation2 + $0xb0] sm:$0xff] %vm351, 0.0
        %376 = vst.msk [vmem:[#allocation2 + $0xb8] sm:$0x3] %vm354, 0.0
        %377 = vst.msk [vmem:[#allocation2 + $0xc0] sm:$0xff] %vm351, 0.0
        %378 = vst.msk [vmem:[#allocation2 + $0xc8] sm:$0xff] %vm351, 0.0
        %379 = vst.msk [vmem:[#allocation2 + $0xd0] sm:$0x3] %vm354, 0.0
        %380 = vst.msk [vmem:[#allocation2 + $0xd8] sm:$0xff] %vm351, 0.0
        %381 = vst.msk [vmem:[#allocation2 + $0xe0] sm:$0xff] %vm351, 0.0
        %382 = vst.msk [vmem:[#allocation2 + $0xe8] sm:$0x3] %vm354, 0.0
        %383 = vst.msk [vmem:[#allocation2 + $0xf0] sm:$0xff] %vm351, 0.0
        %384 = vst.msk [vmem:[#allocation2 + $0xf8] sm:$0xff] %vm351, 0.0
        %385 = vst.msk [vmem:[#allocation2 + $0x100] sm:$0x3] %vm354, 0.0
        %386 = vst.msk [vmem:[#allocation2 + $0x108] sm:$0xff] %vm351, 0.0
        %387 = vst.msk [vmem:[#allocation2 + $0x110] sm:$0xff] %vm351, 0.0
        %388 = vst.msk [vmem:[#allocation2 + $0x118] sm:$0x3] %vm354, 0.0
        %389 = vst.msk [vmem:[#allocation2 + $0x120] sm:$0xff] %vm351, 0.0
        %390 = vst.msk [vmem:[#allocation2 + $0x128] sm:$0xff] %vm351, 0.0
        %391 = vst.msk [vmem:[#allocation2 + $0x130] sm:$0x3] %vm354, 0.0
        %392 = vst.msk [vmem:[#allocation2 + $0x138] sm:$0xff] %vm351, 0.0
        %393 = vst.msk [vmem:[#allocation2 + $0x140] sm:$0xff] %vm351, 0.0
        %394 = vst.msk [vmem:[#allocation2 + $0x148] sm:$0x3] %vm354, 0.0
        %395 = vst.msk [vmem:[#allocation2 + $0x150] sm:$0xff] %vm351, 0.0
        %396 = vst.msk [vmem:[#allocation2 + $0x158] sm:$0xff] %vm351, 0.0
        %397 = vst.msk [vmem:[#allocation2 + $0x160] sm:$0x3] %vm354, 0.0
        %398 = vst.msk [vmem:[#allocation2 + $0x168] sm:$0xff] %vm351, 0.0
        %399 = vst.msk [vmem:[#allocation2 + $0x170] sm:$0xff] %vm351, 0.0
        %400 = vst.msk [vmem:[#allocation2 + $0x178] sm:$0x3] %vm354, 0.0
        %401 = vst.msk [vmem:[#allocation2 + $0x180] sm:$0xff] %vm351, 0.0
        %402 = vst.msk [vmem:[#allocation2 + $0x188] sm:$0xff] %vm351, 0.0
        %403 = vst.msk [vmem:[#allocation2 + $0x190] sm:$0x3] %vm354, 0.0
        %404 = vst.msk [vmem:[#allocation2 + $0x198] sm:$0xff] %vm351, 0.0
        %405 = vst.msk [vmem:[#allocation2 + $0x1a0] sm:$0xff] %vm351, 0.0
        %406 = vst.msk [vmem:[#allocation2 + $0x1a8] sm:$0x3] %vm354, 0.0
        %407 = vst.msk [vmem:[#allocation3] sm:$0xff] %vm351, 0.0
        %408 = vst.msk [vmem:[#allocation3 + $0x8] sm:$0xff] %vm351, 0.0
        %409 = vst.msk [vmem:[#allocation3 + $0x10] sm:$0x3] %vm354, 0.0
        %410 = vst.msk [vmem:[#allocation3 + $0x18] sm:$0xff] %vm351, 0.0
        %411 = vst.msk [vmem:[#allocation3 + $0x20] sm:$0xff] %vm351, 0.0
        %412 = vst.msk [vmem:[#allocation3 + $0x28] sm:$0x3] %vm354, 0.0
        %413 = vst.msk [vmem:[#allocation3 + $0x30] sm:$0xff] %vm351, 0.0
        %414 = vst.msk [vmem:[#allocation3 + $0x38] sm:$0xff] %vm351, 0.0
        %415 = vst.msk [vmem:[#allocation3 + $0x40] sm:$0x3] %vm354, 0.0
        %416 = vst.msk [vmem:[#allocation3 + $0x48] sm:$0xff] %vm351, 0.0
        %417 = vst.msk [vmem:[#allocation3 + $0x50] sm:$0xff] %vm351, 0.0
        %418 = vst.msk [vmem:[#allocation3 + $0x58] sm:$0x3] %vm354, 0.0
        %419 = vst.msk [vmem:[#allocation3 + $0x60] sm:$0xff] %vm351, 0.0
        %420 = vst.msk [vmem:[#allocation3 + $0x68] sm:$0xff] %vm351, 0.0
        %421 = vst.msk [vmem:[#allocation3 + $0x70] sm:$0x3] %vm354, 0.0
        %422 = vst.msk [vmem:[#allocation3 + $0x78] sm:$0xff] %vm351, 0.0
        %423 = vst.msk [vmem:[#allocation3 + $0x80] sm:$0xff] %vm351, 0.0
        %424 = vst.msk [vmem:[#allocation3 + $0x88] sm:$0x3] %vm354, 0.0
        %425 = vst.msk [vmem:[#allocation3 + $0x90] sm:$0xff] %vm351, 0.0
        %426 = vst.msk [vmem:[#allocation3 + $0x98] sm:$0xff] %vm351, 0.0
        %427 = vst.msk [vmem:[#allocation3 + $0xa0] sm:$0x3] %vm354, 0.0
        %428 = vst.msk [vmem:[#allocation3 + $0xa8] sm:$0xff] %vm351, 0.0
        %429 = vst.msk [vmem:[#allocation3 + $0xb0] sm:$0xff] %vm351, 0.0
        %430 = vst.msk [vmem:[#allocation3 + $0xb8] sm:$0x3] %vm354, 0.0
        %431 = vst.msk [vmem:[#allocation3 + $0xc0] sm:$0xff] %vm351, 0.0
        %432 = vst.msk [vmem:[#allocation3 + $0xc8] sm:$0xff] %vm351, 0.0
        %433 = vst.msk [vmem:[#allocation3 + $0xd0] sm:$0x3] %vm354, 0.0
        %434 = vst.msk [vmem:[#allocation3 + $0xd8] sm:$0xff] %vm351, 0.0
        %435 = vst.msk [vmem:[#allocation3 + $0xe0] sm:$0xff] %vm351, 0.0
        %436 = vst.msk [vmem:[#allocation3 + $0xe8] sm:$0x3] %vm354, 0.0
        %437 = vst.msk [vmem:[#allocation3 + $0xf0] sm:$0xff] %vm351, 0.0
        %438 = vst.msk [vmem:[#allocation3 + $0xf8] sm:$0xff] %vm351, 0.0
        %439 = vst.msk [vmem:[#allocation3 + $0x100] sm:$0x3] %vm354, 0.0
        %440 = vst.msk [vmem:[#allocation3 + $0x108] sm:$0xff] %vm351, 0.0
        %441 = vst.msk [vmem:[#allocation3 + $0x110] sm:$0xff] %vm351, 0.0
        %442 = vst.msk [vmem:[#allocation3 + $0x118] sm:$0x3] %vm354, 0.0
        %443 = vst.msk [vmem:[#allocation3 + $0x120] sm:$0xff] %vm351, 0.0
        %444 = vst.msk [vmem:[#allocation3 + $0x128] sm:$0xff] %vm351, 0.0
        %445 = vst.msk [vmem:[#allocation3 + $0x130] sm:$0x3] %vm354, 0.0
        %446 = vst.msk [vmem:[#allocation3 + $0x138] sm:$0xff] %vm351, 0.0
        %447 = vst.msk [vmem:[#allocation3 + $0x140] sm:$0xff] %vm351, 0.0
        %448 = vst.msk [vmem:[#allocation3 + $0x148] sm:$0x3] %vm354, 0.0
        %449 = vst.msk [vmem:[#allocation3 + $0x150] sm:$0xff] %vm351, 0.0
        %450 = vst.msk [vmem:[#allocation3 + $0x158] sm:$0xff] %vm351, 0.0
        %451 = vst.msk [vmem:[#allocation3 + $0x160] sm:$0x3] %vm354, 0.0
        %452 = vst.msk [vmem:[#allocation3 + $0x168] sm:$0xff] %vm351, 0.0
        %453 = vst.msk [vmem:[#allocation3 + $0x170] sm:$0xff] %vm351, 0.0
        %454 = vst.msk [vmem:[#allocation3 + $0x178] sm:$0x3] %vm354, 0.0
        %455 = vst.msk [vmem:[#allocation3 + $0x180] sm:$0xff] %vm351, 0.0
        %456 = vst.msk [vmem:[#allocation3 + $0x188] sm:$0xff] %vm351, 0.0
        %457 = vst.msk [vmem:[#allocation3 + $0x190] sm:$0x3] %vm354, 0.0
        %458 = vst.msk [vmem:[#allocation3 + $0x198] sm:$0xff] %vm351, 0.0
        %459 = vst.msk [vmem:[#allocation3 + $0x1a0] sm:$0xff] %vm351, 0.0
        %460 = vst.msk [vmem:[#allocation3 + $0x1a8] sm:$0x3] %vm354, 0.0
        %v461 = vld [vmem:[%s316] sm:$0xff]
        %v462 = vld [vmem:[%s316 + $0x8] sm:$0xff]
        %v463 = vld [vmem:[%s316 + $0x10] sm:$0xff]
        %v464 = vld [vmem:[%s316 + $0x18] sm:$0xff]
        %v465 = vld [vmem:[%s316 + $0x20] sm:$0xff]
        %v466 = vld [vmem:[%s316 + $0x28] sm:$0xff]
        %v467 = vld [vmem:[%s316 + $0x30] sm:$0xff]
        %v468 = vld [vmem:[%s316 + $0x38] sm:$0xff]
        %v469 = vld [vmem:[%s316 + $0x40] sm:$0xff]
        %v470 = vld [vmem:[%s316 + $0x48] sm:$0xff]
        %v471 = vld [vmem:[%s316 + $0x50] sm:$0xff]
        %v472 = vld [vmem:[%s316 + $0x58] sm:$0xff]
        %v473 = vld [vmem:[%s316 + $0x60] sm:$0xff]
        %v474 = vld [vmem:[%s316 + $0x68] sm:$0xff]
        %v475 = vld [vmem:[%s316 + $0x70] sm:$0xff]
        %v476 = vld [vmem:[%s316 + $0x78] sm:$0xff]
        %v477 = vld [vmem:[%s316 + $0x80] sm:$0xff]
        %v478 = vld [vmem:[%s316 + $0x88] sm:$0xff]
        %v479 = vld [vmem:[%s316 + $0x90] sm:$0xff]
        %v480 = vld [vmem:[%s316 + $0x98] sm:$0xff]
        %v481 = vld [vmem:[%s316 + $0xa0] sm:$0xff]
        %v482 = vld [vmem:[%s316 + $0xa8] sm:$0xff]
        %v483 = vld [vmem:[%s316 + $0xb0] sm:$0xff]
        %v484 = vld [vmem:[%s316 + $0xb8] sm:$0xff]
        %v485 = vld [vmem:[%s316 + $0xc0] sm:$0xff]
        %v486 = vld [vmem:[%s316 + $0xc8] sm:$0xff]
        %v487 = vld [vmem:[%s316 + $0xd0] sm:$0xff]
        %v488 = vld [vmem:[%s316 + $0xd8] sm:$0xff]
        %v489 = vld [vmem:[%s316 + $0xe0] sm:$0xff]
        %v490 = vld [vmem:[%s316 + $0xe8] sm:$0xff]
        %v491 = vld [vmem:[%s316 + $0xf0] sm:$0xff]
        %v492 = vld [vmem:[%s316 + $0xf8] sm:$0xff]
        %s493 = scalar_lea.vmem [#allocation2], 24
        %494 = vst.msk [vmem:[%s493 + $0x1] sm:$0xff] %vm351, %v461
        %495 = vst.msk [vmem:[%s493 + $0x9] sm:$0xff] %vm351, %v462
        %496 = vst.msk [vmem:[%s493 + $0x19] sm:$0xff] %vm351, %v463
        %497 = vst.msk [vmem:[%s493 + $0x21] sm:$0xff] %vm351, %v464
        %498 = vst.msk [vmem:[%s493 + $0x31] sm:$0xff] %vm351, %v465
        %499 = vst.msk [vmem:[%s493 + $0x39] sm:$0xff] %vm351, %v466
        %500 = vst.msk [vmem:[%s493 + $0x49] sm:$0xff] %vm351, %v467
        %501 = vst.msk [vmem:[%s493 + $0x51] sm:$0xff] %vm351, %v468
        %502 = vst.msk [vmem:[%s493 + $0x61] sm:$0xff] %vm351, %v469
        %503 = vst.msk [vmem:[%s493 + $0x69] sm:$0xff] %vm351, %v470
        %504 = vst.msk [vmem:[%s493 + $0x79] sm:$0xff] %vm351, %v471
        %505 = vst.msk [vmem:[%s493 + $0x81] sm:$0xff] %vm351, %v472
        %506 = vst.msk [vmem:[%s493 + $0x91] sm:$0xff] %vm351, %v473
        %507 = vst.msk [vmem:[%s493 + $0x99] sm:$0xff] %vm351, %v474
        %508 = vst.msk [vmem:[%s493 + $0xa9] sm:$0xff] %vm351, %v475
        %509 = vst.msk [vmem:[%s493 + $0xb1] sm:$0xff] %vm351, %v476
        %510 = vst.msk [vmem:[%s493 + $0xc1] sm:$0xff] %vm351, %v477
        %511 = vst.msk [vmem:[%s493 + $0xc9] sm:$0xff] %vm351, %v478
        %512 = vst.msk [vmem:[%s493 + $0xd9] sm:$0xff] %vm351, %v479
        %513 = vst.msk [vmem:[%s493 + $0xe1] sm:$0xff] %vm351, %v480
        %514 = vst.msk [vmem:[%s493 + $0xf1] sm:$0xff] %vm351, %v481
        %515 = vst.msk [vmem:[%s493 + $0xf9] sm:$0xff] %vm351, %v482
        %516 = vst.msk [vmem:[%s493 + $0x109] sm:$0xff] %vm351, %v483
        %517 = vst.msk [vmem:[%s493 + $0x111] sm:$0xff] %vm351, %v484
        %518 = vst.msk [vmem:[%s493 + $0x121] sm:$0xff] %vm351, %v485
        %519 = vst.msk [vmem:[%s493 + $0x129] sm:$0xff] %vm351, %v486
        %520 = vst.msk [vmem:[%s493 + $0x139] sm:$0xff] %vm351, %v487
        %521 = vst.msk [vmem:[%s493 + $0x141] sm:$0xff] %vm351, %v488
        %522 = vst.msk [vmem:[%s493 + $0x151] sm:$0xff] %vm351, %v489
        %523 = vst.msk [vmem:[%s493 + $0x159] sm:$0xff] %vm351, %v490
        %524 = vst.msk [vmem:[%s493 + $0x169] sm:$0xff] %vm351, %v491
        %525 = vst.msk [vmem:[%s493 + $0x171] sm:$0xff] %vm351, %v492
        %v526 = vld [vmem:[#allocation2] sm:$0xff]
        %v527 = vld [vmem:[#allocation2 + $0x8] sm:$0xff]
        %v528 = vld [vmem:[#allocation2 + $0x18] sm:$0xff]
        %v529 = vld [vmem:[#allocation2 + $0x20] sm:$0xff]
        %v530 = vld [vmem:[#allocation2 + $0x30] sm:$0xff]
        %v531 = vld [vmem:[#allocation2 + $0x38] sm:$0xff]
        %v532 = vld [vmem:[#allocation2 + $0x48] sm:$0xff]
        %v533 = vld [vmem:[#allocation2 + $0x50] sm:$0xff]
        %v534 = vld [vmem:[#allocation2 + $0x60] sm:$0xff]
        %v535 = vld [vmem:[#allocation2 + $0x68] sm:$0xff]
        %v536 = vld [vmem:[#allocation2 + $0x78] sm:$0xff]
        %v537 = vld [vmem:[#allocation2 + $0x80] sm:$0xff]
        %v538 = vld [vmem:[#allocation2 + $0x90] sm:$0xff]
        %v539 = vld [vmem:[#allocation2 + $0x98] sm:$0xff]
        %v540 = vld [vmem:[#allocation2 + $0xa8] sm:$0xff]
        %v541 = vld [vmem:[#allocation2 + $0xb0] sm:$0xff]
        %v542 = vld [vmem:[#allocation2 + $0xc0] sm:$0xff]
        %v543 = vld [vmem:[#allocation2 + $0xc8] sm:$0xff]
        %v544 = vld [vmem:[#allocation2 + $0xd8] sm:$0xff]
        %v545 = vld [vmem:[#allocation2 + $0xe0] sm:$0xff]
        %v546 = vld [vmem:[#allocation2 + $0xf0] sm:$0xff]
        %v547 = vld [vmem:[#allocation2 + $0xf8] sm:$0xff]
        %v548 = vld [vmem:[#allocation2 + $0x108] sm:$0xff]
        %v549 = vld [vmem:[#allocation2 + $0x110] sm:$0xff]
        %v550 = vld [vmem:[#allocation2 + $0x120] sm:$0xff]
        %v551 = vld [vmem:[#allocation2 + $0x128] sm:$0xff]
        %v552 = vld [vmem:[#allocation2 + $0x138] sm:$0xff]
        %v553 = vld [vmem:[#allocation2 + $0x140] sm:$0xff]
        %v554 = vld [vmem:[#allocation2 + $0x150] sm:$0xff]
        %v555 = vld [vmem:[#allocation2 + $0x158] sm:$0xff]
        %v556 = vld [vmem:[#allocation2 + $0x168] sm:$0xff]
        %v557 = vld [vmem:[#allocation2 + $0x170] sm:$0xff]
        %v558 = vld [vmem:[#allocation2 + $0x1] sm:$0xff]
        %v559 = vld [vmem:[#allocation2 + $0x9] sm:$0xff]
        %v560 = vld [vmem:[#allocation2 + $0x19] sm:$0xff]
        %v561 = vld [vmem:[#allocation2 + $0x21] sm:$0xff]
        %v562 = vld [vmem:[#allocation2 + $0x31] sm:$0xff]
        %v563 = vld [vmem:[#allocation2 + $0x39] sm:$0xff]
        %v564 = vld [vmem:[#allocation2 + $0x49] sm:$0xff]
        %v565 = vld [vmem:[#allocation2 + $0x51] sm:$0xff]
        %v566 = vld [vmem:[#allocation2 + $0x61] sm:$0xff]
        %v567 = vld [vmem:[#allocation2 + $0x69] sm:$0xff]
        %v568 = vld [vmem:[#allocation2 + $0x79] sm:$0xff]
        %v569 = vld [vmem:[#allocation2 + $0x81] sm:$0xff]
        %v570 = vld [vmem:[#allocation2 + $0x91] sm:$0xff]
        %v571 = vld [vmem:[#allocation2 + $0x99] sm:$0xff]
        %v572 = vld [vmem:[#allocation2 + $0xa9] sm:$0xff]
        %v573 = vld [vmem:[#allocation2 + $0xb1] sm:$0xff]
        %v574 = vld [vmem:[#allocation2 + $0xc1] sm:$0xff]
        %v575 = vld [vmem:[#allocation2 + $0xc9] sm:$0xff]
        %v576 = vld [vmem:[#allocation2 + $0xd9] sm:$0xff]
        %v577 = vld [vmem:[#allocation2 + $0xe1] sm:$0xff]
        %v578 = vld [vmem:[#allocation2 + $0xf1] sm:$0xff]
        %v579 = vld [vmem:[#allocation2 + $0xf9] sm:$0xff]
        %v580 = vld [vmem:[#allocation2 + $0x109] sm:$0xff]
        %v581 = vld [vmem:[#allocation2 + $0x111] sm:$0xff]
        %v582 = vld [vmem:[#allocation2 + $0x121] sm:$0xff]
        %v583 = vld [vmem:[#allocation2 + $0x129] sm:$0xff]
        %v584 = vld [vmem:[#allocation2 + $0x139] sm:$0xff]
        %v585 = vld [vmem:[#allocation2 + $0x141] sm:$0xff]
        %v586 = vld [vmem:[#allocation2 + $0x151] sm:$0xff]
        %v587 = vld [vmem:[#allocation2 + $0x159] sm:$0xff]
        %v588 = vld [vmem:[#allocation2 + $0x169] sm:$0xff]
        %v589 = vld [vmem:[#allocation2 + $0x171] sm:$0xff]
        %v590 = vld [vmem:[#allocation2 + $0x2] sm:$0xff]
        %v591 = vld [vmem:[#allocation2 + $0xa] sm:$0xff]
        %v592 = vld [vmem:[#allocation2 + $0x1a] sm:$0xff]
        %v593 = vld [vmem:[#allocation2 + $0x22] sm:$0xff]
        %v594 = vld [vmem:[#allocation2 + $0x32] sm:$0xff]
        %v595 = vld [vmem:[#allocation2 + $0x3a] sm:$0xff]
        %v596 = vld [vmem:[#allocation2 + $0x4a] sm:$0xff]
        %v597 = vld [vmem:[#allocation2 + $0x52] sm:$0xff]
        %v598 = vld [vmem:[#allocation2 + $0x62] sm:$0xff]
        %v599 = vld [vmem:[#allocation2 + $0x6a] sm:$0xff]
        %v600 = vld [vmem:[#allocation2 + $0x7a] sm:$0xff]
        %v601 = vld [vmem:[#allocation2 + $0x82] sm:$0xff]
        %v602 = vld [vmem:[#allocation2 + $0x92] sm:$0xff]
        %v603 = vld [vmem:[#allocation2 + $0x9a] sm:$0xff]
        %v604 = vld [vmem:[#allocation2 + $0xaa] sm:$0xff]
        %v605 = vld [vmem:[#allocation2 + $0xb2] sm:$0xff]
        %v606 = vld [vmem:[#allocation2 + $0xc2] sm:$0xff]
        %v607 = vld [vmem:[#allocation2 + $0xca] sm:$0xff]
        %v608 = vld [vmem:[#allocation2 + $0xda] sm:$0xff]
        %v609 = vld [vmem:[#allocation2 + $0xe2] sm:$0xff]
        %v610 = vld [vmem:[#allocation2 + $0xf2] sm:$0xff]
        %v611 = vld [vmem:[#allocation2 + $0xfa] sm:$0xff]
        %v612 = vld [vmem:[#allocation2 + $0x10a] sm:$0xff]
        %v613 = vld [vmem:[#allocation2 + $0x112] sm:$0xff]
        %v614 = vld [vmem:[#allocation2 + $0x122] sm:$0xff]
        %v615 = vld [vmem:[#allocation2 + $0x12a] sm:$0xff]
        %v616 = vld [vmem:[#allocation2 + $0x13a] sm:$0xff]
        %v617 = vld [vmem:[#allocation2 + $0x142] sm:$0xff]
        %v618 = vld [vmem:[#allocation2 + $0x152] sm:$0xff]
        %v619 = vld [vmem:[#allocation2 + $0x15a] sm:$0xff]
        %v620 = vld [vmem:[#allocation2 + $0x16a] sm:$0xff]
        %v621 = vld [vmem:[#allocation2 + $0x172] sm:$0xff]
        %v622 = vld [vmem:[%s493] sm:$0xff]
        %v623 = vld [vmem:[%s493 + $0x8] sm:$0xff]
        %v624 = vld [vmem:[%s493 + $0x18] sm:$0xff]
        %v625 = vld [vmem:[%s493 + $0x20] sm:$0xff]
        %v626 = vld [vmem:[%s493 + $0x30] sm:$0xff]
        %v627 = vld [vmem:[%s493 + $0x38] sm:$0xff]
        %v628 = vld [vmem:[%s493 + $0x48] sm:$0xff]
        %v629 = vld [vmem:[%s493 + $0x50] sm:$0xff]
        %v630 = vld [vmem:[%s493 + $0x60] sm:$0xff]
        %v631 = vld [vmem:[%s493 + $0x68] sm:$0xff]
        %v632 = vld [vmem:[%s493 + $0x78] sm:$0xff]
        %v633 = vld [vmem:[%s493 + $0x80] sm:$0xff]
        %v634 = vld [vmem:[%s493 + $0x90] sm:$0xff]
        %v635 = vld [vmem:[%s493 + $0x98] sm:$0xff]
        %v636 = vld [vmem:[%s493 + $0xa8] sm:$0xff]
        %v637 = vld [vmem:[%s493 + $0xb0] sm:$0xff]
        %v638 = vld [vmem:[%s493 + $0xc0] sm:$0xff]
        %v639 = vld [vmem:[%s493 + $0xc8] sm:$0xff]
        %v640 = vld [vmem:[%s493 + $0xd8] sm:$0xff]
        %v641 = vld [vmem:[%s493 + $0xe0] sm:$0xff]
        %v642 = vld [vmem:[%s493 + $0xf0] sm:$0xff]
        %v643 = vld [vmem:[%s493 + $0xf8] sm:$0xff]
        %v644 = vld [vmem:[%s493 + $0x108] sm:$0xff]
        %v645 = vld [vmem:[%s493 + $0x110] sm:$0xff]
        %v646 = vld [vmem:[%s493 + $0x120] sm:$0xff]
        %v647 = vld [vmem:[%s493 + $0x128] sm:$0xff]
        %v648 = vld [vmem:[%s493 + $0x138] sm:$0xff]
        %v649 = vld [vmem:[%s493 + $0x140] sm:$0xff]
        %v650 = vld [vmem:[%s493 + $0x150] sm:$0xff]
        %v651 = vld [vmem:[%s493 + $0x158] sm:$0xff]
        %v652 = vld [vmem:[%s493 + $0x168] sm:$0xff]
        %v653 = vld [vmem:[%s493 + $0x170] sm:$0xff]
        %v654 = vld [vmem:[%s493 + $0x1] sm:$0xff]
        %v655 = vld [vmem:[%s493 + $0x9] sm:$0xff]
        %v656 = vld [vmem:[%s493 + $0x19] sm:$0xff]
        %v657 = vld [vmem:[%s493 + $0x21] sm:$0xff]
        %v658 = vld [vmem:[%s493 + $0x31] sm:$0xff]
        %v659 = vld [vmem:[%s493 + $0x39] sm:$0xff]
        %v660 = vld [vmem:[%s493 + $0x49] sm:$0xff]
        %v661 = vld [vmem:[%s493 + $0x51] sm:$0xff]
        %v662 = vld [vmem:[%s493 + $0x61] sm:$0xff]
        %v663 = vld [vmem:[%s493 + $0x69] sm:$0xff]
        %v664 = vld [vmem:[%s493 + $0x79] sm:$0xff]
        %v665 = vld [vmem:[%s493 + $0x81] sm:$0xff]
        %v666 = vld [vmem:[%s493 + $0x91] sm:$0xff]
        %v667 = vld [vmem:[%s493 + $0x99] sm:$0xff]
        %v668 = vld [vmem:[%s493 + $0xa9] sm:$0xff]
        %v669 = vld [vmem:[%s493 + $0xb1] sm:$0xff]
        %v670 = vld [vmem:[%s493 + $0xc1] sm:$0xff]
        %v671 = vld [vmem:[%s493 + $0xc9] sm:$0xff]
        %v672 = vld [vmem:[%s493 + $0xd9] sm:$0xff]
        %v673 = vld [vmem:[%s493 + $0xe1] sm:$0xff]
        %v674 = vld [vmem:[%s493 + $0xf1] sm:$0xff]
        %v675 = vld [vmem:[%s493 + $0xf9] sm:$0xff]
        %v676 = vld [vmem:[%s493 + $0x109] sm:$0xff]
        %v677 = vld [vmem:[%s493 + $0x111] sm:$0xff]
        %v678 = vld [vmem:[%s493 + $0x121] sm:$0xff]
        %v679 = vld [vmem:[%s493 + $0x129] sm:$0xff]
        %v680 = vld [vmem:[%s493 + $0x139] sm:$0xff]
        %v681 = vld [vmem:[%s493 + $0x141] sm:$0xff]
        %v682 = vld [vmem:[%s493 + $0x151] sm:$0xff]
        %v683 = vld [vmem:[%s493 + $0x159] sm:$0xff]
        %v684 = vld [vmem:[%s493 + $0x169] sm:$0xff]
        %v685 = vld [vmem:[%s493 + $0x171] sm:$0xff]
        %v686 = vld [vmem:[%s493 + $0x2] sm:$0xff]
        %v687 = vld [vmem:[%s493 + $0xa] sm:$0xff]
        %v688 = vld [vmem:[%s493 + $0x1a] sm:$0xff]
        %v689 = vld [vmem:[%s493 + $0x22] sm:$0xff]
        %v690 = vld [vmem:[%s493 + $0x32] sm:$0xff]
        %v691 = vld [vmem:[%s493 + $0x3a] sm:$0xff]
        %v692 = vld [vmem:[%s493 + $0x4a] sm:$0xff]
        %v693 = vld [vmem:[%s493 + $0x52] sm:$0xff]
        %v694 = vld [vmem:[%s493 + $0x62] sm:$0xff]
        %v695 = vld [vmem:[%s493 + $0x6a] sm:$0xff]
        %v696 = vld [vmem:[%s493 + $0x7a] sm:$0xff]
        %v697 = vld [vmem:[%s493 + $0x82] sm:$0xff]
        %v698 = vld [vmem:[%s493 + $0x92] sm:$0xff]
        %v699 = vld [vmem:[%s493 + $0x9a] sm:$0xff]
        %v700 = vld [vmem:[%s493 + $0xaa] sm:$0xff]
        %v701 = vld [vmem:[%s493 + $0xb2] sm:$0xff]
        %v702 = vld [vmem:[%s493 + $0xc2] sm:$0xff]
        %v703 = vld [vmem:[%s493 + $0xca] sm:$0xff]
        %v704 = vld [vmem:[%s493 + $0xda] sm:$0xff]
        %v705 = vld [vmem:[%s493 + $0xe2] sm:$0xff]
        %v706 = vld [vmem:[%s493 + $0xf2] sm:$0xff]
        %v707 = vld [vmem:[%s493 + $0xfa] sm:$0xff]
        %v708 = vld [vmem:[%s493 + $0x10a] sm:$0xff]
        %v709 = vld [vmem:[%s493 + $0x112] sm:$0xff]
        %v710 = vld [vmem:[%s493 + $0x122] sm:$0xff]
        %v711 = vld [vmem:[%s493 + $0x12a] sm:$0xff]
        %v712 = vld [vmem:[%s493 + $0x13a] sm:$0xff]
        %v713 = vld [vmem:[%s493 + $0x142] sm:$0xff]
        %v714 = vld [vmem:[%s493 + $0x152] sm:$0xff]
        %v715 = vld [vmem:[%s493 + $0x15a] sm:$0xff]
        %v716 = vld [vmem:[%s493 + $0x16a] sm:$0xff]
        %v717 = vld [vmem:[%s493 + $0x172] sm:$0xff]
        %s718 = scalar_lea.vmem [#allocation2], 48
        %v719 = vld [vmem:[%s718] sm:$0xff]
        %v720 = vld [vmem:[%s718 + $0x8] sm:$0xff]
        %v721 = vld [vmem:[%s718 + $0x18] sm:$0xff]
        %v722 = vld [vmem:[%s718 + $0x20] sm:$0xff]
        %v723 = vld [vmem:[%s718 + $0x30] sm:$0xff]
        %v724 = vld [vmem:[%s718 + $0x38] sm:$0xff]
        %v725 = vld [vmem:[%s718 + $0x48] sm:$0xff]
        %v726 = vld [vmem:[%s718 + $0x50] sm:$0xff]
        %v727 = vld [vmem:[%s718 + $0x60] sm:$0xff]
        %v728 = vld [vmem:[%s718 + $0x68] sm:$0xff]
        %v729 = vld [vmem:[%s718 + $0x78] sm:$0xff]
        %v730 = vld [vmem:[%s718 + $0x80] sm:$0xff]
        %v731 = vld [vmem:[%s718 + $0x90] sm:$0xff]
        %v732 = vld [vmem:[%s718 + $0x98] sm:$0xff]
        %v733 = vld [vmem:[%s718 + $0xa8] sm:$0xff]
        %v734 = vld [vmem:[%s718 + $0xb0] sm:$0xff]
        %v735 = vld [vmem:[%s718 + $0xc0] sm:$0xff]
        %v736 = vld [vmem:[%s718 + $0xc8] sm:$0xff]
        %v737 = vld [vmem:[%s718 + $0xd8] sm:$0xff]
        %v738 = vld [vmem:[%s718 + $0xe0] sm:$0xff]
        %v739 = vld [vmem:[%s718 + $0xf0] sm:$0xff]
        %v740 = vld [vmem:[%s718 + $0xf8] sm:$0xff]
        %v741 = vld [vmem:[%s718 + $0x108] sm:$0xff]
        %v742 = vld [vmem:[%s718 + $0x110] sm:$0xff]
        %v743 = vld [vmem:[%s718 + $0x120] sm:$0xff]
        %v744 = vld [vmem:[%s718 + $0x128] sm:$0xff]
        %v745 = vld [vmem:[%s718 + $0x138] sm:$0xff]
        %v746 = vld [vmem:[%s718 + $0x140] sm:$0xff]
        %v747 = vld [vmem:[%s718 + $0x150] sm:$0xff]
        %v748 = vld [vmem:[%s718 + $0x158] sm:$0xff]
        %v749 = vld [vmem:[%s718 + $0x168] sm:$0xff]
        %v750 = vld [vmem:[%s718 + $0x170] sm:$0xff]
        %v751 = vld [vmem:[%s718 + $0x1] sm:$0xff]
        %v752 = vld [vmem:[%s718 + $0x9] sm:$0xff]
        %v753 = vld [vmem:[%s718 + $0x19] sm:$0xff]
        %v754 = vld [vmem:[%s718 + $0x21] sm:$0xff]
        %v755 = vld [vmem:[%s718 + $0x31] sm:$0xff]
        %v756 = vld [vmem:[%s718 + $0x39] sm:$0xff]
        %v757 = vld [vmem:[%s718 + $0x49] sm:$0xff]
        %v758 = vld [vmem:[%s718 + $0x51] sm:$0xff]
        %v759 = vld [vmem:[%s718 + $0x61] sm:$0xff]
        %v760 = vld [vmem:[%s718 + $0x69] sm:$0xff]
        %v761 = vld [vmem:[%s718 + $0x79] sm:$0xff]
        %v762 = vld [vmem:[%s718 + $0x81] sm:$0xff]
        %v763 = vld [vmem:[%s718 + $0x91] sm:$0xff]
        %v764 = vld [vmem:[%s718 + $0x99] sm:$0xff]
        %v765 = vld [vmem:[%s718 + $0xa9] sm:$0xff]
        %v766 = vld [vmem:[%s718 + $0xb1] sm:$0xff]
        %v767 = vld [vmem:[%s718 + $0xc1] sm:$0xff]
        %v768 = vld [vmem:[%s718 + $0xc9] sm:$0xff]
        %v769 = vld [vmem:[%s718 + $0xd9] sm:$0xff]
        %v770 = vld [vmem:[%s718 + $0xe1] sm:$0xff]
        %v771 = vld [vmem:[%s718 + $0xf1] sm:$0xff]
        %v772 = vld [vmem:[%s718 + $0xf9] sm:$0xff]
        %v773 = vld [vmem:[%s718 + $0x109] sm:$0xff]
        %v774 = vld [vmem:[%s718 + $0x111] sm:$0xff]
        %v775 = vld [vmem:[%s718 + $0x121] sm:$0xff]
        %v776 = vld [vmem:[%s718 + $0x129] sm:$0xff]
        %v777 = vld [vmem:[%s718 + $0x139] sm:$0xff]
        %v778 = vld [vmem:[%s718 + $0x141] sm:$0xff]
        %v779 = vld [vmem:[%s718 + $0x151] sm:$0xff]
        %v780 = vld [vmem:[%s718 + $0x159] sm:$0xff]
        %v781 = vld [vmem:[%s718 + $0x169] sm:$0xff]
        %v782 = vld [vmem:[%s718 + $0x171] sm:$0xff]
        %v783 = vld [vmem:[%s718 + $0x2] sm:$0xff]
        %v784 = vld [vmem:[%s718 + $0xa] sm:$0xff]
        %v785 = vld [vmem:[%s718 + $0x1a] sm:$0xff]
        %v786 = vld [vmem:[%s718 + $0x22] sm:$0xff]
        %v787 = vld [vmem:[%s718 + $0x32] sm:$0xff]
        %v788 = vld [vmem:[%s718 + $0x3a] sm:$0xff]
        %v789 = vld [vmem:[%s718 + $0x4a] sm:$0xff]
        %v790 = vld [vmem:[%s718 + $0x52] sm:$0xff]
        %v791 = vld [vmem:[%s718 + $0x62] sm:$0xff]
        %v792 = vld [vmem:[%s718 + $0x6a] sm:$0xff]
        %v793 = vld [vmem:[%s718 + $0x7a] sm:$0xff]
        %v794 = vld [vmem:[%s718 + $0x82] sm:$0xff]
        %v795 = vld [vmem:[%s718 + $0x92] sm:$0xff]
        %v796 = vld [vmem:[%s718 + $0x9a] sm:$0xff]
        %v797 = vld [vmem:[%s718 + $0xaa] sm:$0xff]
        %v798 = vld [vmem:[%s718 + $0xb2] sm:$0xff]
        %v799 = vld [vmem:[%s718 + $0xc2] sm:$0xff]
        %v800 = vld [vmem:[%s718 + $0xca] sm:$0xff]
        %v801 = vld [vmem:[%s718 + $0xda] sm:$0xff]
        %v802 = vld [vmem:[%s718 + $0xe2] sm:$0xff]
        %v803 = vld [vmem:[%s718 + $0xf2] sm:$0xff]
        %v804 = vld [vmem:[%s718 + $0xfa] sm:$0xff]
        %v805 = vld [vmem:[%s718 + $0x10a] sm:$0xff]
        %v806 = vld [vmem:[%s718 + $0x112] sm:$0xff]
        %v807 = vld [vmem:[%s718 + $0x122] sm:$0xff]
        %v808 = vld [vmem:[%s718 + $0x12a] sm:$0xff]
        %v809 = vld [vmem:[%s718 + $0x13a] sm:$0xff]
        %v810 = vld [vmem:[%s718 + $0x142] sm:$0xff]
        %v811 = vld [vmem:[%s718 + $0x152] sm:$0xff]
        %v812 = vld [vmem:[%s718 + $0x15a] sm:$0xff]
        %v813 = vld [vmem:[%s718 + $0x16a] sm:$0xff]
        %v814 = vld [vmem:[%s718 + $0x172] sm:$0xff]
        %847 = vrot.lane.b32.xlu0 %v558, 16
        %v848 = vpop.permute.xlu0 %847
        %849 = vrot.lane.b32.xlu0 %v559, 16
        %v850 = vpop.permute.xlu0 %849
        %851 = vrot.lane.b32.xlu0 %v560, 16
        %v852 = vpop.permute.xlu0 %851
        %853 = vrot.lane.b32.xlu0 %v561, 16
        %v854 = vpop.permute.xlu0 %853
        %855 = vrot.lane.b32.xlu0 %v562, 16
        %v856 = vpop.permute.xlu0 %855
        %857 = vrot.lane.b32.xlu0 %v563, 16
        %v858 = vpop.permute.xlu0 %857
        %859 = vrot.lane.b32.xlu0 %v564, 16
        %v860 = vpop.permute.xlu0 %859
        %861 = vrot.lane.b32.xlu0 %v565, 16
        %v862 = vpop.permute.xlu0 %861
        %863 = vrot.lane.b32.xlu0 %v566, 16
        %v864 = vpop.permute.xlu0 %863
        %865 = vrot.lane.b32.xlu0 %v567, 16
        %v866 = vpop.permute.xlu0 %865
        %867 = vrot.lane.b32.xlu0 %v568, 16
        %v868 = vpop.permute.xlu0 %867
        %869 = vrot.lane.b32.xlu0 %v569, 16
        %v870 = vpop.permute.xlu0 %869
        %871 = vrot.lane.b32.xlu0 %v570, 16
        %v872 = vpop.permute.xlu0 %871
        %873 = vrot.lane.b32.xlu0 %v571, 16
        %v874 = vpop.permute.xlu0 %873
        %875 = vrot.lane.b32.xlu0 %v572, 16
        %v876 = vpop.permute.xlu0 %875
        %877 = vrot.lane.b32.xlu0 %v573, 16
        %v878 = vpop.permute.xlu0 %877
        %879 = vrot.lane.b32.xlu0 %v574, 16
        %v880 = vpop.permute.xlu0 %879
        %881 = vrot.lane.b32.xlu0 %v575, 16
        %v882 = vpop.permute.xlu0 %881
        %883 = vrot.lane.b32.xlu0 %v576, 16
        %v884 = vpop.permute.xlu0 %883
        %885 = vrot.lane.b32.xlu0 %v577, 16
        %v886 = vpop.permute.xlu0 %885
        %887 = vrot.lane.b32.xlu0 %v578, 16
        %v888 = vpop.permute.xlu0 %887
        %889 = vrot.lane.b32.xlu0 %v579, 16
        %v890 = vpop.permute.xlu0 %889
        %891 = vrot.lane.b32.xlu0 %v580, 16
        %v892 = vpop.permute.xlu0 %891
        %893 = vrot.lane.b32.xlu0 %v581, 16
        %v894 = vpop.permute.xlu0 %893
        %895 = vrot.lane.b32.xlu0 %v582, 16
        %v896 = vpop.permute.xlu0 %895
        %897 = vrot.lane.b32.xlu0 %v583, 16
        %v898 = vpop.permute.xlu0 %897
        %899 = vrot.lane.b32.xlu0 %v584, 16
        %v900 = vpop.permute.xlu0 %899
        %901 = vrot.lane.b32.xlu0 %v585, 16
        %v902 = vpop.permute.xlu0 %901
        %903 = vrot.lane.b32.xlu0 %v586, 16
        %v904 = vpop.permute.xlu0 %903
        %905 = vrot.lane.b32.xlu0 %v587, 16
        %v906 = vpop.permute.xlu0 %905
        %907 = vrot.lane.b32.xlu0 %v588, 16
        %v908 = vpop.permute.xlu0 %907
        %909 = vrot.lane.b32.xlu0 %v589, 16
        %v910 = vpop.permute.xlu0 %909
        %975 = vrot.lane.b32.xlu0 %v590, 32
        %v976 = vpop.permute.xlu0 %975
        %977 = vrot.lane.b32.xlu0 %v591, 32
        %v978 = vpop.permute.xlu0 %977
        %979 = vrot.lane.b32.xlu0 %v592, 32
        %v980 = vpop.permute.xlu0 %979
        %981 = vrot.lane.b32.xlu0 %v593, 32
        %v982 = vpop.permute.xlu0 %981
        %983 = vrot.lane.b32.xlu0 %v594, 32
        %v984 = vpop.permute.xlu0 %983
        %985 = vrot.lane.b32.xlu0 %v595, 32
        %v986 = vpop.permute.xlu0 %985
        %987 = vrot.lane.b32.xlu0 %v596, 32
        %v988 = vpop.permute.xlu0 %987
        %989 = vrot.lane.b32.xlu0 %v597, 32
        %v990 = vpop.permute.xlu0 %989
        %991 = vrot.lane.b32.xlu0 %v598, 32
        %v992 = vpop.permute.xlu0 %991
        %993 = vrot.lane.b32.xlu0 %v599, 32
        %v994 = vpop.permute.xlu0 %993
        %995 = vrot.lane.b32.xlu0 %v600, 32
        %v996 = vpop.permute.xlu0 %995
        %997 = vrot.lane.b32.xlu0 %v601, 32
        %v998 = vpop.permute.xlu0 %997
        %999 = vrot.lane.b32.xlu0 %v602, 32
        %v1000 = vpop.permute.xlu0 %999
        %1001 = vrot.lane.b32.xlu0 %v603, 32
        %v1002 = vpop.permute.xlu0 %1001
        %1003 = vrot.lane.b32.xlu0 %v604, 32
        %v1004 = vpop.permute.xlu0 %1003
        %1005 = vrot.lane.b32.xlu0 %v605, 32
        %v1006 = vpop.permute.xlu0 %1005
        %1007 = vrot.lane.b32.xlu0 %v606, 32
        %v1008 = vpop.permute.xlu0 %1007
        %1009 = vrot.lane.b32.xlu0 %v607, 32
        %v1010 = vpop.permute.xlu0 %1009
        %1011 = vrot.lane.b32.xlu0 %v608, 32
        %v1012 = vpop.permute.xlu0 %1011
        %1013 = vrot.lane.b32.xlu0 %v609, 32
        %v1014 = vpop.permute.xlu0 %1013
        %1015 = vrot.lane.b32.xlu0 %v610, 32
        %v1016 = vpop.permute.xlu0 %1015
        %1017 = vrot.lane.b32.xlu0 %v611, 32
        %v1018 = vpop.permute.xlu0 %1017
        %1019 = vrot.lane.b32.xlu0 %v612, 32
        %v1020 = vpop.permute.xlu0 %1019
        %1021 = vrot.lane.b32.xlu0 %v613, 32
        %v1022 = vpop.permute.xlu0 %1021
        %1023 = vrot.lane.b32.xlu0 %v614, 32
        %v1024 = vpop.permute.xlu0 %1023
        %1025 = vrot.lane.b32.xlu0 %v615, 32
        %v1026 = vpop.permute.xlu0 %1025
        %1027 = vrot.lane.b32.xlu0 %v616, 32
        %v1028 = vpop.permute.xlu0 %1027
        %1029 = vrot.lane.b32.xlu0 %v617, 32
        %v1030 = vpop.permute.xlu0 %1029
        %1031 = vrot.lane.b32.xlu0 %v618, 32
        %v1032 = vpop.permute.xlu0 %1031
        %1033 = vrot.lane.b32.xlu0 %v619, 32
        %v1034 = vpop.permute.xlu0 %1033
        %1035 = vrot.lane.b32.xlu0 %v620, 32
        %v1036 = vpop.permute.xlu0 %1035
        %1037 = vrot.lane.b32.xlu0 %v621, 32
        %v1038 = vpop.permute.xlu0 %1037
        %1103 = vrot.lane.b32.xlu0 %v622, 48
        %v1104 = vpop.permute.xlu0 %1103
        %1105 = vrot.lane.b32.xlu0 %v623, 48
        %v1106 = vpop.permute.xlu0 %1105
        %1107 = vrot.lane.b32.xlu0 %v624, 48
        %v1108 = vpop.permute.xlu0 %1107
        %1109 = vrot.lane.b32.xlu0 %v625, 48
        %v1110 = vpop.permute.xlu0 %1109
        %1111 = vrot.lane.b32.xlu0 %v626, 48
        %v1112 = vpop.permute.xlu0 %1111
        %1113 = vrot.lane.b32.xlu0 %v627, 48
        %v1114 = vpop.permute.xlu0 %1113
        %1115 = vrot.lane.b32.xlu0 %v628, 48
        %v1116 = vpop.permute.xlu0 %1115
        %1117 = vrot.lane.b32.xlu0 %v629, 48
        %v1118 = vpop.permute.xlu0 %1117
        %1119 = vrot.lane.b32.xlu0 %v630, 48
        %v1120 = vpop.permute.xlu0 %1119
        %1121 = vrot.lane.b32.xlu0 %v631, 48
        %v1122 = vpop.permute.xlu0 %1121
        %1123 = vrot.lane.b32.xlu0 %v632, 48
        %v1124 = vpop.permute.xlu0 %1123
        %1125 = vrot.lane.b32.xlu0 %v633, 48
        %v1126 = vpop.permute.xlu0 %1125
        %1127 = vrot.lane.b32.xlu0 %v634, 48
        %v1128 = vpop.permute.xlu0 %1127
        %1129 = vrot.lane.b32.xlu0 %v635, 48
        %v1130 = vpop.permute.xlu0 %1129
        %1131 = vrot.lane.b32.xlu0 %v636, 48
        %v1132 = vpop.permute.xlu0 %1131
        %1133 = vrot.lane.b32.xlu0 %v637, 48
        %v1134 = vpop.permute.xlu0 %1133
        %1135 = vrot.lane.b32.xlu0 %v638, 48
        %v1136 = vpop.permute.xlu0 %1135
        %1137 = vrot.lane.b32.xlu0 %v639, 48
        %v1138 = vpop.permute.xlu0 %1137
        %1139 = vrot.lane.b32.xlu0 %v640, 48
        %v1140 = vpop.permute.xlu0 %1139
        %1141 = vrot.lane.b32.xlu0 %v641, 48
        %v1142 = vpop.permute.xlu0 %1141
        %1143 = vrot.lane.b32.xlu0 %v642, 48
        %v1144 = vpop.permute.xlu0 %1143
        %1145 = vrot.lane.b32.xlu0 %v643, 48
        %v1146 = vpop.permute.xlu0 %1145
        %1147 = vrot.lane.b32.xlu0 %v644, 48
        %v1148 = vpop.permute.xlu0 %1147
        %1149 = vrot.lane.b32.xlu0 %v645, 48
        %v1150 = vpop.permute.xlu0 %1149
        %1151 = vrot.lane.b32.xlu0 %v646, 48
        %v1152 = vpop.permute.xlu0 %1151
        %1153 = vrot.lane.b32.xlu0 %v647, 48
        %v1154 = vpop.permute.xlu0 %1153
        %1155 = vrot.lane.b32.xlu0 %v648, 48
        %v1156 = vpop.permute.xlu0 %1155
        %1157 = vrot.lane.b32.xlu0 %v649, 48
        %v1158 = vpop.permute.xlu0 %1157
        %1159 = vrot.lane.b32.xlu0 %v650, 48
        %v1160 = vpop.permute.xlu0 %1159
        %1161 = vrot.lane.b32.xlu0 %v651, 48
        %v1162 = vpop.permute.xlu0 %1161
        %1163 = vrot.lane.b32.xlu0 %v652, 48
        %v1164 = vpop.permute.xlu0 %1163
        %1165 = vrot.lane.b32.xlu0 %v653, 48
        %v1166 = vpop.permute.xlu0 %1165
        %1231 = vrot.lane.b32.xlu0 %v654, 64
        %v1232 = vpop.permute.xlu0 %1231
        %1233 = vrot.lane.b32.xlu0 %v655, 64
        %v1234 = vpop.permute.xlu0 %1233
        %1235 = vrot.lane.b32.xlu0 %v656, 64
        %v1236 = vpop.permute.xlu0 %1235
        %1237 = vrot.lane.b32.xlu0 %v657, 64
        %v1238 = vpop.permute.xlu0 %1237
        %1239 = vrot.lane.b32.xlu0 %v658, 64
        %v1240 = vpop.permute.xlu0 %1239
        %1241 = vrot.lane.b32.xlu0 %v659, 64
        %v1242 = vpop.permute.xlu0 %1241
        %1243 = vrot.lane.b32.xlu0 %v660, 64
        %v1244 = vpop.permute.xlu0 %1243
        %1245 = vrot.lane.b32.xlu0 %v661, 64
        %v1246 = vpop.permute.xlu0 %1245
        %1247 = vrot.lane.b32.xlu0 %v662, 64
        %v1248 = vpop.permute.xlu0 %1247
        %1249 = vrot.lane.b32.xlu0 %v663, 64
        %v1250 = vpop.permute.xlu0 %1249
        %1251 = vrot.lane.b32.xlu0 %v664, 64
        %v1252 = vpop.permute.xlu0 %1251
        %1253 = vrot.lane.b32.xlu0 %v665, 64
        %v1254 = vpop.permute.xlu0 %1253
        %1255 = vrot.lane.b32.xlu0 %v666, 64
        %v1256 = vpop.permute.xlu0 %1255
        %1257 = vrot.lane.b32.xlu0 %v667, 64
        %v1258 = vpop.permute.xlu0 %1257
        %1259 = vrot.lane.b32.xlu0 %v668, 64
        %v1260 = vpop.permute.xlu0 %1259
        %1261 = vrot.lane.b32.xlu0 %v669, 64
        %v1262 = vpop.permute.xlu0 %1261
        %1263 = vrot.lane.b32.xlu0 %v670, 64
        %v1264 = vpop.permute.xlu0 %1263
        %1265 = vrot.lane.b32.xlu0 %v671, 64
        %v1266 = vpop.permute.xlu0 %1265
        %1267 = vrot.lane.b32.xlu0 %v672, 64
        %v1268 = vpop.permute.xlu0 %1267
        %1269 = vrot.lane.b32.xlu0 %v673, 64
        %v1270 = vpop.permute.xlu0 %1269
        %1271 = vrot.lane.b32.xlu0 %v674, 64
        %v1272 = vpop.permute.xlu0 %1271
        %1273 = vrot.lane.b32.xlu0 %v675, 64
        %v1274 = vpop.permute.xlu0 %1273
        %1275 = vrot.lane.b32.xlu0 %v676, 64
        %v1276 = vpop.permute.xlu0 %1275
        %1277 = vrot.lane.b32.xlu0 %v677, 64
        %v1278 = vpop.permute.xlu0 %1277
        %1279 = vrot.lane.b32.xlu0 %v678, 64
        %v1280 = vpop.permute.xlu0 %1279
        %1281 = vrot.lane.b32.xlu0 %v679, 64
        %v1282 = vpop.permute.xlu0 %1281
        %1283 = vrot.lane.b32.xlu0 %v680, 64
        %v1284 = vpop.permute.xlu0 %1283
        %1285 = vrot.lane.b32.xlu0 %v681, 64
        %v1286 = vpop.permute.xlu0 %1285
        %1287 = vrot.lane.b32.xlu0 %v682, 64
        %v1288 = vpop.permute.xlu0 %1287
        %1289 = vrot.lane.b32.xlu0 %v683, 64
        %v1290 = vpop.permute.xlu0 %1289
        %1291 = vrot.lane.b32.xlu0 %v684, 64
        %v1292 = vpop.permute.xlu0 %1291
        %1293 = vrot.lane.b32.xlu0 %v685, 64
        %v1294 = vpop.permute.xlu0 %1293
        %1359 = vrot.lane.b32.xlu0 %v686, 80
        %v1360 = vpop.permute.xlu0 %1359
        %1361 = vrot.lane.b32.xlu0 %v687, 80
        %v1362 = vpop.permute.xlu0 %1361
        %1363 = vrot.lane.b32.xlu0 %v688, 80
        %v1364 = vpop.permute.xlu0 %1363
        %1365 = vrot.lane.b32.xlu0 %v689, 80
        %v1366 = vpop.permute.xlu0 %1365
        %1367 = vrot.lane.b32.xlu0 %v690, 80
        %v1368 = vpop.permute.xlu0 %1367
        %1369 = vrot.lane.b32.xlu0 %v691, 80
        %v1370 = vpop.permute.xlu0 %1369
        %1371 = vrot.lane.b32.xlu0 %v692, 80
        %v1372 = vpop.permute.xlu0 %1371
        %1373 = vrot.lane.b32.xlu0 %v693, 80
        %v1374 = vpop.permute.xlu0 %1373
        %1375 = vrot.lane.b32.xlu0 %v694, 80
        %v1376 = vpop.permute.xlu0 %1375
        %1377 = vrot.lane.b32.xlu0 %v695, 80
        %v1378 = vpop.permute.xlu0 %1377
        %1379 = vrot.lane.b32.xlu0 %v696, 80
        %v1380 = vpop.permute.xlu0 %1379
        %1381 = vrot.lane.b32.xlu0 %v697, 80
        %v1382 = vpop.permute.xlu0 %1381
        %1383 = vrot.lane.b32.xlu0 %v698, 80
        %v1384 = vpop.permute.xlu0 %1383
        %1385 = vrot.lane.b32.xlu0 %v699, 80
        %v1386 = vpop.permute.xlu0 %1385
        %1387 = vrot.lane.b32.xlu0 %v700, 80
        %v1388 = vpop.permute.xlu0 %1387
        %1389 = vrot.lane.b32.xlu0 %v701, 80
        %v1390 = vpop.permute.xlu0 %1389
        %1391 = vrot.lane.b32.xlu0 %v702, 80
        %v1392 = vpop.permute.xlu0 %1391
        %1393 = vrot.lane.b32.xlu0 %v703, 80
        %v1394 = vpop.permute.xlu0 %1393
        %1395 = vrot.lane.b32.xlu0 %v704, 80
        %v1396 = vpop.permute.xlu0 %1395
        %1397 = vrot.lane.b32.xlu0 %v705, 80
        %v1398 = vpop.permute.xlu0 %1397
        %1399 = vrot.lane.b32.xlu0 %v706, 80
        %v1400 = vpop.permute.xlu0 %1399
        %1401 = vrot.lane.b32.xlu0 %v707, 80
        %v1402 = vpop.permute.xlu0 %1401
        %1403 = vrot.lane.b32.xlu0 %v708, 80
        %v1404 = vpop.permute.xlu0 %1403
        %1405 = vrot.lane.b32.xlu0 %v709, 80
        %v1406 = vpop.permute.xlu0 %1405
        %1407 = vrot.lane.b32.xlu0 %v710, 80
        %v1408 = vpop.permute.xlu0 %1407
        %1409 = vrot.lane.b32.xlu0 %v711, 80
        %v1410 = vpop.permute.xlu0 %1409
        %1411 = vrot.lane.b32.xlu0 %v712, 80
        %v1412 = vpop.permute.xlu0 %1411
        %1413 = vrot.lane.b32.xlu0 %v713, 80
        %v1414 = vpop.permute.xlu0 %1413
        %1415 = vrot.lane.b32.xlu0 %v714, 80
        %v1416 = vpop.permute.xlu0 %1415
        %1417 = vrot.lane.b32.xlu0 %v715, 80
        %v1418 = vpop.permute.xlu0 %1417
        %1419 = vrot.lane.b32.xlu0 %v716, 80
        %v1420 = vpop.permute.xlu0 %1419
        %1421 = vrot.lane.b32.xlu0 %v717, 80
        %v1422 = vpop.permute.xlu0 %1421
        %1487 = vrot.lane.b32.xlu0 %v719, 96
        %v1488 = vpop.permute.xlu0 %1487
        %1489 = vrot.lane.b32.xlu0 %v720, 96
        %v1490 = vpop.permute.xlu0 %1489
        %1491 = vrot.lane.b32.xlu0 %v721, 96
        %v1492 = vpop.permute.xlu0 %1491
        %1493 = vrot.lane.b32.xlu0 %v722, 96
        %v1494 = vpop.permute.xlu0 %1493
        %1495 = vrot.lane.b32.xlu0 %v723, 96
        %v1496 = vpop.permute.xlu0 %1495
        %1497 = vrot.lane.b32.xlu0 %v724, 96
        %v1498 = vpop.permute.xlu0 %1497
        %1499 = vrot.lane.b32.xlu0 %v725, 96
        %v1500 = vpop.permute.xlu0 %1499
        %1501 = vrot.lane.b32.xlu0 %v726, 96
        %v1502 = vpop.permute.xlu0 %1501
        %1503 = vrot.lane.b32.xlu0 %v727, 96
        %v1504 = vpop.permute.xlu0 %1503
        %1505 = vrot.lane.b32.xlu0 %v728, 96
        %v1506 = vpop.permute.xlu0 %1505
        %1507 = vrot.lane.b32.xlu0 %v729, 96
        %v1508 = vpop.permute.xlu0 %1507
        %1509 = vrot.lane.b32.xlu0 %v730, 96
        %v1510 = vpop.permute.xlu0 %1509
        %1511 = vrot.lane.b32.xlu0 %v731, 96
        %v1512 = vpop.permute.xlu0 %1511
        %1513 = vrot.lane.b32.xlu0 %v732, 96
        %v1514 = vpop.permute.xlu0 %1513
        %1515 = vrot.lane.b32.xlu0 %v733, 96
        %v1516 = vpop.permute.xlu0 %1515
        %1517 = vrot.lane.b32.xlu0 %v734, 96
        %v1518 = vpop.permute.xlu0 %1517
        %1519 = vrot.lane.b32.xlu0 %v735, 96
        %v1520 = vpop.permute.xlu0 %1519
        %1521 = vrot.lane.b32.xlu0 %v736, 96
        %v1522 = vpop.permute.xlu0 %1521
        %1523 = vrot.lane.b32.xlu0 %v737, 96
        %v1524 = vpop.permute.xlu0 %1523
        %1525 = vrot.lane.b32.xlu0 %v738, 96
        %v1526 = vpop.permute.xlu0 %1525
        %1527 = vrot.lane.b32.xlu0 %v739, 96
        %v1528 = vpop.permute.xlu0 %1527
        %1529 = vrot.lane.b32.xlu0 %v740, 96
        %v1530 = vpop.permute.xlu0 %1529
        %1531 = vrot.lane.b32.xlu0 %v741, 96
        %v1532 = vpop.permute.xlu0 %1531
        %1533 = vrot.lane.b32.xlu0 %v742, 96
        %v1534 = vpop.permute.xlu0 %1533
        %1535 = vrot.lane.b32.xlu0 %v743, 96
        %v1536 = vpop.permute.xlu0 %1535
        %1537 = vrot.lane.b32.xlu0 %v744, 96
        %v1538 = vpop.permute.xlu0 %1537
        %1539 = vrot.lane.b32.xlu0 %v745, 96
        %v1540 = vpop.permute.xlu0 %1539
        %1541 = vrot.lane.b32.xlu0 %v746, 96
        %v1542 = vpop.permute.xlu0 %1541
        %1543 = vrot.lane.b32.xlu0 %v747, 96
        %v1544 = vpop.permute.xlu0 %1543
        %1545 = vrot.lane.b32.xlu0 %v748, 96
        %v1546 = vpop.permute.xlu0 %1545
        %1547 = vrot.lane.b32.xlu0 %v749, 96
        %v1548 = vpop.permute.xlu0 %1547
        %1549 = vrot.lane.b32.xlu0 %v750, 96
        %v1550 = vpop.permute.xlu0 %1549
        %1615 = vrot.lane.b32.xlu0 %v751, 112
        %v1616 = vpop.permute.xlu0 %1615
        %1617 = vrot.lane.b32.xlu0 %v752, 112
        %v1618 = vpop.permute.xlu0 %1617
        %1619 = vrot.lane.b32.xlu0 %v753, 112
        %v1620 = vpop.permute.xlu0 %1619
        %1621 = vrot.lane.b32.xlu0 %v754, 112
        %v1622 = vpop.permute.xlu0 %1621
        %1623 = vrot.lane.b32.xlu0 %v755, 112
        %v1624 = vpop.permute.xlu0 %1623
        %1625 = vrot.lane.b32.xlu0 %v756, 112
        %v1626 = vpop.permute.xlu0 %1625
        %1627 = vrot.lane.b32.xlu0 %v757, 112
        %v1628 = vpop.permute.xlu0 %1627
        %1629 = vrot.lane.b32.xlu0 %v758, 112
        %v1630 = vpop.permute.xlu0 %1629
        %1631 = vrot.lane.b32.xlu0 %v759, 112
        %v1632 = vpop.permute.xlu0 %1631
        %1633 = vrot.lane.b32.xlu0 %v760, 112
        %v1634 = vpop.permute.xlu0 %1633
        %1635 = vrot.lane.b32.xlu0 %v761, 112
        %v1636 = vpop.permute.xlu0 %1635
        %1637 = vrot.lane.b32.xlu0 %v762, 112
        %v1638 = vpop.permute.xlu0 %1637
        %1639 = vrot.lane.b32.xlu0 %v763, 112
        %v1640 = vpop.permute.xlu0 %1639
        %1641 = vrot.lane.b32.xlu0 %v764, 112
        %v1642 = vpop.permute.xlu0 %1641
        %1643 = vrot.lane.b32.xlu0 %v765, 112
        %v1644 = vpop.permute.xlu0 %1643
        %1645 = vrot.lane.b32.xlu0 %v766, 112
        %v1646 = vpop.permute.xlu0 %1645
        %1647 = vrot.lane.b32.xlu0 %v767, 112
        %v1648 = vpop.permute.xlu0 %1647
        %1649 = vrot.lane.b32.xlu0 %v768, 112
        %v1650 = vpop.permute.xlu0 %1649
        %1651 = vrot.lane.b32.xlu0 %v769, 112
        %v1652 = vpop.permute.xlu0 %1651
        %1653 = vrot.lane.b32.xlu0 %v770, 112
        %v1654 = vpop.permute.xlu0 %1653
        %1655 = vrot.lane.b32.xlu0 %v771, 112
        %v1656 = vpop.permute.xlu0 %1655
        %1657 = vrot.lane.b32.xlu0 %v772, 112
        %v1658 = vpop.permute.xlu0 %1657
        %1659 = vrot.lane.b32.xlu0 %v773, 112
        %v1660 = vpop.permute.xlu0 %1659
        %1661 = vrot.lane.b32.xlu0 %v774, 112
        %v1662 = vpop.permute.xlu0 %1661
        %1663 = vrot.lane.b32.xlu0 %v775, 112
        %v1664 = vpop.permute.xlu0 %1663
        %1665 = vrot.lane.b32.xlu0 %v776, 112
        %v1666 = vpop.permute.xlu0 %1665
        %1667 = vrot.lane.b32.xlu0 %v777, 112
        %v1668 = vpop.permute.xlu0 %1667
        %1669 = vrot.lane.b32.xlu0 %v778, 112
        %v1670 = vpop.permute.xlu0 %1669
        %1671 = vrot.lane.b32.xlu0 %v779, 112
        %v1672 = vpop.permute.xlu0 %1671
        %1673 = vrot.lane.b32.xlu0 %v780, 112
        %v1674 = vpop.permute.xlu0 %1673
        %1675 = vrot.lane.b32.xlu0 %v781, 112
        %v1676 = vpop.permute.xlu0 %1675
        %1677 = vrot.lane.b32.xlu0 %v782, 112
        %v1678 = vpop.permute.xlu0 %1677
        %v1711 = vsel %vm351, %v526, %v848
        %v1712 = vsel %vm351, %v527, %v850
        %v1713 = vsel %vm351, %v528, %v852
        %v1714 = vsel %vm351, %v529, %v854
        %v1715 = vsel %vm351, %v530, %v856
        %v1716 = vsel %vm351, %v531, %v858
        %v1717 = vsel %vm351, %v532, %v860
        %v1718 = vsel %vm351, %v533, %v862
        %v1719 = vsel %vm351, %v534, %v864
        %v1720 = vsel %vm351, %v535, %v866
        %v1721 = vsel %vm351, %v536, %v868
        %v1722 = vsel %vm351, %v537, %v870
        %v1723 = vsel %vm351, %v538, %v872
        %v1724 = vsel %vm351, %v539, %v874
        %v1725 = vsel %vm351, %v540, %v876
        %v1726 = vsel %vm351, %v541, %v878
        %v1727 = vsel %vm351, %v542, %v880
        %v1728 = vsel %vm351, %v543, %v882
        %v1729 = vsel %vm351, %v544, %v884
        %v1730 = vsel %vm351, %v545, %v886
        %v1731 = vsel %vm351, %v546, %v888
        %v1732 = vsel %vm351, %v547, %v890
        %v1733 = vsel %vm351, %v548, %v892
        %v1734 = vsel %vm351, %v549, %v894
        %v1735 = vsel %vm351, %v550, %v896
        %v1736 = vsel %vm351, %v551, %v898
        %v1737 = vsel %vm351, %v552, %v900
        %v1738 = vsel %vm351, %v553, %v902
        %v1739 = vsel %vm351, %v554, %v904
        %v1740 = vsel %vm351, %v555, %v906
        %v1741 = vsel %vm351, %v556, %v908
        %v1742 = vsel %vm351, %v557, %v910
        %vm1743 = vcmask 261120
        %v1744 = vsel %vm1743, %v1711, %v976
        %v1745 = vsel %vm1743, %v1712, %v978
        %v1746 = vsel %vm1743, %v1713, %v980
        %v1747 = vsel %vm1743, %v1714, %v982
        %v1748 = vsel %vm1743, %v1715, %v984
        %v1749 = vsel %vm1743, %v1716, %v986
        %v1750 = vsel %vm1743, %v1717, %v988
        %v1751 = vsel %vm1743, %v1718, %v990
        %v1752 = vsel %vm1743, %v1719, %v992
        %v1753 = vsel %vm1743, %v1720, %v994
        %v1754 = vsel %vm1743, %v1721, %v996
        %v1755 = vsel %vm1743, %v1722, %v998
        %v1756 = vsel %vm1743, %v1723, %v1000
        %v1757 = vsel %vm1743, %v1724, %v1002
        %v1758 = vsel %vm1743, %v1725, %v1004
        %v1759 = vsel %vm1743, %v1726, %v1006
        %v1760 = vsel %vm1743, %v1727, %v1008
        %v1761 = vsel %vm1743, %v1728, %v1010
        %v1762 = vsel %vm1743, %v1729, %v1012
        %v1763 = vsel %vm1743, %v1730, %v1014
        %v1764 = vsel %vm1743, %v1731, %v1016
        %v1765 = vsel %vm1743, %v1732, %v1018
        %v1766 = vsel %vm1743, %v1733, %v1020
        %v1767 = vsel %vm1743, %v1734, %v1022
        %v1768 = vsel %vm1743, %v1735, %v1024
        %v1769 = vsel %vm1743, %v1736, %v1026
        %v1770 = vsel %vm1743, %v1737, %v1028
        %v1771 = vsel %vm1743, %v1738, %v1030
        %v1772 = vsel %vm1743, %v1739, %v1032
        %v1773 = vsel %vm1743, %v1740, %v1034
        %v1774 = vsel %vm1743, %v1741, %v1036
        %v1775 = vsel %vm1743, %v1742, %v1038
        %vm1776 = vcmask 392192
        %v1777 = vsel %vm1776, %v1744, %v1104
        %v1778 = vsel %vm1776, %v1745, %v1106
        %v1779 = vsel %vm1776, %v1746, %v1108
        %v1780 = vsel %vm1776, %v1747, %v1110
        %v1781 = vsel %vm1776, %v1748, %v1112
        %v1782 = vsel %vm1776, %v1749, %v1114
        %v1783 = vsel %vm1776, %v1750, %v1116
        %v1784 = vsel %vm1776, %v1751, %v1118
        %v1785 = vsel %vm1776, %v1752, %v1120
        %v1786 = vsel %vm1776, %v1753, %v1122
        %v1787 = vsel %vm1776, %v1754, %v1124
        %v1788 = vsel %vm1776, %v1755, %v1126
        %v1789 = vsel %vm1776, %v1756, %v1128
        %v1790 = vsel %vm1776, %v1757, %v1130
        %v1791 = vsel %vm1776, %v1758, %v1132
        %v1792 = vsel %vm1776, %v1759, %v1134
        %v1793 = vsel %vm1776, %v1760, %v1136
        %v1794 = vsel %vm1776, %v1761, %v1138
        %v1795 = vsel %vm1776, %v1762, %v1140
        %v1796 = vsel %vm1776, %v1763, %v1142
        %v1797 = vsel %vm1776, %v1764, %v1144
        %v1798 = vsel %vm1776, %v1765, %v1146
        %v1799 = vsel %vm1776, %v1766, %v1148
        %v1800 = vsel %vm1776, %v1767, %v1150
        %v1801 = vsel %vm1776, %v1768, %v1152
        %v1802 = vsel %vm1776, %v1769, %v1154
        %v1803 = vsel %vm1776, %v1770, %v1156
        %v1804 = vsel %vm1776, %v1771, %v1158
        %v1805 = vsel %vm1776, %v1772, %v1160
        %v1806 = vsel %vm1776, %v1773, %v1162
        %v1807 = vsel %vm1776, %v1774, %v1164
        %v1808 = vsel %vm1776, %v1775, %v1166
        %vm1809 = vcmask 523264
        %v1810 = vsel %vm1809, %v1777, %v1232
        %v1811 = vsel %vm1809, %v1778, %v1234
        %v1812 = vsel %vm1809, %v1779, %v1236
        %v1813 = vsel %vm1809, %v1780, %v1238
        %v1814 = vsel %vm1809, %v1781, %v1240
        %v1815 = vsel %vm1809, %v1782, %v1242
        %v1816 = vsel %vm1809, %v1783, %v1244
        %v1817 = vsel %vm1809, %v1784, %v1246
        %v1818 = vsel %vm1809, %v1785, %v1248
        %v1819 = vsel %vm1809, %v1786, %v1250
        %v1820 = vsel %vm1809, %v1787, %v1252
        %v1821 = vsel %vm1809, %v1788, %v1254
        %v1822 = vsel %vm1809, %v1789, %v1256
        %v1823 = vsel %vm1809, %v1790, %v1258
        %v1824 = vsel %vm1809, %v1791, %v1260
        %v1825 = vsel %vm1809, %v1792, %v1262
        %v1826 = vsel %vm1809, %v1793, %v1264
        %v1827 = vsel %vm1809, %v1794, %v1266
        %v1828 = vsel %vm1809, %v1795, %v1268
        %v1829 = vsel %vm1809, %v1796, %v1270
        %v1830 = vsel %vm1809, %v1797, %v1272
        %v1831 = vsel %vm1809, %v1798, %v1274
        %v1832 = vsel %vm1809, %v1799, %v1276
        %v1833 = vsel %vm1809, %v1800, %v1278
        %v1834 = vsel %vm1809, %v1801, %v1280
        %v1835 = vsel %vm1809, %v1802, %v1282
        %v1836 = vsel %vm1809, %v1803, %v1284
        %v1837 = vsel %vm1809, %v1804, %v1286
        %v1838 = vsel %vm1809, %v1805, %v1288
        %v1839 = vsel %vm1809, %v1806, %v1290
        %v1840 = vsel %vm1809, %v1807, %v1292
        %v1841 = vsel %vm1809, %v1808, %v1294
        %vm1842 = vcmask 654336
        %v1843 = vsel %vm1842, %v1810, %v1360
        %v1844 = vsel %vm1842, %v1811, %v1362
        %v1845 = vsel %vm1842, %v1812, %v1364
        %v1846 = vsel %vm1842, %v1813, %v1366
        %v1847 = vsel %vm1842, %v1814, %v1368
        %v1848 = vsel %vm1842, %v1815, %v1370
        %v1849 = vsel %vm1842, %v1816, %v1372
        %v1850 = vsel %vm1842, %v1817, %v1374
        %v1851 = vsel %vm1842, %v1818, %v1376
        %v1852 = vsel %vm1842, %v1819, %v1378
        %v1853 = vsel %vm1842, %v1820, %v1380
        %v1854 = vsel %vm1842, %v1821, %v1382
        %v1855 = vsel %vm1842, %v1822, %v1384
        %v1856 = vsel %vm1842, %v1823, %v1386
        %v1857 = vsel %vm1842, %v1824, %v1388
        %v1858 = vsel %vm1842, %v1825, %v1390
        %v1859 = vsel %vm1842, %v1826, %v1392
        %v1860 = vsel %vm1842, %v1827, %v1394
        %v1861 = vsel %vm1842, %v1828, %v1396
        %v1862 = vsel %vm1842, %v1829, %v1398
        %v1863 = vsel %vm1842, %v1830, %v1400
        %v1864 = vsel %vm1842, %v1831, %v1402
        %v1865 = vsel %vm1842, %v1832, %v1404
        %v1866 = vsel %vm1842, %v1833, %v1406
        %v1867 = vsel %vm1842, %v1834, %v1408
        %v1868 = vsel %vm1842, %v1835, %v1410
        %v1869 = vsel %vm1842, %v1836, %v1412
        %v1870 = vsel %vm1842, %v1837, %v1414
        %v1871 = vsel %vm1842, %v1838, %v1416
        %v1872 = vsel %vm1842, %v1839, %v1418
        %v1873 = vsel %vm1842, %v1840, %v1420
        %v1874 = vsel %vm1842, %v1841, %v1422
        %vm1875 = vcmask 785408
        %v1876 = vsel %vm1875, %v1843, %v1488
        %v1877 = vsel %vm1875, %v1844, %v1490
        %v1878 = vsel %vm1875, %v1845, %v1492
        %v1879 = vsel %vm1875, %v1846, %v1494
        %v1880 = vsel %vm1875, %v1847, %v1496
        %v1881 = vsel %vm1875, %v1848, %v1498
        %v1882 = vsel %vm1875, %v1849, %v1500
        %v1883 = vsel %vm1875, %v1850, %v1502
        %v1884 = vsel %vm1875, %v1851, %v1504
        %v1885 = vsel %vm1875, %v1852, %v1506
        %v1886 = vsel %vm1875, %v1853, %v1508
        %v1887 = vsel %vm1875, %v1854, %v1510
        %v1888 = vsel %vm1875, %v1855, %v1512
        %v1889 = vsel %vm1875, %v1856, %v1514
        %v1890 = vsel %vm1875, %v1857, %v1516
        %v1891 = vsel %vm1875, %v1858, %v1518
        %v1892 = vsel %vm1875, %v1859, %v1520
        %v1893 = vsel %vm1875, %v1860, %v1522
        %v1894 = vsel %vm1875, %v1861, %v1524
        %v1895 = vsel %vm1875, %v1862, %v1526
        %v1896 = vsel %vm1875, %v1863, %v1528
        %v1897 = vsel %vm1875, %v1864, %v1530
        %v1898 = vsel %vm1875, %v1865, %v1532
        %v1899 = vsel %vm1875, %v1866, %v1534
        %v1900 = vsel %vm1875, %v1867, %v1536
        %v1901 = vsel %vm1875, %v1868, %v1538
        %v1902 = vsel %vm1875, %v1869, %v1540
        %v1903 = vsel %vm1875, %v1870, %v1542
        %v1904 = vsel %vm1875, %v1871, %v1544
        %v1905 = vsel %vm1875, %v1872, %v1546
        %v1906 = vsel %vm1875, %v1873, %v1548
        %v1907 = vsel %vm1875, %v1874, %v1550
        %vm1908 = vcmask 916480
        %v1909 = vsel %vm1908, %v1876, %v1616
        %v1910 = vsel %vm1908, %v1877, %v1618
        %v1911 = vsel %vm1908, %v1878, %v1620
        %v1912 = vsel %vm1908, %v1879, %v1622
        %v1913 = vsel %vm1908, %v1880, %v1624
        %v1914 = vsel %vm1908, %v1881, %v1626
        %v1915 = vsel %vm1908, %v1882, %v1628
        %v1916 = vsel %vm1908, %v1883, %v1630
        %v1917 = vsel %vm1908, %v1884, %v1632
        %v1918 = vsel %vm1908, %v1885, %v1634
        %v1919 = vsel %vm1908, %v1886, %v1636
        %v1920 = vsel %vm1908, %v1887, %v1638
        %v1921 = vsel %vm1908, %v1888, %v1640
        %v1922 = vsel %vm1908, %v1889, %v1642
        %v1923 = vsel %vm1908, %v1890, %v1644
        %v1924 = vsel %vm1908, %v1891, %v1646
        %v1925 = vsel %vm1908, %v1892, %v1648
        %v1926 = vsel %vm1908, %v1893, %v1650
        %v1927 = vsel %vm1908, %v1894, %v1652
        %v1928 = vsel %vm1908, %v1895, %v1654
        %v1929 = vsel %vm1908, %v1896, %v1656
        %v1930 = vsel %vm1908, %v1897, %v1658
        %v1931 = vsel %vm1908, %v1898, %v1660
        %v1932 = vsel %vm1908, %v1899, %v1662
        %v1933 = vsel %vm1908, %v1900, %v1664
        %v1934 = vsel %vm1908, %v1901, %v1666
        %v1935 = vsel %vm1908, %v1902, %v1668
        %v1936 = vsel %vm1908, %v1903, %v1670
        %v1937 = vsel %vm1908, %v1904, %v1672
        %v1938 = vsel %vm1908, %v1905, %v1674
        %v1939 = vsel %vm1908, %v1906, %v1676
        %v1940 = vsel %vm1908, %v1907, %v1678
        %v1941 = vld [vmem:[%s1] sm:$0xff]
        %v1942 = vld [vmem:[%s1 + $0x8] sm:$0xff]
        %v1943 = vld [vmem:[%s1 + $0x10] sm:$0xff]
        %v1944 = vld [vmem:[%s1 + $0x18] sm:$0xff]
        %v1945 = vld [vmem:[%s1 + $0x20] sm:$0xff]
        %v1946 = vld [vmem:[%s1 + $0x28] sm:$0xff]
        %v1947 = vld [vmem:[%s1 + $0x30] sm:$0xff]
        %v1948 = vld [vmem:[%s1 + $0x38] sm:$0xff]
        %v1949 = vld [vmem:[%s1 + $0x40] sm:$0xff]
        %v1950 = vld [vmem:[%s1 + $0x48] sm:$0xff]
        %v1951 = vld [vmem:[%s1 + $0x50] sm:$0xff]
        %v1952 = vld [vmem:[%s1 + $0x58] sm:$0xff]
        %v1953 = vld [vmem:[%s1 + $0x60] sm:$0xff]
        %v1954 = vld [vmem:[%s1 + $0x68] sm:$0xff]
        %v1955 = vld [vmem:[%s1 + $0x70] sm:$0xff]
        %v1956 = vld [vmem:[%s1 + $0x78] sm:$0xff]
        %v1957 = vld [vmem:[%s1 + $0x80] sm:$0xff]
        %v1958 = vld [vmem:[%s1 + $0x88] sm:$0xff]
        %v1960 = vsel %vm351, %v783, 0
        %v1963 = vsel %vm351, %v784, 0
        %v1966 = vsel %vm351, %v785, 0
        %v1969 = vsel %vm351, %v786, 0
        %v1972 = vsel %vm351, %v787, 0
        %v1975 = vsel %vm351, %v788, 0
        %v1978 = vsel %vm351, %v789, 0
        %v1981 = vsel %vm351, %v790, 0
        %v1984 = vsel %vm351, %v791, 0
        %v1987 = vsel %vm351, %v792, 0
        %v1990 = vsel %vm351, %v793, 0
        %v1993 = vsel %vm351, %v794, 0
        %v1996 = vsel %vm351, %v795, 0
        %v1999 = vsel %vm351, %v796, 0
        %v2002 = vsel %vm351, %v797, 0
        %v2005 = vsel %vm351, %v798, 0
        %v2008 = vsel %vm351, %v799, 0
        %v2011 = vsel %vm351, %v800, 0
        %v2014 = vsel %vm351, %v801, 0
        %v2017 = vsel %vm351, %v802, 0
        %v2020 = vsel %vm351, %v803, 0
        %v2023 = vsel %vm351, %v804, 0
        %v2026 = vsel %vm351, %v805, 0
        %v2029 = vsel %vm351, %v806, 0
        %v2032 = vsel %vm351, %v807, 0
        %v2035 = vsel %vm351, %v808, 0
        %v2038 = vsel %vm351, %v809, 0
        %v2041 = vsel %vm351, %v810, 0
        %v2044 = vsel %vm351, %v811, 0
        %v2047 = vsel %vm351, %v812, 0
        %v2050 = vsel %vm351, %v813, 0
        %v2053 = vsel %vm351, %v814, 0
        %2055 = vmatprep.subr.mxu0 0.0
        %2056 = vmatpush1.msra.mxu0 %v1941
        %2057 = vmatprep.subr.mxu0 0.0
        %2058 = vmatpush1.msra.mxu0 %v1942
        %2059 = vmatprep.subr.mxu0 0.0
        %2060 = vmatpush1.msra.mxu0 %v1943
        %2061 = vmatprep.subr.mxu0 0.0
        %2062 = vmatpush1.msra.mxu0 %v1944
        %2063 = vmatprep.subr.mxu0 0.0
        %2064 = vmatpush1.msra.mxu0 %v1945
        %2065 = vmatprep.subr.mxu0 0.0
        %2066 = vmatpush1.msra.mxu0 %v1946
        %2067 = vmatprep.subr.mxu0 0.0
        %2068 = vmatpush1.msra.mxu0 %v1947
        %2069 = vmatprep.subr.mxu0 0.0
        %2070 = vmatpush1.msra.mxu0 %v1948
        %2071 = vmatprep.subr.mxu0 0.0
        %2072 = vmatpush1.msra.mxu0 %v1949
        %2073 = vmatprep.subr.mxu0 0.0
        %2074 = vmatpush1.msra.mxu0 %v1950
        %2075 = vmatprep.subr.mxu0 0.0
        %2076 = vmatpush1.msra.mxu0 %v1951
        %2077 = vmatprep.subr.mxu0 0.0
        %2078 = vmatpush1.msra.mxu0 %v1952
        %2079 = vmatprep.subr.mxu0 0.0
        %2080 = vmatpush1.msra.mxu0 %v1953
        %2081 = vmatprep.subr.mxu0 0.0
        %2082 = vmatpush1.msra.mxu0 %v1954
        %2083 = vmatprep.subr.mxu0 0.0
        %2084 = vmatpush1.msra.mxu0 %v1955
        %2085 = vmatprep.subr.mxu0 0.0
        %2086 = vmatpush1.msra.mxu0 %v1956
        %2087 = vmatprep.subr.mxu0 0.0
        %2088 = vmatpush1.msra.mxu0 %v1957
        %2089 = vmatprep.subr.mxu0 0.0
        %2090 = vmatpush1.msra.mxu0 %v1958
        %2091 = vmatprep.subr.mxu0 0.0
        %2092 = vmatpush1.msra.mxu0 0.0
        %2093 = vmatprep.subr.mxu0 0.0
        %2094 = vmatpush1.msra.mxu0 0.0
        %2095 = vmatprep.subr.mxu0 0.0
        %2096 = vmatpush1.msra.mxu0 0.0
        %2097 = vmatprep.subr.mxu0 0.0
        %2098 = vmatpush1.msra.mxu0 0.0
        %2099 = vmatprep.subr.mxu0 0.0
        %2100 = vmatpush1.msra.mxu0 0.0
        %2101 = vmatprep.subr.mxu0 0.0
        %2102 = vmatpush1.msra.mxu0 0.0
        %2103 = vmatprep.subr.mxu0 0.0
        %2104 = vmatpush1.msra.mxu0 0.0
        %2105 = vmatprep.subr.mxu0 0.0
        %2106 = vmatpush1.msra.mxu0 0.0
        %2107 = vmatprep.subr.mxu0 0.0
        %2108 = vmatpush1.msra.mxu0 0.0
        %2109 = vmatprep.subr.mxu0 0.0
        %2110 = vmatpush1.msra.mxu0 0.0
        %2111 = vmatprep.subr.mxu0 0.0
        %2112 = vmatpush1.msra.mxu0 0.0
        %2113 = vmatprep.subr.mxu0 0.0
        %2114 = vmatpush1.msra.mxu0 0.0
        %2115 = vmatprep.subr.mxu0 0.0
        %2116 = vmatpush1.msra.mxu0 0.0
        %2117 = vmatprep.subr.mxu0 0.0
        %2118 = vmatpush1.msra.mxu0 0.0
        %2119 = vmatprep.mubr.f32.mxu0 %v1960
        %2120 = vmatmul.mubr.f32.gmra.mrb[0].mxu0 %v1909
        %v2121 = vpop.f32.mrb[0].mxu0
        %v2122 = vadd.f32 0.0, %v2121
        %v2123 = vpop.f32.mrb[0].mxu0
        %2124 = vmatprep.mubr.f32.mxu0 %v1963
        %2125 = vmatmul.mubr.f32.gmra.mrb[0].mxu0 %v1910
        %v2126 = vpop.f32.mrb[0].mxu0
        %v2127 = vadd.f32 0.0, %v2126
        %v2128 = vpop.f32.mrb[0].mxu0
        %2129 = vmatprep.mubr.f32.mxu0 %v1966
        %2130 = vmatmul.mubr.f32.gmra.mrb[0].mxu0 %v1911
        %v2131 = vpop.f32.mrb[0].mxu0
        %v2132 = vadd.f32 0.0, %v2131
        %v2133 = vpop.f32.mrb[0].mxu0
        %2134 = vmatprep.mubr.f32.mxu0 %v1969
        %2135 = vmatmul.mubr.f32.gmra.mrb[0].mxu0 %v1912
        %v2136 = vpop.f32.mrb[0].mxu0
        %v2137 = vadd.f32 0.0, %v2136
        %v2138 = vpop.f32.mrb[0].mxu0
        %2139 = vmatprep.mubr.f32.mxu0 %v1972
        %2140 = vmatmul.mubr.f32.gmra.mrb[0].mxu0 %v1913
        %v2141 = vpop.f32.mrb[0].mxu0
        %v2142 = vadd.f32 0.0, %v2141
        %v2143 = vpop.f32.mrb[0].mxu0
        %2144 = vmatprep.mubr.f32.mxu0 %v1975
        %2145 = vmatmul.mubr.f32.gmra.mrb[0].mxu0 %v1914
        %v2146 = vpop.f32.mrb[0].mxu0
        %v2147 = vadd.f32 0.0, %v2146
        %v2148 = vpop.f32.mrb[0].mxu0
        %2149 = vmatprep.mubr.f32.mxu0 %v1978
        %2150 = vmatmul.mubr.f32.gmra.mrb[0].mxu0 %v1915
        %v2151 = vpop.f32.mrb[0].mxu0
        %v2152 = vadd.f32 0.0, %v2151
        %v2153 = vpop.f32.mrb[0].mxu0
        %2154 = vmatprep.mubr.f32.mxu0 %v1981
        %2155 = vmatmul.mubr.f32.gmra.mrb[0].mxu0 %v1916
        %v2156 = vpop.f32.mrb[0].mxu0
        %v2157 = vadd.f32 0.0, %v2156
        %v2158 = vpop.f32.mrb[0].mxu0
        %2159 = vmatprep.mubr.f32.mxu0 %v1984
        %2160 = vmatmul.mubr.f32.gmra.mrb[0].mxu0 %v1917
        %v2161 = vpop.f32.mrb[0].mxu0
        %v2162 = vadd.f32 0.0, %v2161
        %v2163 = vpop.f32.mrb[0].mxu0
        %2164 = vmatprep.mubr.f32.mxu0 %v1987
        %2165 = vmatmul.mubr.f32.gmra.mrb[0].mxu0 %v1918
        %v2166 = vpop.f32.mrb[0].mxu0
        %v2167 = vadd.f32 0.0, %v2166
        %v2168 = vpop.f32.mrb[0].mxu0
        %2169 = vmatprep.mubr.f32.mxu0 %v1990
        %2170 = vmatmul.mubr.f32.gmra.mrb[0].mxu0 %v1919
        %v2171 = vpop.f32.mrb[0].mxu0
        %v2172 = vadd.f32 0.0, %v2171
        %v2173 = vpop.f32.mrb[0].mxu0
        %2174 = vmatprep.mubr.f32.mxu0 %v1993
        %2175 = vmatmul.mubr.f32.gmra.mrb[0].mxu0 %v1920
        %v2176 = vpop.f32.mrb[0].mxu0
        %v2177 = vadd.f32 0.0, %v2176
        %v2178 = vpop.f32.mrb[0].mxu0
        %2179 = vmatprep.mubr.f32.mxu0 %v1996
        %2180 = vmatmul.mubr.f32.gmra.mrb[0].mxu0 %v1921
        %v2181 = vpop.f32.mrb[0].mxu0
        %v2182 = vadd.f32 0.0, %v2181
        %v2183 = vpop.f32.mrb[0].mxu0
        %2184 = vmatprep.mubr.f32.mxu0 %v1999
        %2185 = vmatmul.mubr.f32.gmra.mrb[0].mxu0 %v1922
        %v2186 = vpop.f32.mrb[0].mxu0
        %v2187 = vadd.f32 0.0, %v2186
        %v2188 = vpop.f32.mrb[0].mxu0
        %2189 = vmatprep.mubr.f32.mxu0 %v2002
        %2190 = vmatmul.mubr.f32.gmra.mrb[0].mxu0 %v1923
        %v2191 = vpop.f32.mrb[0].mxu0
        %v2192 = vadd.f32 0.0, %v2191
        %v2193 = vpop.f32.mrb[0].mxu0
        %2194 = vmatprep.mubr.f32.mxu0 %v2005
        %2195 = vmatmul.mubr.f32.gmra.mrb[0].mxu0 %v1924
        %v2196 = vpop.f32.mrb[0].mxu0
        %v2197 = vadd.f32 0.0, %v2196
        %v2198 = vpop.f32.mrb[0].mxu0
        %2199 = vmatprep.mubr.f32.mxu0 %v2008
        %2200 = vmatmul.mubr.f32.gmra.mrb[0].mxu0 %v1925
        %v2201 = vpop.f32.mrb[0].mxu0
        %v2202 = vadd.f32 0.0, %v2201
        %v2203 = vpop.f32.mrb[0].mxu0
        %2204 = vmatprep.mubr.f32.mxu0 %v2011
        %2205 = vmatmul.mubr.f32.gmra.mrb[0].mxu0 %v1926
        %v2206 = vpop.f32.mrb[0].mxu0
        %v2207 = vadd.f32 0.0, %v2206
        %v2208 = vpop.f32.mrb[0].mxu0
        %2209 = vmatprep.mubr.f32.mxu0 %v2014
        %2210 = vmatmul.mubr.f32.gmra.mrb[0].mxu0 %v1927
        %v2211 = vpop.f32.mrb[0].mxu0
        %v2212 = vadd.f32 0.0, %v2211
        %v2213 = vpop.f32.mrb[0].mxu0
        %2214 = vmatprep.mubr.f32.mxu0 %v2017
        %2215 = vmatmul.mubr.f32.gmra.mrb[0].mxu0 %v1928
        %v2216 = vpop.f32.mrb[0].mxu0
        %v2217 = vadd.f32 0.0, %v2216
        %v2218 = vpop.f32.mrb[0].mxu0
        %2219 = vmatprep.mubr.f32.mxu0 %v2020
        %2220 = vmatmul.mubr.f32.gmra.mrb[0].mxu0 %v1929
        %v2221 = vpop.f32.mrb[0].mxu0
        %v2222 = vadd.f32 0.0, %v2221
        %v2223 = vpop.f32.mrb[0].mxu0
        %2224 = vmatprep.mubr.f32.mxu0 %v2023
        %2225 = vmatmul.mubr.f32.gmra.mrb[0].mxu0 %v1930
        %v2226 = vpop.f32.mrb[0].mxu0
        %v2227 = vadd.f32 0.0, %v2226
        %v2228 = vpop.f32.mrb[0].mxu0
        %2229 = vmatprep.mubr.f32.mxu0 %v2026
        %2230 = vmatmul.mubr.f32.gmra.mrb[0].mxu0 %v1931
        %v2231 = vpop.f32.mrb[0].mxu0
        %v2232 = vadd.f32 0.0, %v2231
        %v2233 = vpop.f32.mrb[0].mxu0
        %2234 = vmatprep.mubr.f32.mxu0 %v2029
        %2235 = vmatmul.mubr.f32.gmra.mrb[0].mxu0 %v1932
        %v2236 = vpop.f32.mrb[0].mxu0
        %v2237 = vadd.f32 0.0, %v2236
        %v2238 = vpop.f32.mrb[0].mxu0
        %2239 = vmatprep.mubr.f32.mxu0 %v2032
        %2240 = vmatmul.mubr.f32.gmra.mrb[0].mxu0 %v1933
        %v2241 = vpop.f32.mrb[0].mxu0
        %v2242 = vadd.f32 0.0, %v2241
        %v2243 = vpop.f32.mrb[0].mxu0
        %2244 = vmatprep.mubr.f32.mxu0 %v2035
        %2245 = vmatmul.mubr.f32.gmra.mrb[0].mxu0 %v1934
        %v2246 = vpop.f32.mrb[0].mxu0
        %v2247 = vadd.f32 0.0, %v2246
        %v2248 = vpop.f32.mrb[0].mxu0
        %2249 = vmatprep.mubr.f32.mxu0 %v2038
        %2250 = vmatmul.mubr.f32.gmra.mrb[0].mxu0 %v1935
        %v2251 = vpop.f32.mrb[0].mxu0
        %v2252 = vadd.f32 0.0, %v2251
        %v2253 = vpop.f32.mrb[0].mxu0
        %2254 = vmatprep.mubr.f32.mxu0 %v2041
        %2255 = vmatmul.mubr.f32.gmra.mrb[0].mxu0 %v1936
        %v2256 = vpop.f32.mrb[0].mxu0
        %v2257 = vadd.f32 0.0, %v2256
        %v2258 = vpop.f32.mrb[0].mxu0
        %2259 = vmatprep.mubr.f32.mxu0 %v2044
        %2260 = vmatmul.mubr.f32.gmra.mrb[0].mxu0 %v1937
        %v2261 = vpop.f32.mrb[0].mxu0
        %v2262 = vadd.f32 0.0, %v2261
        %v2263 = vpop.f32.mrb[0].mxu0
        %2264 = vmatprep.mubr.f32.mxu0 %v2047
        %2265 = vmatmul.mubr.f32.gmra.mrb[0].mxu0 %v1938
        %v2266 = vpop.f32.mrb[0].mxu0
        %v2267 = vadd.f32 0.0, %v2266
        %v2268 = vpop.f32.mrb[0].mxu0
        %2269 = vmatprep.mubr.f32.mxu0 %v2050
        %2270 = vmatmul.mubr.f32.gmra.mrb[0].mxu0 %v1939
        %v2271 = vpop.f32.mrb[0].mxu0
        %v2272 = vadd.f32 0.0, %v2271
        %v2273 = vpop.f32.mrb[0].mxu0
        %2274 = vmatprep.mubr.f32.mxu0 %v2053
        %2275 = vmatmul.mubr.f32.gmra.mrb[0].mxu0 %v1940
        %v2276 = vpop.f32.mrb[0].mxu0
        %v2277 = vadd.f32 0.0, %v2276
        %v2278 = vpop.f32.mrb[0].mxu0
        %2279 = vdwg.mxu0
        %v2280 = vld [vmem:[%s2] sm:$0x1]
        %v2282 = vlaneseq
        %v2283 = vshrl.u32 %v2282, 7
        %v2284 = vsub.s32 0, %v2283
        %v2285 = vrot.slane %v2280, %v2284
        %v2287 = vmul.f32 %v2122, %v2285
        %v2288 = vmul.f32 %v2127, %v2285
        %v2289 = vmul.f32 %v2132, %v2285
        %v2290 = vmul.f32 %v2137, %v2285
        %v2291 = vmul.f32 %v2142, %v2285
        %v2292 = vmul.f32 %v2147, %v2285
        %v2293 = vmul.f32 %v2152, %v2285
        %v2294 = vmul.f32 %v2157, %v2285
        %v2295 = vmul.f32 %v2162, %v2285
        %v2296 = vmul.f32 %v2167, %v2285
        %v2297 = vmul.f32 %v2172, %v2285
        %v2298 = vmul.f32 %v2177, %v2285
        %v2299 = vmul.f32 %v2182, %v2285
        %v2300 = vmul.f32 %v2187, %v2285
        %v2301 = vmul.f32 %v2192, %v2285
        %v2302 = vmul.f32 %v2197, %v2285
        %v2303 = vmul.f32 %v2202, %v2285
        %v2304 = vmul.f32 %v2207, %v2285
        %v2305 = vmul.f32 %v2212, %v2285
        %v2306 = vmul.f32 %v2217, %v2285
        %v2307 = vmul.f32 %v2222, %v2285
        %v2308 = vmul.f32 %v2227, %v2285
        %v2309 = vmul.f32 %v2232, %v2285
        %v2310 = vmul.f32 %v2237, %v2285
        %v2311 = vmul.f32 %v2242, %v2285
        %v2312 = vmul.f32 %v2247, %v2285
        %v2313 = vmul.f32 %v2252, %v2285
        %v2314 = vmul.f32 %v2257, %v2285
        %v2315 = vmul.f32 %v2262, %v2285
        %v2316 = vmul.f32 %v2267, %v2285
        %v2317 = vmul.f32 %v2272, %v2285
        %v2318 = vmul.f32 %v2277, %v2285
        %v2319 = vld [vmem:[%s3] sm:$0x1]
        %v2321 = vlaneseq
        %v2322 = vshrl.u32 %v2321, 7
        %v2323 = vsub.s32 0, %v2322
        %v2324 = vrot.slane %v2319, %v2323
        %v2326 = vadd.f32 %v2287, %v2324
        %v2327 = vadd.f32 %v2288, %v2324
        %v2328 = vadd.f32 %v2289, %v2324
        %v2329 = vadd.f32 %v2290, %v2324
        %v2330 = vadd.f32 %v2291, %v2324
        %v2331 = vadd.f32 %v2292, %v2324
        %v2332 = vadd.f32 %v2293, %v2324
        %v2333 = vadd.f32 %v2294, %v2324
        %v2334 = vadd.f32 %v2295, %v2324
        %v2335 = vadd.f32 %v2296, %v2324
        %v2336 = vadd.f32 %v2297, %v2324
        %v2337 = vadd.f32 %v2298, %v2324
        %v2338 = vadd.f32 %v2299, %v2324
        %v2339 = vadd.f32 %v2300, %v2324
        %v2340 = vadd.f32 %v2301, %v2324
        %v2341 = vadd.f32 %v2302, %v2324
        %v2342 = vadd.f32 %v2303, %v2324
        %v2343 = vadd.f32 %v2304, %v2324
        %v2344 = vadd.f32 %v2305, %v2324
        %v2345 = vadd.f32 %v2306, %v2324
        %v2346 = vadd.f32 %v2307, %v2324
        %v2347 = vadd.f32 %v2308, %v2324
        %v2348 = vadd.f32 %v2309, %v2324
        %v2349 = vadd.f32 %v2310, %v2324
        %v2350 = vadd.f32 %v2311, %v2324
        %v2351 = vadd.f32 %v2312, %v2324
        %v2352 = vadd.f32 %v2313, %v2324
        %v2353 = vadd.f32 %v2314, %v2324
        %v2354 = vadd.f32 %v2315, %v2324
        %v2355 = vadd.f32 %v2316, %v2324
        %v2356 = vadd.f32 %v2317, %v2324
        %v2357 = vadd.f32 %v2318, %v2324
        %v2358 = vmax.f32 %v2326, 0.0
        %v2359 = vmax.f32 %v2327, 0.0
        %v2360 = vmax.f32 %v2328, 0.0
        %v2361 = vmax.f32 %v2329, 0.0
        %v2362 = vmax.f32 %v2330, 0.0
        %v2363 = vmax.f32 %v2331, 0.0
        %v2364 = vmax.f32 %v2332, 0.0
        %v2365 = vmax.f32 %v2333, 0.0
        %v2366 = vmax.f32 %v2334, 0.0
        %v2367 = vmax.f32 %v2335, 0.0
        %v2368 = vmax.f32 %v2336, 0.0
        %v2369 = vmax.f32 %v2337, 0.0
        %v2370 = vmax.f32 %v2338, 0.0
        %v2371 = vmax.f32 %v2339, 0.0
        %v2372 = vmax.f32 %v2340, 0.0
        %v2373 = vmax.f32 %v2341, 0.0
        %v2374 = vmax.f32 %v2342, 0.0
        %v2375 = vmax.f32 %v2343, 0.0
        %v2376 = vmax.f32 %v2344, 0.0
        %v2377 = vmax.f32 %v2345, 0.0
        %v2378 = vmax.f32 %v2346, 0.0
        %v2379 = vmax.f32 %v2347, 0.0
        %v2380 = vmax.f32 %v2348, 0.0
        %v2381 = vmax.f32 %v2349, 0.0
        %v2382 = vmax.f32 %v2350, 0.0
        %v2383 = vmax.f32 %v2351, 0.0
        %v2384 = vmax.f32 %v2352, 0.0
        %v2385 = vmax.f32 %v2353, 0.0
        %v2386 = vmax.f32 %v2354, 0.0
        %v2387 = vmax.f32 %v2355, 0.0
        %v2388 = vmax.f32 %v2356, 0.0
        %v2389 = vmax.f32 %v2357, 0.0
        %s2390 = scalar_lea.vmem [#allocation3], 24
        %2391 = vst.msk [vmem:[%s2390 + $0x1] sm:$0xff] %vm351, %v2358
        %2392 = vst.msk [vmem:[%s2390 + $0x9] sm:$0xff] %vm351, %v2359
        %2393 = vst.msk [vmem:[%s2390 + $0x19] sm:$0xff] %vm351, %v2360
        %2394 = vst.msk [vmem:[%s2390 + $0x21] sm:$0xff] %vm351, %v2361
        %2395 = vst.msk [vmem:[%s2390 + $0x31] sm:$0xff] %vm351, %v2362
        %2396 = vst.msk [vmem:[%s2390 + $0x39] sm:$0xff] %vm351, %v2363
        %2397 = vst.msk [vmem:[%s2390 + $0x49] sm:$0xff] %vm351, %v2364
        %2398 = vst.msk [vmem:[%s2390 + $0x51] sm:$0xff] %vm351, %v2365
        %2399 = vst.msk [vmem:[%s2390 + $0x61] sm:$0xff] %vm351, %v2366
        %2400 = vst.msk [vmem:[%s2390 + $0x69] sm:$0xff] %vm351, %v2367
        %2401 = vst.msk [vmem:[%s2390 + $0x79] sm:$0xff] %vm351, %v2368
        %2402 = vst.msk [vmem:[%s2390 + $0x81] sm:$0xff] %vm351, %v2369
        %2403 = vst.msk [vmem:[%s2390 + $0x91] sm:$0xff] %vm351, %v2370
        %2404 = vst.msk [vmem:[%s2390 + $0x99] sm:$0xff] %vm351, %v2371
        %2405 = vst.msk [vmem:[%s2390 + $0xa9] sm:$0xff] %vm351, %v2372
        %2406 = vst.msk [vmem:[%s2390 + $0xb1] sm:$0xff] %vm351, %v2373
        %2407 = vst.msk [vmem:[%s2390 + $0xc1] sm:$0xff] %vm351, %v2374
        %2408 = vst.msk [vmem:[%s2390 + $0xc9] sm:$0xff] %vm351, %v2375
        %2409 = vst.msk [vmem:[%s2390 + $0xd9] sm:$0xff] %vm351, %v2376
        %2410 = vst.msk [vmem:[%s2390 + $0xe1] sm:$0xff] %vm351, %v2377
        %2411 = vst.msk [vmem:[%s2390 + $0xf1] sm:$0xff] %vm351, %v2378
        %2412 = vst.msk [vmem:[%s2390 + $0xf9] sm:$0xff] %vm351, %v2379
        %2413 = vst.msk [vmem:[%s2390 + $0x109] sm:$0xff] %vm351, %v2380
        %2414 = vst.msk [vmem:[%s2390 + $0x111] sm:$0xff] %vm351, %v2381
        %2415 = vst.msk [vmem:[%s2390 + $0x121] sm:$0xff] %vm351, %v2382
        %2416 = vst.msk [vmem:[%s2390 + $0x129] sm:$0xff] %vm351, %v2383
        %2417 = vst.msk [vmem:[%s2390 + $0x139] sm:$0xff] %vm351, %v2384
        %2418 = vst.msk [vmem:[%s2390 + $0x141] sm:$0xff] %vm351, %v2385
        %2419 = vst.msk [vmem:[%s2390 + $0x151] sm:$0xff] %vm351, %v2386
        %2420 = vst.msk [vmem:[%s2390 + $0x159] sm:$0xff] %vm351, %v2387
        %2421 = vst.msk [vmem:[%s2390 + $0x169] sm:$0xff] %vm351, %v2388
        %2422 = vst.msk [vmem:[%s2390 + $0x171] sm:$0xff] %vm351, %v2389
        %v2423 = vld [vmem:[#allocation3] sm:$0xff]
        %v2424 = vld [vmem:[#allocation3 + $0x8] sm:$0xff]
        %v2425 = vld [vmem:[#allocation3 + $0x18] sm:$0xff]
        %v2426 = vld [vmem:[#allocation3 + $0x20] sm:$0xff]
        %v2427 = vld [vmem:[#allocation3 + $0x30] sm:$0xff]
        %v2428 = vld [vmem:[#allocation3 + $0x38] sm:$0xff]
        %v2429 = vld [vmem:[#allocation3 + $0x48] sm:$0xff]
        %v2430 = vld [vmem:[#allocation3 + $0x50] sm:$0xff]
        %v2431 = vld [vmem:[#allocation3 + $0x60] sm:$0xff]
        %v2432 = vld [vmem:[#allocation3 + $0x68] sm:$0xff]
        %v2433 = vld [vmem:[#allocation3 + $0x78] sm:$0xff]
        %v2434 = vld [vmem:[#allocation3 + $0x80] sm:$0xff]
        %v2435 = vld [vmem:[#allocation3 + $0x90] sm:$0xff]
        %v2436 = vld [vmem:[#allocation3 + $0x98] sm:$0xff]
        %v2437 = vld [vmem:[#allocation3 + $0xa8] sm:$0xff]
        %v2438 = vld [vmem:[#allocation3 + $0xb0] sm:$0xff]
        %v2439 = vld [vmem:[#allocation3 + $0xc0] sm:$0xff]
        %v2440 = vld [vmem:[#allocation3 + $0xc8] sm:$0xff]
        %v2441 = vld [vmem:[#allocation3 + $0xd8] sm:$0xff]
        %v2442 = vld [vmem:[#allocation3 + $0xe0] sm:$0xff]
        %v2443 = vld [vmem:[#allocation3 + $0xf0] sm:$0xff]
        %v2444 = vld [vmem:[#allocation3 + $0xf8] sm:$0xff]
        %v2445 = vld [vmem:[#allocation3 + $0x108] sm:$0xff]
        %v2446 = vld [vmem:[#allocation3 + $0x110] sm:$0xff]
        %v2447 = vld [vmem:[#allocation3 + $0x120] sm:$0xff]
        %v2448 = vld [vmem:[#allocation3 + $0x128] sm:$0xff]
        %v2449 = vld [vmem:[#allocation3 + $0x138] sm:$0xff]
        %v2450 = vld [vmem:[#allocation3 + $0x140] sm:$0xff]
        %v2451 = vld [vmem:[#allocation3 + $0x150] sm:$0xff]
        %v2452 = vld [vmem:[#allocation3 + $0x158] sm:$0xff]
        %v2453 = vld [vmem:[#allocation3 + $0x168] sm:$0xff]
        %v2454 = vld [vmem:[#allocation3 + $0x170] sm:$0xff]
        %v2455 = vld [vmem:[#allocation3 + $0x1] sm:$0xff]
        %v2456 = vld [vmem:[#allocation3 + $0x9] sm:$0xff]
        %v2457 = vld [vmem:[#allocation3 + $0x19] sm:$0xff]
        %v2458 = vld [vmem:[#allocation3 + $0x21] sm:$0xff]
        %v2459 = vld [vmem:[#allocation3 + $0x31] sm:$0xff]
        %v2460 = vld [vmem:[#allocation3 + $0x39] sm:$0xff]
        %v2461 = vld [vmem:[#allocation3 + $0x49] sm:$0xff]
        %v2462 = vld [vmem:[#allocation3 + $0x51] sm:$0xff]
        %v2463 = vld [vmem:[#allocation3 + $0x61] sm:$0xff]
        %v2464 = vld [vmem:[#allocation3 + $0x69] sm:$0xff]
        %v2465 = vld [vmem:[#allocation3 + $0x79] sm:$0xff]
        %v2466 = vld [vmem:[#allocation3 + $0x81] sm:$0xff]
        %v2467 = vld [vmem:[#allocation3 + $0x91] sm:$0xff]
        %v2468 = vld [vmem:[#allocation3 + $0x99] sm:$0xff]
        %v2469 = vld [vmem:[#allocation3 + $0xa9] sm:$0xff]
        %v2470 = vld [vmem:[#allocation3 + $0xb1] sm:$0xff]
        %v2471 = vld [vmem:[#allocation3 + $0xc1] sm:$0xff]
        %v2472 = vld [vmem:[#allocation3 + $0xc9] sm:$0xff]
        %v2473 = vld [vmem:[#allocation3 + $0xd9] sm:$0xff]
        %v2474 = vld [vmem:[#allocation3 + $0xe1] sm:$0xff]
        %v2475 = vld [vmem:[#allocation3 + $0xf1] sm:$0xff]
        %v2476 = vld [vmem:[#allocation3 + $0xf9] sm:$0xff]
        %v2477 = vld [vmem:[#allocation3 + $0x109] sm:$0xff]
        %v2478 = vld [vmem:[#allocation3 + $0x111] sm:$0xff]
        %v2479 = vld [vmem:[#allocation3 + $0x121] sm:$0xff]
        %v2480 = vld [vmem:[#allocation3 + $0x129] sm:$0xff]
        %v2481 = vld [vmem:[#allocation3 + $0x139] sm:$0xff]
        %v2482 = vld [vmem:[#allocation3 + $0x141] sm:$0xff]
        %v2483 = vld [vmem:[#allocation3 + $0x151] sm:$0xff]
        %v2484 = vld [vmem:[#allocation3 + $0x159] sm:$0xff]
        %v2485 = vld [vmem:[#allocation3 + $0x169] sm:$0xff]
        %v2486 = vld [vmem:[#allocation3 + $0x171] sm:$0xff]
        %v2487 = vld [vmem:[#allocation3 + $0x2] sm:$0xff]
        %v2488 = vld [vmem:[#allocation3 + $0xa] sm:$0xff]
        %v2489 = vld [vmem:[#allocation3 + $0x1a] sm:$0xff]
        %v2490 = vld [vmem:[#allocation3 + $0x22] sm:$0xff]
        %v2491 = vld [vmem:[#allocation3 + $0x32] sm:$0xff]
        %v2492 = vld [vmem:[#allocation3 + $0x3a] sm:$0xff]
        %v2493 = vld [vmem:[#allocation3 + $0x4a] sm:$0xff]
        %v2494 = vld [vmem:[#allocation3 + $0x52] sm:$0xff]
        %v2495 = vld [vmem:[#allocation3 + $0x62] sm:$0xff]
        %v2496 = vld [vmem:[#allocation3 + $0x6a] sm:$0xff]
        %v2497 = vld [vmem:[#allocation3 + $0x7a] sm:$0xff]
        %v2498 = vld [vmem:[#allocation3 + $0x82] sm:$0xff]
        %v2499 = vld [vmem:[#allocation3 + $0x92] sm:$0xff]
        %v2500 = vld [vmem:[#allocation3 + $0x9a] sm:$0xff]
        %v2501 = vld [vmem:[#allocation3 + $0xaa] sm:$0xff]
        %v2502 = vld [vmem:[#allocation3 + $0xb2] sm:$0xff]
        %v2503 = vld [vmem:[#allocation3 + $0xc2] sm:$0xff]
        %v2504 = vld [vmem:[#allocation3 + $0xca] sm:$0xff]
        %v2505 = vld [vmem:[#allocation3 + $0xda] sm:$0xff]
        %v2506 = vld [vmem:[#allocation3 + $0xe2] sm:$0xff]
        %v2507 = vld [vmem:[#allocation3 + $0xf2] sm:$0xff]
        %v2508 = vld [vmem:[#allocation3 + $0xfa] sm:$0xff]
        %v2509 = vld [vmem:[#allocation3 + $0x10a] sm:$0xff]
        %v2510 = vld [vmem:[#allocation3 + $0x112] sm:$0xff]
        %v2511 = vld [vmem:[#allocation3 + $0x122] sm:$0xff]
        %v2512 = vld [vmem:[#allocation3 + $0x12a] sm:$0xff]
        %v2513 = vld [vmem:[#allocation3 + $0x13a] sm:$0xff]
        %v2514 = vld [vmem:[#allocation3 + $0x142] sm:$0xff]
        %v2515 = vld [vmem:[#allocation3 + $0x152] sm:$0xff]
        %v2516 = vld [vmem:[#allocation3 + $0x15a] sm:$0xff]
        %v2517 = vld [vmem:[#allocation3 + $0x16a] sm:$0xff]
        %v2518 = vld [vmem:[#allocation3 + $0x172] sm:$0xff]
        %v2519 = vld [vmem:[%s2390] sm:$0xff]
        %v2520 = vld [vmem:[%s2390 + $0x8] sm:$0xff]
        %v2521 = vld [vmem:[%s2390 + $0x18] sm:$0xff]
        %v2522 = vld [vmem:[%s2390 + $0x20] sm:$0xff]
        %v2523 = vld [vmem:[%s2390 + $0x30] sm:$0xff]
        %v2524 = vld [vmem:[%s2390 + $0x38] sm:$0xff]
        %v2525 = vld [vmem:[%s2390 + $0x48] sm:$0xff]
        %v2526 = vld [vmem:[%s2390 + $0x50] sm:$0xff]
        %v2527 = vld [vmem:[%s2390 + $0x60] sm:$0xff]
        %v2528 = vld [vmem:[%s2390 + $0x68] sm:$0xff]
        %v2529 = vld [vmem:[%s2390 + $0x78] sm:$0xff]
        %v2530 = vld [vmem:[%s2390 + $0x80] sm:$0xff]
        %v2531 = vld [vmem:[%s2390 + $0x90] sm:$0xff]
        %v2532 = vld [vmem:[%s2390 + $0x98] sm:$0xff]
        %v2533 = vld [vmem:[%s2390 + $0xa8] sm:$0xff]
        %v2534 = vld [vmem:[%s2390 + $0xb0] sm:$0xff]
        %v2535 = vld [vmem:[%s2390 + $0xc0] sm:$0xff]
        %v2536 = vld [vmem:[%s2390 + $0xc8] sm:$0xff]
        %v2537 = vld [vmem:[%s2390 + $0xd8] sm:$0xff]
        %v2538 = vld [vmem:[%s2390 + $0xe0] sm:$0xff]
        %v2539 = vld [vmem:[%s2390 + $0xf0] sm:$0xff]
        %v2540 = vld [vmem:[%s2390 + $0xf8] sm:$0xff]
        %v2541 = vld [vmem:[%s2390 + $0x108] sm:$0xff]
        %v2542 = vld [vmem:[%s2390 + $0x110] sm:$0xff]
        %v2543 = vld [vmem:[%s2390 + $0x120] sm:$0xff]
        %v2544 = vld [vmem:[%s2390 + $0x128] sm:$0xff]
        %v2545 = vld [vmem:[%s2390 + $0x138] sm:$0xff]
        %v2546 = vld [vmem:[%s2390 + $0x140] sm:$0xff]
        %v2547 = vld [vmem:[%s2390 + $0x150] sm:$0xff]
        %v2548 = vld [vmem:[%s2390 + $0x158] sm:$0xff]
        %v2549 = vld [vmem:[%s2390 + $0x168] sm:$0xff]
        %v2550 = vld [vmem:[%s2390 + $0x170] sm:$0xff]
        %v2551 = vld [vmem:[%s2390 + $0x1] sm:$0xff]
        %v2552 = vld [vmem:[%s2390 + $0x9] sm:$0xff]
        %v2553 = vld [vmem:[%s2390 + $0x19] sm:$0xff]
        %v2554 = vld [vmem:[%s2390 + $0x21] sm:$0xff]
        %v2555 = vld [vmem:[%s2390 + $0x31] sm:$0xff]
        %v2556 = vld [vmem:[%s2390 + $0x39] sm:$0xff]
        %v2557 = vld [vmem:[%s2390 + $0x49] sm:$0xff]
        %v2558 = vld [vmem:[%s2390 + $0x51] sm:$0xff]
        %v2559 = vld [vmem:[%s2390 + $0x61] sm:$0xff]
        %v2560 = vld [vmem:[%s2390 + $0x69] sm:$0xff]
        %v2561 = vld [vmem:[%s2390 + $0x79] sm:$0xff]
        %v2562 = vld [vmem:[%s2390 + $0x81] sm:$0xff]
        %v2563 = vld [vmem:[%s2390 + $0x91] sm:$0xff]
        %v2564 = vld [vmem:[%s2390 + $0x99] sm:$0xff]
        %v2565 = vld [vmem:[%s2390 + $0xa9] sm:$0xff]
        %v2566 = vld [vmem:[%s2390 + $0xb1] sm:$0xff]
        %v2567 = vld [vmem:[%s2390 + $0xc1] sm:$0xff]
        %v2568 = vld [vmem:[%s2390 + $0xc9] sm:$0xff]
        %v2569 = vld [vmem:[%s2390 + $0xd9] sm:$0xff]
        %v2570 = vld [vmem:[%s2390 + $0xe1] sm:$0xff]
        %v2571 = vld [vmem:[%s2390 + $0xf1] sm:$0xff]
        %v2572 = vld [vmem:[%s2390 + $0xf9] sm:$0xff]
        %v2573 = vld [vmem:[%s2390 + $0x109] sm:$0xff]
        %v2574 = vld [vmem:[%s2390 + $0x111] sm:$0xff]
        %v2575 = vld [vmem:[%s2390 + $0x121] sm:$0xff]
        %v2576 = vld [vmem:[%s2390 + $0x129] sm:$0xff]
        %v2577 = vld [vmem:[%s2390 + $0x139] sm:$0xff]
        %v2578 = vld [vmem:[%s2390 + $0x141] sm:$0xff]
        %v2579 = vld [vmem:[%s2390 + $0x151] sm:$0xff]
        %v2580 = vld [vmem:[%s2390 + $0x159] sm:$0xff]
        %v2581 = vld [vmem:[%s2390 + $0x169] sm:$0xff]
        %v2582 = vld [vmem:[%s2390 + $0x171] sm:$0xff]
        %v2583 = vld [vmem:[%s2390 + $0x2] sm:$0xff]
        %v2584 = vld [vmem:[%s2390 + $0xa] sm:$0xff]
        %v2585 = vld [vmem:[%s2390 + $0x1a] sm:$0xff]
        %v2586 = vld [vmem:[%s2390 + $0x22] sm:$0xff]
        %v2587 = vld [vmem:[%s2390 + $0x32] sm:$0xff]
        %v2588 = vld [vmem:[%s2390 + $0x3a] sm:$0xff]
        %v2589 = vld [vmem:[%s2390 + $0x4a] sm:$0xff]
        %v2590 = vld [vmem:[%s2390 + $0x52] sm:$0xff]
        %v2591 = vld [vmem:[%s2390 + $0x62] sm:$0xff]
        %v2592 = vld [vmem:[%s2390 + $0x6a] sm:$0xff]
        %v2593 = vld [vmem:[%s2390 + $0x7a] sm:$0xff]
        %v2594 = vld [vmem:[%s2390 + $0x82] sm:$0xff]
        %v2595 = vld [vmem:[%s2390 + $0x92] sm:$0xff]
        %v2596 = vld [vmem:[%s2390 + $0x9a] sm:$0xff]
        %v2597 = vld [vmem:[%s2390 + $0xaa] sm:$0xff]
        %v2598 = vld [vmem:[%s2390 + $0xb2] sm:$0xff]
        %v2599 = vld [vmem:[%s2390 + $0xc2] sm:$0xff]
        %v2600 = vld [vmem:[%s2390 + $0xca] sm:$0xff]
        %v2601 = vld [vmem:[%s2390 + $0xda] sm:$0xff]
        %v2602 = vld [vmem:[%s2390 + $0xe2] sm:$0xff]
        %v2603 = vld [vmem:[%s2390 + $0xf2] sm:$0xff]
        %v2604 = vld [vmem:[%s2390 + $0xfa] sm:$0xff]
        %v2605 = vld [vmem:[%s2390 + $0x10a] sm:$0xff]
        %v2606 = vld [vmem:[%s2390 + $0x112] sm:$0xff]
        %v2607 = vld [vmem:[%s2390 + $0x122] sm:$0xff]
        %v2608 = vld [vmem:[%s2390 + $0x12a] sm:$0xff]
        %v2609 = vld [vmem:[%s2390 + $0x13a] sm:$0xff]
        %v2610 = vld [vmem:[%s2390 + $0x142] sm:$0xff]
        %v2611 = vld [vmem:[%s2390 + $0x152] sm:$0xff]
        %v2612 = vld [vmem:[%s2390 + $0x15a] sm:$0xff]
        %v2613 = vld [vmem:[%s2390 + $0x16a] sm:$0xff]
        %v2614 = vld [vmem:[%s2390 + $0x172] sm:$0xff]
        %s2615 = scalar_lea.vmem [#allocation3], 48
        %v2616 = vld [vmem:[%s2615] sm:$0xff]
        %v2617 = vld [vmem:[%s2615 + $0x8] sm:$0xff]
        %v2618 = vld [vmem:[%s2615 + $0x18] sm:$0xff]
        %v2619 = vld [vmem:[%s2615 + $0x20] sm:$0xff]
        %v2620 = vld [vmem:[%s2615 + $0x30] sm:$0xff]
        %v2621 = vld [vmem:[%s2615 + $0x38] sm:$0xff]
        %v2622 = vld [vmem:[%s2615 + $0x48] sm:$0xff]
        %v2623 = vld [vmem:[%s2615 + $0x50] sm:$0xff]
        %v2624 = vld [vmem:[%s2615 + $0x60] sm:$0xff]
        %v2625 = vld [vmem:[%s2615 + $0x68] sm:$0xff]
        %v2626 = vld [vmem:[%s2615 + $0x78] sm:$0xff]
        %v2627 = vld [vmem:[%s2615 + $0x80] sm:$0xff]
        %v2628 = vld [vmem:[%s2615 + $0x90] sm:$0xff]
        %v2629 = vld [vmem:[%s2615 + $0x98] sm:$0xff]
        %v2630 = vld [vmem:[%s2615 + $0xa8] sm:$0xff]
        %v2631 = vld [vmem:[%s2615 + $0xb0] sm:$0xff]
        %v2632 = vld [vmem:[%s2615 + $0xc0] sm:$0xff]
        %v2633 = vld [vmem:[%s2615 + $0xc8] sm:$0xff]
        %v2634 = vld [vmem:[%s2615 + $0xd8] sm:$0xff]
        %v2635 = vld [vmem:[%s2615 + $0xe0] sm:$0xff]
        %v2636 = vld [vmem:[%s2615 + $0xf0] sm:$0xff]
        %v2637 = vld [vmem:[%s2615 + $0xf8] sm:$0xff]
        %v2638 = vld [vmem:[%s2615 + $0x108] sm:$0xff]
        %v2639 = vld [vmem:[%s2615 + $0x110] sm:$0xff]
        %v2640 = vld [vmem:[%s2615 + $0x120] sm:$0xff]
        %v2641 = vld [vmem:[%s2615 + $0x128] sm:$0xff]
        %v2642 = vld [vmem:[%s2615 + $0x138] sm:$0xff]
        %v2643 = vld [vmem:[%s2615 + $0x140] sm:$0xff]
        %v2644 = vld [vmem:[%s2615 + $0x150] sm:$0xff]
        %v2645 = vld [vmem:[%s2615 + $0x158] sm:$0xff]
        %v2646 = vld [vmem:[%s2615 + $0x168] sm:$0xff]
        %v2647 = vld [vmem:[%s2615 + $0x170] sm:$0xff]
        %v2648 = vld [vmem:[%s2615 + $0x1] sm:$0xff]
        %v2649 = vld [vmem:[%s2615 + $0x9] sm:$0xff]
        %v2650 = vld [vmem:[%s2615 + $0x19] sm:$0xff]
        %v2651 = vld [vmem:[%s2615 + $0x21] sm:$0xff]
        %v2652 = vld [vmem:[%s2615 + $0x31] sm:$0xff]
        %v2653 = vld [vmem:[%s2615 + $0x39] sm:$0xff]
        %v2654 = vld [vmem:[%s2615 + $0x49] sm:$0xff]
        %v2655 = vld [vmem:[%s2615 + $0x51] sm:$0xff]
        %v2656 = vld [vmem:[%s2615 + $0x61] sm:$0xff]
        %v2657 = vld [vmem:[%s2615 + $0x69] sm:$0xff]
        %v2658 = vld [vmem:[%s2615 + $0x79] sm:$0xff]
        %v2659 = vld [vmem:[%s2615 + $0x81] sm:$0xff]
        %v2660 = vld [vmem:[%s2615 + $0x91] sm:$0xff]
        %v2661 = vld [vmem:[%s2615 + $0x99] sm:$0xff]
        %v2662 = vld [vmem:[%s2615 + $0xa9] sm:$0xff]
        %v2663 = vld [vmem:[%s2615 + $0xb1] sm:$0xff]
        %v2664 = vld [vmem:[%s2615 + $0xc1] sm:$0xff]
        %v2665 = vld [vmem:[%s2615 + $0xc9] sm:$0xff]
        %v2666 = vld [vmem:[%s2615 + $0xd9] sm:$0xff]
        %v2667 = vld [vmem:[%s2615 + $0xe1] sm:$0xff]
        %v2668 = vld [vmem:[%s2615 + $0xf1] sm:$0xff]
        %v2669 = vld [vmem:[%s2615 + $0xf9] sm:$0xff]
        %v2670 = vld [vmem:[%s2615 + $0x109] sm:$0xff]
        %v2671 = vld [vmem:[%s2615 + $0x111] sm:$0xff]
        %v2672 = vld [vmem:[%s2615 + $0x121] sm:$0xff]
        %v2673 = vld [vmem:[%s2615 + $0x129] sm:$0xff]
        %v2674 = vld [vmem:[%s2615 + $0x139] sm:$0xff]
        %v2675 = vld [vmem:[%s2615 + $0x141] sm:$0xff]
        %v2676 = vld [vmem:[%s2615 + $0x151] sm:$0xff]
        %v2677 = vld [vmem:[%s2615 + $0x159] sm:$0xff]
        %v2678 = vld [vmem:[%s2615 + $0x169] sm:$0xff]
        %v2679 = vld [vmem:[%s2615 + $0x171] sm:$0xff]
        %v2680 = vld [vmem:[%s2615 + $0x2] sm:$0xff]
        %v2681 = vld [vmem:[%s2615 + $0xa] sm:$0xff]
        %v2682 = vld [vmem:[%s2615 + $0x1a] sm:$0xff]
        %v2683 = vld [vmem:[%s2615 + $0x22] sm:$0xff]
        %v2684 = vld [vmem:[%s2615 + $0x32] sm:$0xff]
        %v2685 = vld [vmem:[%s2615 + $0x3a] sm:$0xff]
        %v2686 = vld [vmem:[%s2615 + $0x4a] sm:$0xff]
        %v2687 = vld [vmem:[%s2615 + $0x52] sm:$0xff]
        %v2688 = vld [vmem:[%s2615 + $0x62] sm:$0xff]
        %v2689 = vld [vmem:[%s2615 + $0x6a] sm:$0xff]
        %v2690 = vld [vmem:[%s2615 + $0x7a] sm:$0xff]
        %v2691 = vld [vmem:[%s2615 + $0x82] sm:$0xff]
        %v2692 = vld [vmem:[%s2615 + $0x92] sm:$0xff]
        %v2693 = vld [vmem:[%s2615 + $0x9a] sm:$0xff]
        %v2694 = vld [vmem:[%s2615 + $0xaa] sm:$0xff]
        %v2695 = vld [vmem:[%s2615 + $0xb2] sm:$0xff]
        %v2696 = vld [vmem:[%s2615 + $0xc2] sm:$0xff]
        %v2697 = vld [vmem:[%s2615 + $0xca] sm:$0xff]
        %v2698 = vld [vmem:[%s2615 + $0xda] sm:$0xff]
        %v2699 = vld [vmem:[%s2615 + $0xe2] sm:$0xff]
        %v2700 = vld [vmem:[%s2615 + $0xf2] sm:$0xff]
        %v2701 = vld [vmem:[%s2615 + $0xfa] sm:$0xff]
        %v2702 = vld [vmem:[%s2615 + $0x10a] sm:$0xff]
        %v2703 = vld [vmem:[%s2615 + $0x112] sm:$0xff]
        %v2704 = vld [vmem:[%s2615 + $0x122] sm:$0xff]
        %v2705 = vld [vmem:[%s2615 + $0x12a] sm:$0xff]
        %v2706 = vld [vmem:[%s2615 + $0x13a] sm:$0xff]
        %v2707 = vld [vmem:[%s2615 + $0x142] sm:$0xff]
        %v2708 = vld [vmem:[%s2615 + $0x152] sm:$0xff]
        %v2709 = vld [vmem:[%s2615 + $0x15a] sm:$0xff]
        %v2710 = vld [vmem:[%s2615 + $0x16a] sm:$0xff]
        %v2711 = vld [vmem:[%s2615 + $0x172] sm:$0xff]
        %2744 = vrot.lane.b32.xlu0 %v2455, 16
        %v2745 = vpop.permute.xlu0 %2744
        %2746 = vrot.lane.b32.xlu0 %v2456, 16
        %v2747 = vpop.permute.xlu0 %2746
        %2748 = vrot.lane.b32.xlu0 %v2457, 16
        %v2749 = vpop.permute.xlu0 %2748
        %2750 = vrot.lane.b32.xlu0 %v2458, 16
        %v2751 = vpop.permute.xlu0 %2750
        %2752 = vrot.lane.b32.xlu0 %v2459, 16
        %v2753 = vpop.permute.xlu0 %2752
        %2754 = vrot.lane.b32.xlu0 %v2460, 16
        %v2755 = vpop.permute.xlu0 %2754
        %2756 = vrot.lane.b32.xlu0 %v2461, 16
        %v2757 = vpop.permute.xlu0 %2756
        %2758 = vrot.lane.b32.xlu0 %v2462, 16
        %v2759 = vpop.permute.xlu0 %2758
        %2760 = vrot.lane.b32.xlu0 %v2463, 16
        %v2761 = vpop.permute.xlu0 %2760
        %2762 = vrot.lane.b32.xlu0 %v2464, 16
        %v2763 = vpop.permute.xlu0 %2762
        %2764 = vrot.lane.b32.xlu0 %v2465, 16
        %v2765 = vpop.permute.xlu0 %2764
        %2766 = vrot.lane.b32.xlu0 %v2466, 16
        %v2767 = vpop.permute.xlu0 %2766
        %2768 = vrot.lane.b32.xlu0 %v2467, 16
        %v2769 = vpop.permute.xlu0 %2768
        %2770 = vrot.lane.b32.xlu0 %v2468, 16
        %v2771 = vpop.permute.xlu0 %2770
        %2772 = vrot.lane.b32.xlu0 %v2469, 16
        %v2773 = vpop.permute.xlu0 %2772
        %2774 = vrot.lane.b32.xlu0 %v2470, 16
        %v2775 = vpop.permute.xlu0 %2774
        %2776 = vrot.lane.b32.xlu0 %v2471, 16
        %v2777 = vpop.permute.xlu0 %2776
        %2778 = vrot.lane.b32.xlu0 %v2472, 16
        %v2779 = vpop.permute.xlu0 %2778
        %2780 = vrot.lane.b32.xlu0 %v2473, 16
        %v2781 = vpop.permute.xlu0 %2780
        %2782 = vrot.lane.b32.xlu0 %v2474, 16
        %v2783 = vpop.permute.xlu0 %2782
        %2784 = vrot.lane.b32.xlu0 %v2475, 16
        %v2785 = vpop.permute.xlu0 %2784
        %2786 = vrot.lane.b32.xlu0 %v2476, 16
        %v2787 = vpop.permute.xlu0 %2786
        %2788 = vrot.lane.b32.xlu0 %v2477, 16
        %v2789 = vpop.permute.xlu0 %2788
        %2790 = vrot.lane.b32.xlu0 %v2478, 16
        %v2791 = vpop.permute.xlu0 %2790
        %2792 = vrot.lane.b32.xlu0 %v2479, 16
        %v2793 = vpop.permute.xlu0 %2792
        %2794 = vrot.lane.b32.xlu0 %v2480, 16
        %v2795 = vpop.permute.xlu0 %2794
        %2796 = vrot.lane.b32.xlu0 %v2481, 16
        %v2797 = vpop.permute.xlu0 %2796
        %2798 = vrot.lane.b32.xlu0 %v2482, 16
        %v2799 = vpop.permute.xlu0 %2798
        %2800 = vrot.lane.b32.xlu0 %v2483, 16
        %v2801 = vpop.permute.xlu0 %2800
        %2802 = vrot.lane.b32.xlu0 %v2484, 16
        %v2803 = vpop.permute.xlu0 %2802
        %2804 = vrot.lane.b32.xlu0 %v2485, 16
        %v2805 = vpop.permute.xlu0 %2804
        %2806 = vrot.lane.b32.xlu0 %v2486, 16
        %v2807 = vpop.permute.xlu0 %2806
        %2872 = vrot.lane.b32.xlu0 %v2487, 32
        %v2873 = vpop.permute.xlu0 %2872
        %2874 = vrot.lane.b32.xlu0 %v2488, 32
        %v2875 = vpop.permute.xlu0 %2874
        %2876 = vrot.lane.b32.xlu0 %v2489, 32
        %v2877 = vpop.permute.xlu0 %2876
        %2878 = vrot.lane.b32.xlu0 %v2490, 32
        %v2879 = vpop.permute.xlu0 %2878
        %2880 = vrot.lane.b32.xlu0 %v2491, 32
        %v2881 = vpop.permute.xlu0 %2880
        %2882 = vrot.lane.b32.xlu0 %v2492, 32
        %v2883 = vpop.permute.xlu0 %2882
        %2884 = vrot.lane.b32.xlu0 %v2493, 32
        %v2885 = vpop.permute.xlu0 %2884
        %2886 = vrot.lane.b32.xlu0 %v2494, 32
        %v2887 = vpop.permute.xlu0 %2886
        %2888 = vrot.lane.b32.xlu0 %v2495, 32
        %v2889 = vpop.permute.xlu0 %2888
        %2890 = vrot.lane.b32.xlu0 %v2496, 32
        %v2891 = vpop.permute.xlu0 %2890
        %2892 = vrot.lane.b32.xlu0 %v2497, 32
        %v2893 = vpop.permute.xlu0 %2892
        %2894 = vrot.lane.b32.xlu0 %v2498, 32
        %v2895 = vpop.permute.xlu0 %2894
        %2896 = vrot.lane.b32.xlu0 %v2499, 32
        %v2897 = vpop.permute.xlu0 %2896
        %2898 = vrot.lane.b32.xlu0 %v2500, 32
        %v2899 = vpop.permute.xlu0 %2898
        %2900 = vrot.lane.b32.xlu0 %v2501, 32
        %v2901 = vpop.permute.xlu0 %2900
        %2902 = vrot.lane.b32.xlu0 %v2502, 32
        %v2903 = vpop.permute.xlu0 %2902
        %2904 = vrot.lane.b32.xlu0 %v2503, 32
        %v2905 = vpop.permute.xlu0 %2904
        %2906 = vrot.lane.b32.xlu0 %v2504, 32
        %v2907 = vpop.permute.xlu0 %2906
        %2908 = vrot.lane.b32.xlu0 %v2505, 32
        %v2909 = vpop.permute.xlu0 %2908
        %2910 = vrot.lane.b32.xlu0 %v2506, 32
        %v2911 = vpop.permute.xlu0 %2910
        %2912 = vrot.lane.b32.xlu0 %v2507, 32
        %v2913 = vpop.permute.xlu0 %2912
        %2914 = vrot.lane.b32.xlu0 %v2508, 32
        %v2915 = vpop.permute.xlu0 %2914
        %2916 = vrot.lane.b32.xlu0 %v2509, 32
        %v2917 = vpop.permute.xlu0 %2916
        %2918 = vrot.lane.b32.xlu0 %v2510, 32
        %v2919 = vpop.permute.xlu0 %2918
        %2920 = vrot.lane.b32.xlu0 %v2511, 32
        %v2921 = vpop.permute.xlu0 %2920
        %2922 = vrot.lane.b32.xlu0 %v2512, 32
        %v2923 = vpop.permute.xlu0 %2922
        %2924 = vrot.lane.b32.xlu0 %v2513, 32
        %v2925 = vpop.permute.xlu0 %2924
        %2926 = vrot.lane.b32.xlu0 %v2514, 32
        %v2927 = vpop.permute.xlu0 %2926
        %2928 = vrot.lane.b32.xlu0 %v2515, 32
        %v2929 = vpop.permute.xlu0 %2928
        %2930 = vrot.lane.b32.xlu0 %v2516, 32
        %v2931 = vpop.permute.xlu0 %2930
        %2932 = vrot.lane.b32.xlu0 %v2517, 32
        %v2933 = vpop.permute.xlu0 %2932
        %2934 = vrot.lane.b32.xlu0 %v2518, 32
        %v2935 = vpop.permute.xlu0 %2934
        %3000 = vrot.lane.b32.xlu0 %v2519, 48
        %v3001 = vpop.permute.xlu0 %3000
        %3002 = vrot.lane.b32.xlu0 %v2520, 48
        %v3003 = vpop.permute.xlu0 %3002
        %3004 = vrot.lane.b32.xlu0 %v2521, 48
        %v3005 = vpop.permute.xlu0 %3004
        %3006 = vrot.lane.b32.xlu0 %v2522, 48
        %v3007 = vpop.permute.xlu0 %3006
        %3008 = vrot.lane.b32.xlu0 %v2523, 48
        %v3009 = vpop.permute.xlu0 %3008
        %3010 = vrot.lane.b32.xlu0 %v2524, 48
        %v3011 = vpop.permute.xlu0 %3010
        %3012 = vrot.lane.b32.xlu0 %v2525, 48
        %v3013 = vpop.permute.xlu0 %3012
        %3014 = vrot.lane.b32.xlu0 %v2526, 48
        %v3015 = vpop.permute.xlu0 %3014
        %3016 = vrot.lane.b32.xlu0 %v2527, 48
        %v3017 = vpop.permute.xlu0 %3016
        %3018 = vrot.lane.b32.xlu0 %v2528, 48
        %v3019 = vpop.permute.xlu0 %3018
        %3020 = vrot.lane.b32.xlu0 %v2529, 48
        %v3021 = vpop.permute.xlu0 %3020
        %3022 = vrot.lane.b32.xlu0 %v2530, 48
        %v3023 = vpop.permute.xlu0 %3022
        %3024 = vrot.lane.b32.xlu0 %v2531, 48
        %v3025 = vpop.permute.xlu0 %3024
        %3026 = vrot.lane.b32.xlu0 %v2532, 48
        %v3027 = vpop.permute.xlu0 %3026
        %3028 = vrot.lane.b32.xlu0 %v2533, 48
        %v3029 = vpop.permute.xlu0 %3028
        %3030 = vrot.lane.b32.xlu0 %v2534, 48
        %v3031 = vpop.permute.xlu0 %3030
        %3032 = vrot.lane.b32.xlu0 %v2535, 48
        %v3033 = vpop.permute.xlu0 %3032
        %3034 = vrot.lane.b32.xlu0 %v2536, 48
        %v3035 = vpop.permute.xlu0 %3034
        %3036 = vrot.lane.b32.xlu0 %v2537, 48
        %v3037 = vpop.permute.xlu0 %3036
        %3038 = vrot.lane.b32.xlu0 %v2538, 48
        %v3039 = vpop.permute.xlu0 %3038
        %3040 = vrot.lane.b32.xlu0 %v2539, 48
        %v3041 = vpop.permute.xlu0 %3040
        %3042 = vrot.lane.b32.xlu0 %v2540, 48
        %v3043 = vpop.permute.xlu0 %3042
        %3044 = vrot.lane.b32.xlu0 %v2541, 48
        %v3045 = vpop.permute.xlu0 %3044
        %3046 = vrot.lane.b32.xlu0 %v2542, 48
        %v3047 = vpop.permute.xlu0 %3046
        %3048 = vrot.lane.b32.xlu0 %v2543, 48
        %v3049 = vpop.permute.xlu0 %3048
        %3050 = vrot.lane.b32.xlu0 %v2544, 48
        %v3051 = vpop.permute.xlu0 %3050
        %3052 = vrot.lane.b32.xlu0 %v2545, 48
        %v3053 = vpop.permute.xlu0 %3052
        %3054 = vrot.lane.b32.xlu0 %v2546, 48
        %v3055 = vpop.permute.xlu0 %3054
        %3056 = vrot.lane.b32.xlu0 %v2547, 48
        %v3057 = vpop.permute.xlu0 %3056
        %3058 = vrot.lane.b32.xlu0 %v2548, 48
        %v3059 = vpop.permute.xlu0 %3058
        %3060 = vrot.lane.b32.xlu0 %v2549, 48
        %v3061 = vpop.permute.xlu0 %3060
        %3062 = vrot.lane.b32.xlu0 %v2550, 48
        %v3063 = vpop.permute.xlu0 %3062
        %3128 = vrot.lane.b32.xlu0 %v2551, 64
        %v3129 = vpop.permute.xlu0 %3128
        %3130 = vrot.lane.b32.xlu0 %v2552, 64
        %v3131 = vpop.permute.xlu0 %3130
        %3132 = vrot.lane.b32.xlu0 %v2553, 64
        %v3133 = vpop.permute.xlu0 %3132
        %3134 = vrot.lane.b32.xlu0 %v2554, 64
        %v3135 = vpop.permute.xlu0 %3134
        %3136 = vrot.lane.b32.xlu0 %v2555, 64
        %v3137 = vpop.permute.xlu0 %3136
        %3138 = vrot.lane.b32.xlu0 %v2556, 64
        %v3139 = vpop.permute.xlu0 %3138
        %3140 = vrot.lane.b32.xlu0 %v2557, 64
        %v3141 = vpop.permute.xlu0 %3140
        %3142 = vrot.lane.b32.xlu0 %v2558, 64
        %v3143 = vpop.permute.xlu0 %3142
        %3144 = vrot.lane.b32.xlu0 %v2559, 64
        %v3145 = vpop.permute.xlu0 %3144
        %3146 = vrot.lane.b32.xlu0 %v2560, 64
        %v3147 = vpop.permute.xlu0 %3146
        %3148 = vrot.lane.b32.xlu0 %v2561, 64
        %v3149 = vpop.permute.xlu0 %3148
        %3150 = vrot.lane.b32.xlu0 %v2562, 64
        %v3151 = vpop.permute.xlu0 %3150
        %3152 = vrot.lane.b32.xlu0 %v2563, 64
        %v3153 = vpop.permute.xlu0 %3152
        %3154 = vrot.lane.b32.xlu0 %v2564, 64
        %v3155 = vpop.permute.xlu0 %3154
        %3156 = vrot.lane.b32.xlu0 %v2565, 64
        %v3157 = vpop.permute.xlu0 %3156
        %3158 = vrot.lane.b32.xlu0 %v2566, 64
        %v3159 = vpop.permute.xlu0 %3158
        %3160 = vrot.lane.b32.xlu0 %v2567, 64
        %v3161 = vpop.permute.xlu0 %3160
        %3162 = vrot.lane.b32.xlu0 %v2568, 64
        %v3163 = vpop.permute.xlu0 %3162
        %3164 = vrot.lane.b32.xlu0 %v2569, 64
        %v3165 = vpop.permute.xlu0 %3164
        %3166 = vrot.lane.b32.xlu0 %v2570, 64
        %v3167 = vpop.permute.xlu0 %3166
        %3168 = vrot.lane.b32.xlu0 %v2571, 64
        %v3169 = vpop.permute.xlu0 %3168
        %3170 = vrot.lane.b32.xlu0 %v2572, 64
        %v3171 = vpop.permute.xlu0 %3170
        %3172 = vrot.lane.b32.xlu0 %v2573, 64
        %v3173 = vpop.permute.xlu0 %3172
        %3174 = vrot.lane.b32.xlu0 %v2574, 64
        %v3175 = vpop.permute.xlu0 %3174
        %3176 = vrot.lane.b32.xlu0 %v2575, 64
        %v3177 = vpop.permute.xlu0 %3176
        %3178 = vrot.lane.b32.xlu0 %v2576, 64
        %v3179 = vpop.permute.xlu0 %3178
        %3180 = vrot.lane.b32.xlu0 %v2577, 64
        %v3181 = vpop.permute.xlu0 %3180
        %3182 = vrot.lane.b32.xlu0 %v2578, 64
        %v3183 = vpop.permute.xlu0 %3182
        %3184 = vrot.lane.b32.xlu0 %v2579, 64
        %v3185 = vpop.permute.xlu0 %3184
        %3186 = vrot.lane.b32.xlu0 %v2580, 64
        %v3187 = vpop.permute.xlu0 %3186
        %3188 = vrot.lane.b32.xlu0 %v2581, 64
        %v3189 = vpop.permute.xlu0 %3188
        %3190 = vrot.lane.b32.xlu0 %v2582, 64
        %v3191 = vpop.permute.xlu0 %3190
        %3256 = vrot.lane.b32.xlu0 %v2583, 80
        %v3257 = vpop.permute.xlu0 %3256
        %3258 = vrot.lane.b32.xlu0 %v2584, 80
        %v3259 = vpop.permute.xlu0 %3258
        %3260 = vrot.lane.b32.xlu0 %v2585, 80
        %v3261 = vpop.permute.xlu0 %3260
        %3262 = vrot.lane.b32.xlu0 %v2586, 80
        %v3263 = vpop.permute.xlu0 %3262
        %3264 = vrot.lane.b32.xlu0 %v2587, 80
        %v3265 = vpop.permute.xlu0 %3264
        %3266 = vrot.lane.b32.xlu0 %v2588, 80
        %v3267 = vpop.permute.xlu0 %3266
        %3268 = vrot.lane.b32.xlu0 %v2589, 80
        %v3269 = vpop.permute.xlu0 %3268
        %3270 = vrot.lane.b32.xlu0 %v2590, 80
        %v3271 = vpop.permute.xlu0 %3270
        %3272 = vrot.lane.b32.xlu0 %v2591, 80
        %v3273 = vpop.permute.xlu0 %3272
        %3274 = vrot.lane.b32.xlu0 %v2592, 80
        %v3275 = vpop.permute.xlu0 %3274
        %3276 = vrot.lane.b32.xlu0 %v2593, 80
        %v3277 = vpop.permute.xlu0 %3276
        %3278 = vrot.lane.b32.xlu0 %v2594, 80
        %v3279 = vpop.permute.xlu0 %3278
        %3280 = vrot.lane.b32.xlu0 %v2595, 80
        %v3281 = vpop.permute.xlu0 %3280
        %3282 = vrot.lane.b32.xlu0 %v2596, 80
        %v3283 = vpop.permute.xlu0 %3282
        %3284 = vrot.lane.b32.xlu0 %v2597, 80
        %v3285 = vpop.permute.xlu0 %3284
        %3286 = vrot.lane.b32.xlu0 %v2598, 80
        %v3287 = vpop.permute.xlu0 %3286
        %3288 = vrot.lane.b32.xlu0 %v2599, 80
        %v3289 = vpop.permute.xlu0 %3288
        %3290 = vrot.lane.b32.xlu0 %v2600, 80
        %v3291 = vpop.permute.xlu0 %3290
        %3292 = vrot.lane.b32.xlu0 %v2601, 80
        %v3293 = vpop.permute.xlu0 %3292
        %3294 = vrot.lane.b32.xlu0 %v2602, 80
        %v3295 = vpop.permute.xlu0 %3294
        %3296 = vrot.lane.b32.xlu0 %v2603, 80
        %v3297 = vpop.permute.xlu0 %3296
        %3298 = vrot.lane.b32.xlu0 %v2604, 80
        %v3299 = vpop.permute.xlu0 %3298
        %3300 = vrot.lane.b32.xlu0 %v2605, 80
        %v3301 = vpop.permute.xlu0 %3300
        %3302 = vrot.lane.b32.xlu0 %v2606, 80
        %v3303 = vpop.permute.xlu0 %3302
        %3304 = vrot.lane.b32.xlu0 %v2607, 80
        %v3305 = vpop.permute.xlu0 %3304
        %3306 = vrot.lane.b32.xlu0 %v2608, 80
        %v3307 = vpop.permute.xlu0 %3306
        %3308 = vrot.lane.b32.xlu0 %v2609, 80
        %v3309 = vpop.permute.xlu0 %3308
        %3310 = vrot.lane.b32.xlu0 %v2610, 80
        %v3311 = vpop.permute.xlu0 %3310
        %3312 = vrot.lane.b32.xlu0 %v2611, 80
        %v3313 = vpop.permute.xlu0 %3312
        %3314 = vrot.lane.b32.xlu0 %v2612, 80
        %v3315 = vpop.permute.xlu0 %3314
        %3316 = vrot.lane.b32.xlu0 %v2613, 80
        %v3317 = vpop.permute.xlu0 %3316
        %3318 = vrot.lane.b32.xlu0 %v2614, 80
        %v3319 = vpop.permute.xlu0 %3318
        %3384 = vrot.lane.b32.xlu0 %v2616, 96
        %v3385 = vpop.permute.xlu0 %3384
        %3386 = vrot.lane.b32.xlu0 %v2617, 96
        %v3387 = vpop.permute.xlu0 %3386
        %3388 = vrot.lane.b32.xlu0 %v2618, 96
        %v3389 = vpop.permute.xlu0 %3388
        %3390 = vrot.lane.b32.xlu0 %v2619, 96
        %v3391 = vpop.permute.xlu0 %3390
        %3392 = vrot.lane.b32.xlu0 %v2620, 96
        %v3393 = vpop.permute.xlu0 %3392
        %3394 = vrot.lane.b32.xlu0 %v2621, 96
        %v3395 = vpop.permute.xlu0 %3394
        %3396 = vrot.lane.b32.xlu0 %v2622, 96
        %v3397 = vpop.permute.xlu0 %3396
        %3398 = vrot.lane.b32.xlu0 %v2623, 96
        %v3399 = vpop.permute.xlu0 %3398
        %3400 = vrot.lane.b32.xlu0 %v2624, 96
        %v3401 = vpop.permute.xlu0 %3400
        %3402 = vrot.lane.b32.xlu0 %v2625, 96
        %v3403 = vpop.permute.xlu0 %3402
        %3404 = vrot.lane.b32.xlu0 %v2626, 96
        %v3405 = vpop.permute.xlu0 %3404
        %3406 = vrot.lane.b32.xlu0 %v2627, 96
        %v3407 = vpop.permute.xlu0 %3406
        %3408 = vrot.lane.b32.xlu0 %v2628, 96
        %v3409 = vpop.permute.xlu0 %3408
        %3410 = vrot.lane.b32.xlu0 %v2629, 96
        %v3411 = vpop.permute.xlu0 %3410
        %3412 = vrot.lane.b32.xlu0 %v2630, 96
        %v3413 = vpop.permute.xlu0 %3412
        %3414 = vrot.lane.b32.xlu0 %v2631, 96
        %v3415 = vpop.permute.xlu0 %3414
        %3416 = vrot.lane.b32.xlu0 %v2632, 96
        %v3417 = vpop.permute.xlu0 %3416
        %3418 = vrot.lane.b32.xlu0 %v2633, 96
        %v3419 = vpop.permute.xlu0 %3418
        %3420 = vrot.lane.b32.xlu0 %v2634, 96
        %v3421 = vpop.permute.xlu0 %3420
        %3422 = vrot.lane.b32.xlu0 %v2635, 96
        %v3423 = vpop.permute.xlu0 %3422
        %3424 = vrot.lane.b32.xlu0 %v2636, 96
        %v3425 = vpop.permute.xlu0 %3424
        %3426 = vrot.lane.b32.xlu0 %v2637, 96
        %v3427 = vpop.permute.xlu0 %3426
        %3428 = vrot.lane.b32.xlu0 %v2638, 96
        %v3429 = vpop.permute.xlu0 %3428
        %3430 = vrot.lane.b32.xlu0 %v2639, 96
        %v3431 = vpop.permute.xlu0 %3430
        %3432 = vrot.lane.b32.xlu0 %v2640, 96
        %v3433 = vpop.permute.xlu0 %3432
        %3434 = vrot.lane.b32.xlu0 %v2641, 96
        %v3435 = vpop.permute.xlu0 %3434
        %3436 = vrot.lane.b32.xlu0 %v2642, 96
        %v3437 = vpop.permute.xlu0 %3436
        %3438 = vrot.lane.b32.xlu0 %v2643, 96
        %v3439 = vpop.permute.xlu0 %3438
        %3440 = vrot.lane.b32.xlu0 %v2644, 96
        %v3441 = vpop.permute.xlu0 %3440
        %3442 = vrot.lane.b32.xlu0 %v2645, 96
        %v3443 = vpop.permute.xlu0 %3442
        %3444 = vrot.lane.b32.xlu0 %v2646, 96
        %v3445 = vpop.permute.xlu0 %3444
        %3446 = vrot.lane.b32.xlu0 %v2647, 96
        %v3447 = vpop.permute.xlu0 %3446
        %3512 = vrot.lane.b32.xlu0 %v2648, 112
        %v3513 = vpop.permute.xlu0 %3512
        %3514 = vrot.lane.b32.xlu0 %v2649, 112
        %v3515 = vpop.permute.xlu0 %3514
        %3516 = vrot.lane.b32.xlu0 %v2650, 112
        %v3517 = vpop.permute.xlu0 %3516
        %3518 = vrot.lane.b32.xlu0 %v2651, 112
        %v3519 = vpop.permute.xlu0 %3518
        %3520 = vrot.lane.b32.xlu0 %v2652, 112
        %v3521 = vpop.permute.xlu0 %3520
        %3522 = vrot.lane.b32.xlu0 %v2653, 112
        %v3523 = vpop.permute.xlu0 %3522
        %3524 = vrot.lane.b32.xlu0 %v2654, 112
        %v3525 = vpop.permute.xlu0 %3524
        %3526 = vrot.lane.b32.xlu0 %v2655, 112
        %v3527 = vpop.permute.xlu0 %3526
        %3528 = vrot.lane.b32.xlu0 %v2656, 112
        %v3529 = vpop.permute.xlu0 %3528
        %3530 = vrot.lane.b32.xlu0 %v2657, 112
        %v3531 = vpop.permute.xlu0 %3530
        %3532 = vrot.lane.b32.xlu0 %v2658, 112
        %v3533 = vpop.permute.xlu0 %3532
        %3534 = vrot.lane.b32.xlu0 %v2659, 112
        %v3535 = vpop.permute.xlu0 %3534
        %3536 = vrot.lane.b32.xlu0 %v2660, 112
        %v3537 = vpop.permute.xlu0 %3536
        %3538 = vrot.lane.b32.xlu0 %v2661, 112
        %v3539 = vpop.permute.xlu0 %3538
        %3540 = vrot.lane.b32.xlu0 %v2662, 112
        %v3541 = vpop.permute.xlu0 %3540
        %3542 = vrot.lane.b32.xlu0 %v2663, 112
        %v3543 = vpop.permute.xlu0 %3542
        %3544 = vrot.lane.b32.xlu0 %v2664, 112
        %v3545 = vpop.permute.xlu0 %3544
        %3546 = vrot.lane.b32.xlu0 %v2665, 112
        %v3547 = vpop.permute.xlu0 %3546
        %3548 = vrot.lane.b32.xlu0 %v2666, 112
        %v3549 = vpop.permute.xlu0 %3548
        %3550 = vrot.lane.b32.xlu0 %v2667, 112
        %v3551 = vpop.permute.xlu0 %3550
        %3552 = vrot.lane.b32.xlu0 %v2668, 112
        %v3553 = vpop.permute.xlu0 %3552
        %3554 = vrot.lane.b32.xlu0 %v2669, 112
        %v3555 = vpop.permute.xlu0 %3554
        %3556 = vrot.lane.b32.xlu0 %v2670, 112
        %v3557 = vpop.permute.xlu0 %3556
        %3558 = vrot.lane.b32.xlu0 %v2671, 112
        %v3559 = vpop.permute.xlu0 %3558
        %3560 = vrot.lane.b32.xlu0 %v2672, 112
        %v3561 = vpop.permute.xlu0 %3560
        %3562 = vrot.lane.b32.xlu0 %v2673, 112
        %v3563 = vpop.permute.xlu0 %3562
        %3564 = vrot.lane.b32.xlu0 %v2674, 112
        %v3565 = vpop.permute.xlu0 %3564
        %3566 = vrot.lane.b32.xlu0 %v2675, 112
        %v3567 = vpop.permute.xlu0 %3566
        %3568 = vrot.lane.b32.xlu0 %v2676, 112
        %v3569 = vpop.permute.xlu0 %3568
        %3570 = vrot.lane.b32.xlu0 %v2677, 112
        %v3571 = vpop.permute.xlu0 %3570
        %3572 = vrot.lane.b32.xlu0 %v2678, 112
        %v3573 = vpop.permute.xlu0 %3572
        %3574 = vrot.lane.b32.xlu0 %v2679, 112
        %v3575 = vpop.permute.xlu0 %3574
        %v3608 = vsel %vm351, %v2423, %v2745
        %v3609 = vsel %vm351, %v2424, %v2747
        %v3610 = vsel %vm351, %v2425, %v2749
        %v3611 = vsel %vm351, %v2426, %v2751
        %v3612 = vsel %vm351, %v2427, %v2753
        %v3613 = vsel %vm351, %v2428, %v2755
        %v3614 = vsel %vm351, %v2429, %v2757
        %v3615 = vsel %vm351, %v2430, %v2759
        %v3616 = vsel %vm351, %v2431, %v2761
        %v3617 = vsel %vm351, %v2432, %v2763
        %v3618 = vsel %vm351, %v2433, %v2765
        %v3619 = vsel %vm351, %v2434, %v2767
        %v3620 = vsel %vm351, %v2435, %v2769
        %v3621 = vsel %vm351, %v2436, %v2771
        %v3622 = vsel %vm351, %v2437, %v2773
        %v3623 = vsel %vm351, %v2438, %v2775
        %v3624 = vsel %vm351, %v2439, %v2777
        %v3625 = vsel %vm351, %v2440, %v2779
        %v3626 = vsel %vm351, %v2441, %v2781
        %v3627 = vsel %vm351, %v2442, %v2783
        %v3628 = vsel %vm351, %v2443, %v2785
        %v3629 = vsel %vm351, %v2444, %v2787
        %v3630 = vsel %vm351, %v2445, %v2789
        %v3631 = vsel %vm351, %v2446, %v2791
        %v3632 = vsel %vm351, %v2447, %v2793
        %v3633 = vsel %vm351, %v2448, %v2795
        %v3634 = vsel %vm351, %v2449, %v2797
        %v3635 = vsel %vm351, %v2450, %v2799
        %v3636 = vsel %vm351, %v2451, %v2801
        %v3637 = vsel %vm351, %v2452, %v2803
        %v3638 = vsel %vm351, %v2453, %v2805
        %v3639 = vsel %vm351, %v2454, %v2807
        %v3640 = vsel %vm1743, %v3608, %v2873
        %v3641 = vsel %vm1743, %v3609, %v2875
        %v3642 = vsel %vm1743, %v3610, %v2877
        %v3643 = vsel %vm1743, %v3611, %v2879
        %v3644 = vsel %vm1743, %v3612, %v2881
        %v3645 = vsel %vm1743, %v3613, %v2883
        %v3646 = vsel %vm1743, %v3614, %v2885
        %v3647 = vsel %vm1743, %v3615, %v2887
        %v3648 = vsel %vm1743, %v3616, %v2889
        %v3649 = vsel %vm1743, %v3617, %v2891
        %v3650 = vsel %vm1743, %v3618, %v2893
        %v3651 = vsel %vm1743, %v3619, %v2895
        %v3652 = vsel %vm1743, %v3620, %v2897
        %v3653 = vsel %vm1743, %v3621, %v2899
        %v3654 = vsel %vm1743, %v3622, %v2901
        %v3655 = vsel %vm1743, %v3623, %v2903
        %v3656 = vsel %vm1743, %v3624, %v2905
        %v3657 = vsel %vm1743, %v3625, %v2907
        %v3658 = vsel %vm1743, %v3626, %v2909
        %v3659 = vsel %vm1743, %v3627, %v2911
        %v3660 = vsel %vm1743, %v3628, %v2913
        %v3661 = vsel %vm1743, %v3629, %v2915
        %v3662 = vsel %vm1743, %v3630, %v2917
        %v3663 = vsel %vm1743, %v3631, %v2919
        %v3664 = vsel %vm1743, %v3632, %v2921
        %v3665 = vsel %vm1743, %v3633, %v2923
        %v3666 = vsel %vm1743, %v3634, %v2925
        %v3667 = vsel %vm1743, %v3635, %v2927
        %v3668 = vsel %vm1743, %v3636, %v2929
        %v3669 = vsel %vm1743, %v3637, %v2931
        %v3670 = vsel %vm1743, %v3638, %v2933
        %v3671 = vsel %vm1743, %v3639, %v2935
        %v3672 = vsel %vm1776, %v3640, %v3001
        %v3673 = vsel %vm1776, %v3641, %v3003
        %v3674 = vsel %vm1776, %v3642, %v3005
        %v3675 = vsel %vm1776, %v3643, %v3007
        %v3676 = vsel %vm1776, %v3644, %v3009
        %v3677 = vsel %vm1776, %v3645, %v3011
        %v3678 = vsel %vm1776, %v3646, %v3013
        %v3679 = vsel %vm1776, %v3647, %v3015
        %v3680 = vsel %vm1776, %v3648, %v3017
        %v3681 = vsel %vm1776, %v3649, %v3019
        %v3682 = vsel %vm1776, %v3650, %v3021
        %v3683 = vsel %vm1776, %v3651, %v3023
        %v3684 = vsel %vm1776, %v3652, %v3025
        %v3685 = vsel %vm1776, %v3653, %v3027
        %v3686 = vsel %vm1776, %v3654, %v3029
        %v3687 = vsel %vm1776, %v3655, %v3031
        %v3688 = vsel %vm1776, %v3656, %v3033
        %v3689 = vsel %vm1776, %v3657, %v3035
        %v3690 = vsel %vm1776, %v3658, %v3037
        %v3691 = vsel %vm1776, %v3659, %v3039
        %v3692 = vsel %vm1776, %v3660, %v3041
        %v3693 = vsel %vm1776, %v3661, %v3043
        %v3694 = vsel %vm1776, %v3662, %v3045
        %v3695 = vsel %vm1776, %v3663, %v3047
        %v3696 = vsel %vm1776, %v3664, %v3049
        %v3697 = vsel %vm1776, %v3665, %v3051
        %v3698 = vsel %vm1776, %v3666, %v3053
        %v3699 = vsel %vm1776, %v3667, %v3055
        %v3700 = vsel %vm1776, %v3668, %v3057
        %v3701 = vsel %vm1776, %v3669, %v3059
        %v3702 = vsel %vm1776, %v3670, %v3061
        %v3703 = vsel %vm1776, %v3671, %v3063
        %v3704 = vsel %vm1809, %v3672, %v3129
        %v3705 = vsel %vm1809, %v3673, %v3131
        %v3706 = vsel %vm1809, %v3674, %v3133
        %v3707 = vsel %vm1809, %v3675, %v3135
        %v3708 = vsel %vm1809, %v3676, %v3137
        %v3709 = vsel %vm1809, %v3677, %v3139
        %v3710 = vsel %vm1809, %v3678, %v3141
        %v3711 = vsel %vm1809, %v3679, %v3143
        %v3712 = vsel %vm1809, %v3680, %v3145
        %v3713 = vsel %vm1809, %v3681, %v3147
        %v3714 = vsel %vm1809, %v3682, %v3149
        %v3715 = vsel %vm1809, %v3683, %v3151
        %v3716 = vsel %vm1809, %v3684, %v3153
        %v3717 = vsel %vm1809, %v3685, %v3155
        %v3718 = vsel %vm1809, %v3686, %v3157
        %v3719 = vsel %vm1809, %v3687, %v3159
        %v3720 = vsel %vm1809, %v3688, %v3161
        %v3721 = vsel %vm1809, %v3689, %v3163
        %v3722 = vsel %vm1809, %v3690, %v3165
        %v3723 = vsel %vm1809, %v3691, %v3167
        %v3724 = vsel %vm1809, %v3692, %v3169
        %v3725 = vsel %vm1809, %v3693, %v3171
        %v3726 = vsel %vm1809, %v3694, %v3173
        %v3727 = vsel %vm1809, %v3695, %v3175
        %v3728 = vsel %vm1809, %v3696, %v3177
        %v3729 = vsel %vm1809, %v3697, %v3179
        %v3730 = vsel %vm1809, %v3698, %v3181
        %v3731 = vsel %vm1809, %v3699, %v3183
        %v3732 = vsel %vm1809, %v3700, %v3185
        %v3733 = vsel %vm1809, %v3701, %v3187
        %v3734 = vsel %vm1809, %v3702, %v3189
        %v3735 = vsel %vm1809, %v3703, %v3191
        %v3736 = vsel %vm1842, %v3704, %v3257
        %v3737 = vsel %vm1842, %v3705, %v3259
        %v3738 = vsel %vm1842, %v3706, %v3261
        %v3739 = vsel %vm1842, %v3707, %v3263
        %v3740 = vsel %vm1842, %v3708, %v3265
        %v3741 = vsel %vm1842, %v3709, %v3267
        %v3742 = vsel %vm1842, %v3710, %v3269
        %v3743 = vsel %vm1842, %v3711, %v3271
        %v3744 = vsel %vm1842, %v3712, %v3273
        %v3745 = vsel %vm1842, %v3713, %v3275
        %v3746 = vsel %vm1842, %v3714, %v3277
        %v3747 = vsel %vm1842, %v3715, %v3279
        %v3748 = vsel %vm1842, %v3716, %v3281
        %v3749 = vsel %vm1842, %v3717, %v3283
        %v3750 = vsel %vm1842, %v3718, %v3285
        %v3751 = vsel %vm1842, %v3719, %v3287
        %v3752 = vsel %vm1842, %v3720, %v3289
        %v3753 = vsel %vm1842, %v3721, %v3291
        %v3754 = vsel %vm1842, %v3722, %v3293
        %v3755 = vsel %vm1842, %v3723, %v3295
        %v3756 = vsel %vm1842, %v3724, %v3297
        %v3757 = vsel %vm1842, %v3725, %v3299
        %v3758 = vsel %vm1842, %v3726, %v3301
        %v3759 = vsel %vm1842, %v3727, %v3303
        %v3760 = vsel %vm1842, %v3728, %v3305
        %v3761 = vsel %vm1842, %v3729, %v3307
        %v3762 = vsel %vm1842, %v3730, %v3309
        %v3763 = vsel %vm1842, %v3731, %v3311
        %v3764 = vsel %vm1842, %v3732, %v3313
        %v3765 = vsel %vm1842, %v3733, %v3315
        %v3766 = vsel %vm1842, %v3734, %v3317
        %v3767 = vsel %vm1842, %v3735, %v3319
        %v3768 = vsel %vm1875, %v3736, %v3385
        %v3769 = vsel %vm1875, %v3737, %v3387
        %v3770 = vsel %vm1875, %v3738, %v3389
        %v3771 = vsel %vm1875, %v3739, %v3391
        %v3772 = vsel %vm1875, %v3740, %v3393
        %v3773 = vsel %vm1875, %v3741, %v3395
        %v3774 = vsel %vm1875, %v3742, %v3397
        %v3775 = vsel %vm1875, %v3743, %v3399
        %v3776 = vsel %vm1875, %v3744, %v3401
        %v3777 = vsel %vm1875, %v3745, %v3403
        %v3778 = vsel %vm1875, %v3746, %v3405
        %v3779 = vsel %vm1875, %v3747, %v3407
        %v3780 = vsel %vm1875, %v3748, %v3409
        %v3781 = vsel %vm1875, %v3749, %v3411
        %v3782 = vsel %vm1875, %v3750, %v3413
        %v3783 = vsel %vm1875, %v3751, %v3415
        %v3784 = vsel %vm1875, %v3752, %v3417
        %v3785 = vsel %vm1875, %v3753, %v3419
        %v3786 = vsel %vm1875, %v3754, %v3421
        %v3787 = vsel %vm1875, %v3755, %v3423
        %v3788 = vsel %vm1875, %v3756, %v3425
        %v3789 = vsel %vm1875, %v3757, %v3427
        %v3790 = vsel %vm1875, %v3758, %v3429
        %v3791 = vsel %vm1875, %v3759, %v3431
        %v3792 = vsel %vm1875, %v3760, %v3433
        %v3793 = vsel %vm1875, %v3761, %v3435
        %v3794 = vsel %vm1875, %v3762, %v3437
        %v3795 = vsel %vm1875, %v3763, %v3439
        %v3796 = vsel %vm1875, %v3764, %v3441
        %v3797 = vsel %vm1875, %v3765, %v3443
        %v3798 = vsel %vm1875, %v3766, %v3445
        %v3799 = vsel %vm1875, %v3767, %v3447
        %v3800 = vsel %vm1908, %v3768, %v3513
        %v3801 = vsel %vm1908, %v3769, %v3515
        %v3802 = vsel %vm1908, %v3770, %v3517
        %v3803 = vsel %vm1908, %v3771, %v3519
        %v3804 = vsel %vm1908, %v3772, %v3521
        %v3805 = vsel %vm1908, %v3773, %v3523
        %v3806 = vsel %vm1908, %v3774, %v3525
        %v3807 = vsel %vm1908, %v3775, %v3527
        %v3808 = vsel %vm1908, %v3776, %v3529
        %v3809 = vsel %vm1908, %v3777, %v3531
        %v3810 = vsel %vm1908, %v3778, %v3533
        %v3811 = vsel %vm1908, %v3779, %v3535
        %v3812 = vsel %vm1908, %v3780, %v3537
        %v3813 = vsel %vm1908, %v3781, %v3539
        %v3814 = vsel %vm1908, %v3782, %v3541
        %v3815 = vsel %vm1908, %v3783, %v3543
        %v3816 = vsel %vm1908, %v3784, %v3545
        %v3817 = vsel %vm1908, %v3785, %v3547
        %v3818 = vsel %vm1908, %v3786, %v3549
        %v3819 = vsel %vm1908, %v3787, %v3551
        %v3820 = vsel %vm1908, %v3788, %v3553
        %v3821 = vsel %vm1908, %v3789, %v3555
        %v3822 = vsel %vm1908, %v3790, %v3557
        %v3823 = vsel %vm1908, %v3791, %v3559
        %v3824 = vsel %vm1908, %v3792, %v3561
        %v3825 = vsel %vm1908, %v3793, %v3563
        %v3826 = vsel %vm1908, %v3794, %v3565
        %v3827 = vsel %vm1908, %v3795, %v3567
        %v3828 = vsel %vm1908, %v3796, %v3569
        %v3829 = vsel %vm1908, %v3797, %v3571
        %v3830 = vsel %vm1908, %v3798, %v3573
        %v3831 = vsel %vm1908, %v3799, %v3575
        %v3832 = vld [vmem:[%s4] sm:$0xff]
        %v3833 = vld [vmem:[%s4 + $0x8] sm:$0xff]
        %v3834 = vld [vmem:[%s4 + $0x10] sm:$0xff]
        %v3835 = vld [vmem:[%s4 + $0x18] sm:$0xff]
        %v3836 = vld [vmem:[%s4 + $0x20] sm:$0xff]
        %v3837 = vld [vmem:[%s4 + $0x28] sm:$0xff]
        %v3838 = vld [vmem:[%s4 + $0x30] sm:$0xff]
        %v3839 = vld [vmem:[%s4 + $0x38] sm:$0xff]
        %v3840 = vld [vmem:[%s4 + $0x40] sm:$0xff]
        %v3841 = vld [vmem:[%s4 + $0x48] sm:$0xff]
        %v3842 = vld [vmem:[%s4 + $0x50] sm:$0xff]
        %v3843 = vld [vmem:[%s4 + $0x58] sm:$0xff]
        %v3844 = vld [vmem:[%s4 + $0x60] sm:$0xff]
        %v3845 = vld [vmem:[%s4 + $0x68] sm:$0xff]
        %v3846 = vld [vmem:[%s4 + $0x70] sm:$0xff]
        %v3847 = vld [vmem:[%s4 + $0x78] sm:$0xff]
        %v3848 = vld [vmem:[%s4 + $0x80] sm:$0xff]
        %v3849 = vld [vmem:[%s4 + $0x88] sm:$0xff]
        %v3851 = vsel %vm351, %v2680, 0
        %v3854 = vsel %vm351, %v2681, 0
        %v3857 = vsel %vm351, %v2682, 0
        %v3860 = vsel %vm351, %v2683, 0
        %v3863 = vsel %vm351, %v2684, 0
        %v3866 = vsel %vm351, %v2685, 0
        %v3869 = vsel %vm351, %v2686, 0
        %v3872 = vsel %vm351, %v2687, 0
        %v3875 = vsel %vm351, %v2688, 0
        %v3878 = vsel %vm351, %v2689, 0
        %v3881 = vsel %vm351, %v2690, 0
        %v3884 = vsel %vm351, %v2691, 0
        %v3887 = vsel %vm351, %v2692, 0
        %v3890 = vsel %vm351, %v2693, 0
        %v3893 = vsel %vm351, %v2694, 0
        %v3896 = vsel %vm351, %v2695, 0
        %v3899 = vsel %vm351, %v2696, 0
        %v3902 = vsel %vm351, %v2697, 0
        %v3905 = vsel %vm351, %v2698, 0
        %v3908 = vsel %vm351, %v2699, 0
        %v3911 = vsel %vm351, %v2700, 0
        %v3914 = vsel %vm351, %v2701, 0
        %v3917 = vsel %vm351, %v2702, 0
        %v3920 = vsel %vm351, %v2703, 0
        %v3923 = vsel %vm351, %v2704, 0
        %v3926 = vsel %vm351, %v2705, 0
        %v3929 = vsel %vm351, %v2706, 0
        %v3932 = vsel %vm351, %v2707, 0
        %v3935 = vsel %vm351, %v2708, 0
        %v3938 = vsel %vm351, %v2709, 0
        %v3941 = vsel %vm351, %v2710, 0
        %v3944 = vsel %vm351, %v2711, 0
        %3946 = vmatprep.subr.mxu0 0.0
        %3947 = vmatpush1.msra.mxu0 %v3832
        %3948 = vmatprep.subr.mxu0 0.0
        %3949 = vmatpush1.msra.mxu0 %v3833
        %3950 = vmatprep.subr.mxu0 0.0
        %3951 = vmatpush1.msra.mxu0 %v3834
        %3952 = vmatprep.subr.mxu0 0.0
        %3953 = vmatpush1.msra.mxu0 %v3835
        %3954 = vmatprep.subr.mxu0 0.0
        %3955 = vmatpush1.msra.mxu0 %v3836
        %3956 = vmatprep.subr.mxu0 0.0
        %3957 = vmatpush1.msra.mxu0 %v3837
        %3958 = vmatprep.subr.mxu0 0.0
        %3959 = vmatpush1.msra.mxu0 %v3838
        %3960 = vmatprep.subr.mxu0 0.0
        %3961 = vmatpush1.msra.mxu0 %v3839
        %3962 = vmatprep.subr.mxu0 0.0
        %3963 = vmatpush1.msra.mxu0 %v3840
        %3964 = vmatprep.subr.mxu0 0.0
        %3965 = vmatpush1.msra.mxu0 %v3841
        %3966 = vmatprep.subr.mxu0 0.0
        %3967 = vmatpush1.msra.mxu0 %v3842
        %3968 = vmatprep.subr.mxu0 0.0
        %3969 = vmatpush1.msra.mxu0 %v3843
        %3970 = vmatprep.subr.mxu0 0.0
        %3971 = vmatpush1.msra.mxu0 %v3844
        %3972 = vmatprep.subr.mxu0 0.0
        %3973 = vmatpush1.msra.mxu0 %v3845
        %3974 = vmatprep.subr.mxu0 0.0
        %3975 = vmatpush1.msra.mxu0 %v3846
        %3976 = vmatprep.subr.mxu0 0.0
        %3977 = vmatpush1.msra.mxu0 %v3847
        %3978 = vmatprep.subr.mxu0 0.0
        %3979 = vmatpush1.msra.mxu0 %v3848
        %3980 = vmatprep.subr.mxu0 0.0
        %3981 = vmatpush1.msra.mxu0 %v3849
        %3982 = vmatprep.subr.mxu0 0.0
        %3983 = vmatpush1.msra.mxu0 0.0
        %3984 = vmatprep.subr.mxu0 0.0
        %3985 = vmatpush1.msra.mxu0 0.0
        %3986 = vmatprep.subr.mxu0 0.0
        %3987 = vmatpush1.msra.mxu0 0.0
        %3988 = vmatprep.subr.mxu0 0.0
        %3989 = vmatpush1.msra.mxu0 0.0
        %3990 = vmatprep.subr.mxu0 0.0
        %3991 = vmatpush1.msra.mxu0 0.0
        %3992 = vmatprep.subr.mxu0 0.0
        %3993 = vmatpush1.msra.mxu0 0.0
        %3994 = vmatprep.subr.mxu0 0.0
        %3995 = vmatpush1.msra.mxu0 0.0
        %3996 = vmatprep.subr.mxu0 0.0
        %3997 = vmatpush1.msra.mxu0 0.0
        %3998 = vmatprep.subr.mxu0 0.0
        %3999 = vmatpush1.msra.mxu0 0.0
        %4000 = vmatprep.subr.mxu0 0.0
        %4001 = vmatpush1.msra.mxu0 0.0
        %4002 = vmatprep.subr.mxu0 0.0
        %4003 = vmatpush1.msra.mxu0 0.0
        %4004 = vmatprep.subr.mxu0 0.0
        %4005 = vmatpush1.msra.mxu0 0.0
        %4006 = vmatprep.subr.mxu0 0.0
        %4007 = vmatpush1.msra.mxu0 0.0
        %4008 = vmatprep.subr.mxu0 0.0
        %4009 = vmatpush1.msra.mxu0 0.0
        %4010 = vmatprep.mubr.f32.mxu0 %v3851
        %4011 = vmatmul.mubr.f32.gmra.mrb[0].mxu0 %v3800
        %v4012 = vpop.f32.mrb[0].mxu0
        %v4013 = vadd.f32 0.0, %v4012
        %v4014 = vpop.f32.mrb[0].mxu0
        %4015 = vmatprep.mubr.f32.mxu0 %v3854
        %4016 = vmatmul.mubr.f32.gmra.mrb[0].mxu0 %v3801
        %v4017 = vpop.f32.mrb[0].mxu0
        %v4018 = vadd.f32 0.0, %v4017
        %v4019 = vpop.f32.mrb[0].mxu0
        %4020 = vmatprep.mubr.f32.mxu0 %v3857
        %4021 = vmatmul.mubr.f32.gmra.mrb[0].mxu0 %v3802
        %v4022 = vpop.f32.mrb[0].mxu0
        %v4023 = vadd.f32 0.0, %v4022
        %v4024 = vpop.f32.mrb[0].mxu0
        %4025 = vmatprep.mubr.f32.mxu0 %v3860
        %4026 = vmatmul.mubr.f32.gmra.mrb[0].mxu0 %v3803
        %v4027 = vpop.f32.mrb[0].mxu0
        %v4028 = vadd.f32 0.0, %v4027
        %v4029 = vpop.f32.mrb[0].mxu0
        %4030 = vmatprep.mubr.f32.mxu0 %v3863
        %4031 = vmatmul.mubr.f32.gmra.mrb[0].mxu0 %v3804
        %v4032 = vpop.f32.mrb[0].mxu0
        %v4033 = vadd.f32 0.0, %v4032
        %v4034 = vpop.f32.mrb[0].mxu0
        %4035 = vmatprep.mubr.f32.mxu0 %v3866
        %4036 = vmatmul.mubr.f32.gmra.mrb[0].mxu0 %v3805
        %v4037 = vpop.f32.mrb[0].mxu0
        %v4038 = vadd.f32 0.0, %v4037
        %v4039 = vpop.f32.mrb[0].mxu0
        %4040 = vmatprep.mubr.f32.mxu0 %v3869
        %4041 = vmatmul.mubr.f32.gmra.mrb[0].mxu0 %v3806
        %v4042 = vpop.f32.mrb[0].mxu0
        %v4043 = vadd.f32 0.0, %v4042
        %v4044 = vpop.f32.mrb[0].mxu0
        %4045 = vmatprep.mubr.f32.mxu0 %v3872
        %4046 = vmatmul.mubr.f32.gmra.mrb[0].mxu0 %v3807
        %v4047 = vpop.f32.mrb[0].mxu0
        %v4048 = vadd.f32 0.0, %v4047
        %v4049 = vpop.f32.mrb[0].mxu0
        %4050 = vmatprep.mubr.f32.mxu0 %v3875
        %4051 = vmatmul.mubr.f32.gmra.mrb[0].mxu0 %v3808
        %v4052 = vpop.f32.mrb[0].mxu0
        %v4053 = vadd.f32 0.0, %v4052
        %v4054 = vpop.f32.mrb[0].mxu0
        %4055 = vmatprep.mubr.f32.mxu0 %v3878
        %4056 = vmatmul.mubr.f32.gmra.mrb[0].mxu0 %v3809
        %v4057 = vpop.f32.mrb[0].mxu0
        %v4058 = vadd.f32 0.0, %v4057
        %v4059 = vpop.f32.mrb[0].mxu0
        %4060 = vmatprep.mubr.f32.mxu0 %v3881
        %4061 = vmatmul.mubr.f32.gmra.mrb[0].mxu0 %v3810
        %v4062 = vpop.f32.mrb[0].mxu0
        %v4063 = vadd.f32 0.0, %v4062
        %v4064 = vpop.f32.mrb[0].mxu0
        %4065 = vmatprep.mubr.f32.mxu0 %v3884
        %4066 = vmatmul.mubr.f32.gmra.mrb[0].mxu0 %v3811
        %v4067 = vpop.f32.mrb[0].mxu0
        %v4068 = vadd.f32 0.0, %v4067
        %v4069 = vpop.f32.mrb[0].mxu0
        %4070 = vmatprep.mubr.f32.mxu0 %v3887
        %4071 = vmatmul.mubr.f32.gmra.mrb[0].mxu0 %v3812
        %v4072 = vpop.f32.mrb[0].mxu0
        %v4073 = vadd.f32 0.0, %v4072
        %v4074 = vpop.f32.mrb[0].mxu0
        %4075 = vmatprep.mubr.f32.mxu0 %v3890
        %4076 = vmatmul.mubr.f32.gmra.mrb[0].mxu0 %v3813
        %v4077 = vpop.f32.mrb[0].mxu0
        %v4078 = vadd.f32 0.0, %v4077
        %v4079 = vpop.f32.mrb[0].mxu0
        %4080 = vmatprep.mubr.f32.mxu0 %v3893
        %4081 = vmatmul.mubr.f32.gmra.mrb[0].mxu0 %v3814
        %v4082 = vpop.f32.mrb[0].mxu0
        %v4083 = vadd.f32 0.0, %v4082
        %v4084 = vpop.f32.mrb[0].mxu0
        %4085 = vmatprep.mubr.f32.mxu0 %v3896
        %4086 = vmatmul.mubr.f32.gmra.mrb[0].mxu0 %v3815
        %v4087 = vpop.f32.mrb[0].mxu0
        %v4088 = vadd.f32 0.0, %v4087
        %v4089 = vpop.f32.mrb[0].mxu0
        %4090 = vmatprep.mubr.f32.mxu0 %v3899
        %4091 = vmatmul.mubr.f32.gmra.mrb[0].mxu0 %v3816
        %v4092 = vpop.f32.mrb[0].mxu0
        %v4093 = vadd.f32 0.0, %v4092
        %v4094 = vpop.f32.mrb[0].mxu0
        %4095 = vmatprep.mubr.f32.mxu0 %v3902
        %4096 = vmatmul.mubr.f32.gmra.mrb[0].mxu0 %v3817
        %v4097 = vpop.f32.mrb[0].mxu0
        %v4098 = vadd.f32 0.0, %v4097
        %v4099 = vpop.f32.mrb[0].mxu0
        %4100 = vmatprep.mubr.f32.mxu0 %v3905
        %4101 = vmatmul.mubr.f32.gmra.mrb[0].mxu0 %v3818
        %v4102 = vpop.f32.mrb[0].mxu0
        %v4103 = vadd.f32 0.0, %v4102
        %v4104 = vpop.f32.mrb[0].mxu0
        %4105 = vmatprep.mubr.f32.mxu0 %v3908
        %4106 = vmatmul.mubr.f32.gmra.mrb[0].mxu0 %v3819
        %v4107 = vpop.f32.mrb[0].mxu0
        %v4108 = vadd.f32 0.0, %v4107
        %v4109 = vpop.f32.mrb[0].mxu0
        %4110 = vmatprep.mubr.f32.mxu0 %v3911
        %4111 = vmatmul.mubr.f32.gmra.mrb[0].mxu0 %v3820
        %v4112 = vpop.f32.mrb[0].mxu0
        %v4113 = vadd.f32 0.0, %v4112
        %v4114 = vpop.f32.mrb[0].mxu0
        %4115 = vmatprep.mubr.f32.mxu0 %v3914
        %4116 = vmatmul.mubr.f32.gmra.mrb[0].mxu0 %v3821
        %v4117 = vpop.f32.mrb[0].mxu0
        %v4118 = vadd.f32 0.0, %v4117
        %v4119 = vpop.f32.mrb[0].mxu0
        %4120 = vmatprep.mubr.f32.mxu0 %v3917
        %4121 = vmatmul.mubr.f32.gmra.mrb[0].mxu0 %v3822
        %v4122 = vpop.f32.mrb[0].mxu0
        %v4123 = vadd.f32 0.0, %v4122
        %v4124 = vpop.f32.mrb[0].mxu0
        %4125 = vmatprep.mubr.f32.mxu0 %v3920
        %4126 = vmatmul.mubr.f32.gmra.mrb[0].mxu0 %v3823
        %v4127 = vpop.f32.mrb[0].mxu0
        %v4128 = vadd.f32 0.0, %v4127
        %v4129 = vpop.f32.mrb[0].mxu0
        %4130 = vmatprep.mubr.f32.mxu0 %v3923
        %4131 = vmatmul.mubr.f32.gmra.mrb[0].mxu0 %v3824
        %v4132 = vpop.f32.mrb[0].mxu0
        %v4133 = vadd.f32 0.0, %v4132
        %v4134 = vpop.f32.mrb[0].mxu0
        %4135 = vmatprep.mubr.f32.mxu0 %v3926
        %4136 = vmatmul.mubr.f32.gmra.mrb[0].mxu0 %v3825
        %v4137 = vpop.f32.mrb[0].mxu0
        %v4138 = vadd.f32 0.0, %v4137
        %v4139 = vpop.f32.mrb[0].mxu0
        %4140 = vmatprep.mubr.f32.mxu0 %v3929
        %4141 = vmatmul.mubr.f32.gmra.mrb[0].mxu0 %v3826
        %v4142 = vpop.f32.mrb[0].mxu0
        %v4143 = vadd.f32 0.0, %v4142
        %v4144 = vpop.f32.mrb[0].mxu0
        %4145 = vmatprep.mubr.f32.mxu0 %v3932
        %4146 = vmatmul.mubr.f32.gmra.mrb[0].mxu0 %v3827
        %v4147 = vpop.f32.mrb[0].mxu0
        %v4148 = vadd.f32 0.0, %v4147
        %v4149 = vpop.f32.mrb[0].mxu0
        %4150 = vmatprep.mubr.f32.mxu0 %v3935
        %4151 = vmatmul.mubr.f32.gmra.mrb[0].mxu0 %v3828
        %v4152 = vpop.f32.mrb[0].mxu0
        %v4153 = vadd.f32 0.0, %v4152
        %v4154 = vpop.f32.mrb[0].mxu0
        %4155 = vmatprep.mubr.f32.mxu0 %v3938
        %4156 = vmatmul.mubr.f32.gmra.mrb[0].mxu0 %v3829
        %v4157 = vpop.f32.mrb[0].mxu0
        %v4158 = vadd.f32 0.0, %v4157
        %v4159 = vpop.f32.mrb[0].mxu0
        %4160 = vmatprep.mubr.f32.mxu0 %v3941
        %4161 = vmatmul.mubr.f32.gmra.mrb[0].mxu0 %v3830
        %v4162 = vpop.f32.mrb[0].mxu0
        %v4163 = vadd.f32 0.0, %v4162
        %v4164 = vpop.f32.mrb[0].mxu0
        %4165 = vmatprep.mubr.f32.mxu0 %v3944
        %4166 = vmatmul.mubr.f32.gmra.mrb[0].mxu0 %v3831
        %v4167 = vpop.f32.mrb[0].mxu0
        %v4168 = vadd.f32 0.0, %v4167
        %v4169 = vpop.f32.mrb[0].mxu0
        %4170 = vdwg.mxu0
        %v4171 = vld [vmem:[%s5] sm:$0x1]
        %v4173 = vlaneseq
        %v4174 = vshrl.u32 %v4173, 7
        %v4175 = vsub.s32 0, %v4174
        %v4176 = vrot.slane %v4171, %v4175
        %v4178 = vmul.f32 %v4013, %v4176
        %v4179 = vmul.f32 %v4018, %v4176
        %v4180 = vmul.f32 %v4023, %v4176
        %v4181 = vmul.f32 %v4028, %v4176
        %v4182 = vmul.f32 %v4033, %v4176
        %v4183 = vmul.f32 %v4038, %v4176
        %v4184 = vmul.f32 %v4043, %v4176
        %v4185 = vmul.f32 %v4048, %v4176
        %v4186 = vmul.f32 %v4053, %v4176
        %v4187 = vmul.f32 %v4058, %v4176
        %v4188 = vmul.f32 %v4063, %v4176
        %v4189 = vmul.f32 %v4068, %v4176
        %v4190 = vmul.f32 %v4073, %v4176
        %v4191 = vmul.f32 %v4078, %v4176
        %v4192 = vmul.f32 %v4083, %v4176
        %v4193 = vmul.f32 %v4088, %v4176
        %v4194 = vmul.f32 %v4093, %v4176
        %v4195 = vmul.f32 %v4098, %v4176
        %v4196 = vmul.f32 %v4103, %v4176
        %v4197 = vmul.f32 %v4108, %v4176
        %v4198 = vmul.f32 %v4113, %v4176
        %v4199 = vmul.f32 %v4118, %v4176
        %v4200 = vmul.f32 %v4123, %v4176
        %v4201 = vmul.f32 %v4128, %v4176
        %v4202 = vmul.f32 %v4133, %v4176
        %v4203 = vmul.f32 %v4138, %v4176
        %v4204 = vmul.f32 %v4143, %v4176
        %v4205 = vmul.f32 %v4148, %v4176
        %v4206 = vmul.f32 %v4153, %v4176
        %v4207 = vmul.f32 %v4158, %v4176
        %v4208 = vmul.f32 %v4163, %v4176
        %v4209 = vmul.f32 %v4168, %v4176
        %v4210 = vld [vmem:[%s6] sm:$0x1]
        %v4212 = vlaneseq
        %v4213 = vshrl.u32 %v4212, 7
        %v4214 = vsub.s32 0, %v4213
        %v4215 = vrot.slane %v4210, %v4214
        %v4217 = vadd.f32 %v4178, %v4215
        %v4218 = vadd.f32 %v4179, %v4215
        %v4219 = vadd.f32 %v4180, %v4215
        %v4220 = vadd.f32 %v4181, %v4215
        %v4221 = vadd.f32 %v4182, %v4215
        %v4222 = vadd.f32 %v4183, %v4215
        %v4223 = vadd.f32 %v4184, %v4215
        %v4224 = vadd.f32 %v4185, %v4215
        %v4225 = vadd.f32 %v4186, %v4215
        %v4226 = vadd.f32 %v4187, %v4215
        %v4227 = vadd.f32 %v4188, %v4215
        %v4228 = vadd.f32 %v4189, %v4215
        %v4229 = vadd.f32 %v4190, %v4215
        %v4230 = vadd.f32 %v4191, %v4215
        %v4231 = vadd.f32 %v4192, %v4215
        %v4232 = vadd.f32 %v4193, %v4215
        %v4233 = vadd.f32 %v4194, %v4215
        %v4234 = vadd.f32 %v4195, %v4215
        %v4235 = vadd.f32 %v4196, %v4215
        %v4236 = vadd.f32 %v4197, %v4215
        %v4237 = vadd.f32 %v4198, %v4215
        %v4238 = vadd.f32 %v4199, %v4215
        %v4239 = vadd.f32 %v4200, %v4215
        %v4240 = vadd.f32 %v4201, %v4215
        %v4241 = vadd.f32 %v4202, %v4215
        %v4242 = vadd.f32 %v4203, %v4215
        %v4243 = vadd.f32 %v4204, %v4215
        %v4244 = vadd.f32 %v4205, %v4215
        %v4245 = vadd.f32 %v4206, %v4215
        %v4246 = vadd.f32 %v4207, %v4215
        %v4247 = vadd.f32 %v4208, %v4215
        %v4248 = vadd.f32 %v4209, %v4215
        %v4249 = vsel %vm351, %v4217, 0.0
        %v4250 = vsel %vm351, %v4218, 0.0
        %v4251 = vadd.f32 %v4249, %v4250
        %v4252 = vsel %vm351, %v4219, 0.0
        %v4253 = vadd.f32 %v4251, %v4252
        %v4254 = vsel %vm351, %v4220, 0.0
        %v4255 = vadd.f32 %v4253, %v4254
        %v4256 = vsel %vm351, %v4221, 0.0
        %v4257 = vadd.f32 %v4255, %v4256
        %v4258 = vsel %vm351, %v4222, 0.0
        %v4259 = vadd.f32 %v4257, %v4258
        %v4260 = vsel %vm351, %v4223, 0.0
        %v4261 = vadd.f32 %v4259, %v4260
        %v4262 = vsel %vm351, %v4224, 0.0
        %v4263 = vadd.f32 %v4261, %v4262
        %v4264 = vsel %vm351, %v4225, 0.0
        %v4265 = vadd.f32 %v4263, %v4264
        %v4266 = vsel %vm351, %v4226, 0.0
        %v4267 = vadd.f32 %v4265, %v4266
        %v4268 = vsel %vm351, %v4227, 0.0
        %v4269 = vadd.f32 %v4267, %v4268
        %v4270 = vsel %vm351, %v4228, 0.0
        %v4271 = vadd.f32 %v4269, %v4270
        %v4272 = vsel %vm351, %v4229, 0.0
        %v4273 = vadd.f32 %v4271, %v4272
        %v4274 = vsel %vm351, %v4230, 0.0
        %v4275 = vadd.f32 %v4273, %v4274
        %v4276 = vsel %vm351, %v4231, 0.0
        %v4277 = vadd.f32 %v4275, %v4276
        %v4278 = vsel %vm351, %v4232, 0.0
        %v4279 = vadd.f32 %v4277, %v4278
        %v4280 = vsel %vm351, %v4233, 0.0
        %v4281 = vadd.f32 %v4279, %v4280
        %v4282 = vsel %vm351, %v4234, 0.0
        %v4283 = vadd.f32 %v4281, %v4282
        %v4284 = vsel %vm351, %v4235, 0.0
        %v4285 = vadd.f32 %v4283, %v4284
        %v4286 = vsel %vm351, %v4236, 0.0
        %v4287 = vadd.f32 %v4285, %v4286
        %v4288 = vsel %vm351, %v4237, 0.0
        %v4289 = vadd.f32 %v4287, %v4288
        %v4290 = vsel %vm351, %v4238, 0.0
        %v4291 = vadd.f32 %v4289, %v4290
        %v4292 = vsel %vm351, %v4239, 0.0
        %v4293 = vadd.f32 %v4291, %v4292
        %v4294 = vsel %vm351, %v4240, 0.0
        %v4295 = vadd.f32 %v4293, %v4294
        %v4296 = vsel %vm351, %v4241, 0.0
        %v4297 = vadd.f32 %v4295, %v4296
        %v4298 = vsel %vm351, %v4242, 0.0
        %v4299 = vadd.f32 %v4297, %v4298
        %v4300 = vsel %vm351, %v4243, 0.0
        %v4301 = vadd.f32 %v4299, %v4300
        %v4302 = vsel %vm351, %v4244, 0.0
        %v4303 = vadd.f32 %v4301, %v4302
        %v4304 = vsel %vm351, %v4245, 0.0
        %v4305 = vadd.f32 %v4303, %v4304
        %v4306 = vsel %vm351, %v4246, 0.0
        %v4307 = vadd.f32 %v4305, %v4306
        %v4308 = vsel %vm351, %v4247, 0.0
        %v4309 = vadd.f32 %v4307, %v4308
        %v4310 = vsel %vm351, %v4248, 0.0
        %v4311 = vadd.f32 %v4309, %v4310
        %v4312 = vrot.slane %v4311, 4
        %v4313 = vadd.f32 %v4311, %v4312
        %v4314 = vrot.slane %v4313, 2
        %v4315 = vadd.f32 %v4313, %v4314
        %v4316 = vrot.slane %v4315, 1
        %v4317 = vadd.f32 %v4315, %v4316
        %v4318 = vrcp.pop 256.0
        %v4319 = vmul.f32 %v4317, %v4318
        %v4320 = vld [vmem:[%s7] sm:$0xff]
        %v4321 = vld [vmem:[%s7 + $0x8] sm:$0xff]
        %v4323 = vsel %vm351, %v4319, 0
        %4325 = vmatprep.subr.mxu0 0.0
        %4326 = vmatpush1.msra.mxu0 %v4320
        %4327 = vmatprep.subr.mxu0 0.0
        %4328 = vmatpush1.msra.mxu0 %v4321
        %4329 = vmatprep.subr.mxu0 0.0
        %4330 = vmatpush1.msra.mxu0 0.0
        %4331 = vmatprep.subr.mxu0 0.0
        %4332 = vmatpush1.msra.mxu0 0.0
        %4333 = vmatprep.subr.mxu0 0.0
        %4334 = vmatpush1.msra.mxu0 0.0
        %4335 = vmatprep.subr.mxu0 0.0
        %4336 = vmatpush1.msra.mxu0 0.0
        %4337 = vmatprep.subr.mxu0 0.0
        %4338 = vmatpush1.msra.mxu0 0.0
        %4339 = vmatprep.subr.mxu0 0.0
        %4340 = vmatpush1.msra.mxu0 0.0
        %4341 = vmatprep.subr.mxu0 0.0
        %4342 = vmatpush1.msra.mxu0 0.0
        %4343 = vmatprep.subr.mxu0 0.0
        %4344 = vmatpush1.msra.mxu0 0.0
        %4345 = vmatprep.subr.mxu0 0.0
        %4346 = vmatpush1.msra.mxu0 0.0
        %4347 = vmatprep.subr.mxu0 0.0
        %4348 = vmatpush1.msra.mxu0 0.0
        %4349 = vmatprep.subr.mxu0 0.0
        %4350 = vmatpush1.msra.mxu0 0.0
        %4351 = vmatprep.subr.mxu0 0.0
        %4352 = vmatpush1.msra.mxu0 0.0
        %4353 = vmatprep.subr.mxu0 0.0
        %4354 = vmatpush1.msra.mxu0 0.0
        %4355 = vmatprep.subr.mxu0 0.0
        %4356 = vmatpush1.msra.mxu0 0.0
        %4357 = vmatprep.subr.mxu0 0.0
        %4358 = vmatpush1.msra.mxu0 0.0
        %4359 = vmatprep.subr.mxu0 0.0
        %4360 = vmatpush1.msra.mxu0 0.0
        %4361 = vmatprep.subr.mxu0 0.0
        %4362 = vmatpush1.msra.mxu0 0.0
        %4363 = vmatprep.subr.mxu0 0.0
        %4364 = vmatpush1.msra.mxu0 0.0
        %4365 = vmatprep.subr.mxu0 0.0
        %4366 = vmatpush1.msra.mxu0 0.0
        %4367 = vmatprep.subr.mxu0 0.0
        %4368 = vmatpush1.msra.mxu0 0.0
        %4369 = vmatprep.subr.mxu0 0.0
        %4370 = vmatpush1.msra.mxu0 0.0
        %4371 = vmatprep.subr.mxu0 0.0
        %4372 = vmatpush1.msra.mxu0 0.0
        %4373 = vmatprep.subr.mxu0 0.0
        %4374 = vmatpush1.msra.mxu0 0.0
        %4375 = vmatprep.subr.mxu0 0.0
        %4376 = vmatpush1.msra.mxu0 0.0
        %4377 = vmatprep.subr.mxu0 0.0
        %4378 = vmatpush1.msra.mxu0 0.0
        %4379 = vmatprep.subr.mxu0 0.0
        %4380 = vmatpush1.msra.mxu0 0.0
        %4381 = vmatprep.subr.mxu0 0.0
        %4382 = vmatpush1.msra.mxu0 0.0
        %4383 = vmatprep.subr.mxu0 0.0
        %4384 = vmatpush1.msra.mxu0 0.0
        %4385 = vmatprep.subr.mxu0 0.0
        %4386 = vmatpush1.msra.mxu0 0.0
        %4387 = vmatprep.subr.mxu0 0.0
        %4388 = vmatpush1.msra.mxu0 0.0
        %4389 = vmatprep.mubr.f32.mxu0 0.0
        %4390 = vmatmul.mubr.f32.gmra.mrb[0].mxu0 %v4323
        %v4391 = vpop.f32.mrb[0].mxu0
        %v4392 = vadd.f32 0.0, %v4391
        %v4393 = vpop.f32.mrb[0].mxu0
        %4394 = vdwg.mxu0
        %v4395 = vmax.f32 %v4392, 0.0
        %v4396 = vld [vmem:[%s8] sm:$0xf]
        %vm4397 = vcmask 31744
        %v4399 = vsel %vm4397, %v4395, 0
        %vm4401 = vcmask 1043456
        %v4403 = vsel %vm4401, %v4396, 0
        %4405 = vmatprep.subr.mxu0 0.0
        %4406 = vmatpush1.msra.mxu0 %v4403
        %4407 = vmatprep.subr.mxu0 0.0
        %4408 = vmatpush1.msra.mxu0 0.0
        %4409 = vmatprep.subr.mxu0 0.0
        %4410 = vmatpush1.msra.mxu0 0.0
        %4411 = vmatprep.subr.mxu0 0.0
        %4412 = vmatpush1.msra.mxu0 0.0
        %4413 = vmatprep.subr.mxu0 0.0
        %4414 = vmatpush1.msra.mxu0 0.0
        %4415 = vmatprep.subr.mxu0 0.0
        %4416 = vmatpush1.msra.mxu0 0.0
        %4417 = vmatprep.subr.mxu0 0.0
        %4418 = vmatpush1.msra.mxu0 0.0
        %4419 = vmatprep.subr.mxu0 0.0
        %4420 = vmatpush1.msra.mxu0 0.0
        %4421 = vmatprep.subr.mxu0 0.0
        %4422 = vmatpush1.msra.mxu0 0.0
        %4423 = vmatprep.subr.mxu0 0.0
        %4424 = vmatpush1.msra.mxu0 0.0
        %4425 = vmatprep.subr.mxu0 0.0
        %4426 = vmatpush1.msra.mxu0 0.0
        %4427 = vmatprep.subr.mxu0 0.0
        %4428 = vmatpush1.msra.mxu0 0.0
        %4429 = vmatprep.subr.mxu0 0.0
        %4430 = vmatpush1.msra.mxu0 0.0
        %4431 = vmatprep.subr.mxu0 0.0
        %4432 = vmatpush1.msra.mxu0 0.0
        %4433 = vmatprep.subr.mxu0 0.0
        %4434 = vmatpush1.msra.mxu0 0.0
        %4435 = vmatprep.subr.mxu0 0.0
        %4436 = vmatpush1.msra.mxu0 0.0
        %4437 = vmatprep.subr.mxu0 0.0
        %4438 = vmatpush1.msra.mxu0 0.0
        %4439 = vmatprep.subr.mxu0 0.0
        %4440 = vmatpush1.msra.mxu0 0.0
        %4441 = vmatprep.subr.mxu0 0.0
        %4442 = vmatpush1.msra.mxu0 0.0
        %4443 = vmatprep.subr.mxu0 0.0
        %4444 = vmatpush1.msra.mxu0 0.0
        %4445 = vmatprep.subr.mxu0 0.0
        %4446 = vmatpush1.msra.mxu0 0.0
        %4447 = vmatprep.subr.mxu0 0.0
        %4448 = vmatpush1.msra.mxu0 0.0
        %4449 = vmatprep.subr.mxu0 0.0
        %4450 = vmatpush1.msra.mxu0 0.0
        %4451 = vmatprep.subr.mxu0 0.0
        %4452 = vmatpush1.msra.mxu0 0.0
        %4453 = vmatprep.subr.mxu0 0.0
        %4454 = vmatpush1.msra.mxu0 0.0
        %4455 = vmatprep.subr.mxu0 0.0
        %4456 = vmatpush1.msra.mxu0 0.0
        %4457 = vmatprep.subr.mxu0 0.0
        %4458 = vmatpush1.msra.mxu0 0.0
        %4459 = vmatprep.subr.mxu0 0.0
        %4460 = vmatpush1.msra.mxu0 0.0
        %4461 = vmatprep.subr.mxu0 0.0
        %4462 = vmatpush1.msra.mxu0 0.0
        %4463 = vmatprep.subr.mxu0 0.0
        %4464 = vmatpush1.msra.mxu0 0.0
        %4465 = vmatprep.subr.mxu0 0.0
        %4466 = vmatpush1.msra.mxu0 0.0
        %4467 = vmatprep.subr.mxu0 0.0
        %4468 = vmatpush1.msra.mxu0 0.0
        %4469 = vmatprep.mubr.f32.mxu0 0.0
        %4470 = vmatmul.mubr.f32.gmra.mrb[0].mxu0 %v4399
        %v4471 = vpop.f32.mrb[0].mxu0
        %v4472 = vadd.f32 0.0, %v4471
        %v4473 = vpop.f32.mrb[0].mxu0
        %4474 = vdwg.mxu0
        %v4475 = vxor.u32 %v4472, 2147483648
        %v4476 = vmul.f32 %v4475, 1.442695
        %v4477 = vpow.pop %v4476
        %v4478 = vadd.f32 %v4477, 1.0
        %v4479 = vrcp.pop %v4478
        %v4480 = vmul.f32 1.0, %v4479
        %v4481 = vlaneseq
        %v4482 = vshrl.u32 %v4481, 7
        %v4483 = vsub.s32 0, %v4482
        %v4484 = vrot.slane %v4480, %v4483
        %v4485 = vmul.f32 %v4217, %v4484
        %v4486 = vmul.f32 %v4218, %v4484
        %v4487 = vmul.f32 %v4219, %v4484
        %v4488 = vmul.f32 %v4220, %v4484
        %v4489 = vmul.f32 %v4221, %v4484
        %v4490 = vmul.f32 %v4222, %v4484
        %v4491 = vmul.f32 %v4223, %v4484
        %v4492 = vmul.f32 %v4224, %v4484
        %v4493 = vmul.f32 %v4225, %v4484
        %v4494 = vmul.f32 %v4226, %v4484
        %v4495 = vmul.f32 %v4227, %v4484
        %v4496 = vmul.f32 %v4228, %v4484
        %v4497 = vmul.f32 %v4229, %v4484
        %v4498 = vmul.f32 %v4230, %v4484
        %v4499 = vmul.f32 %v4231, %v4484
        %v4500 = vmul.f32 %v4232, %v4484
        %v4501 = vmul.f32 %v4233, %v4484
        %v4502 = vmul.f32 %v4234, %v4484
        %v4503 = vmul.f32 %v4235, %v4484
        %v4504 = vmul.f32 %v4236, %v4484
        %v4505 = vmul.f32 %v4237, %v4484
        %v4506 = vmul.f32 %v4238, %v4484
        %v4507 = vmul.f32 %v4239, %v4484
        %v4508 = vmul.f32 %v4240, %v4484
        %v4509 = vmul.f32 %v4241, %v4484
        %v4510 = vmul.f32 %v4242, %v4484
        %v4511 = vmul.f32 %v4243, %v4484
        %v4512 = vmul.f32 %v4244, %v4484
        %v4513 = vmul.f32 %v4245, %v4484
        %v4514 = vmul.f32 %v4246, %v4484
        %v4515 = vmul.f32 %v4247, %v4484
        %v4516 = vmul.f32 %v4248, %v4484
        %v4517 = vadd.f32 %v4485, %v461
        %v4518 = vadd.f32 %v4486, %v462
        %v4519 = vadd.f32 %v4487, %v463
        %v4520 = vadd.f32 %v4488, %v464
        %v4521 = vadd.f32 %v4489, %v465
        %v4522 = vadd.f32 %v4490, %v466
        %v4523 = vadd.f32 %v4491, %v467
        %v4524 = vadd.f32 %v4492, %v468
        %v4525 = vadd.f32 %v4493, %v469
        %v4526 = vadd.f32 %v4494, %v470
        %v4527 = vadd.f32 %v4495, %v471
        %v4528 = vadd.f32 %v4496, %v472
        %v4529 = vadd.f32 %v4497, %v473
        %v4530 = vadd.f32 %v4498, %v474
        %v4531 = vadd.f32 %v4499, %v475
        %v4532 = vadd.f32 %v4500, %v476
        %v4533 = vadd.f32 %v4501, %v477
        %v4534 = vadd.f32 %v4502, %v478
        %v4535 = vadd.f32 %v4503, %v479
        %v4536 = vadd.f32 %v4504, %v480
        %v4537 = vadd.f32 %v4505, %v481
        %v4538 = vadd.f32 %v4506, %v482
        %v4539 = vadd.f32 %v4507, %v483
        %v4540 = vadd.f32 %v4508, %v484
        %v4541 = vadd.f32 %v4509, %v485
        %v4542 = vadd.f32 %v4510, %v486
        %v4543 = vadd.f32 %v4511, %v487
        %v4544 = vadd.f32 %v4512, %v488
        %v4545 = vadd.f32 %v4513, %v489
        %v4546 = vadd.f32 %v4514, %v490
        %v4547 = vadd.f32 %v4515, %v491
        %v4548 = vadd.f32 %v4516, %v492
        %v4549 = vmax.f32 %v4517, 0.0
        %v4550 = vmax.f32 %v4518, 0.0
        %v4551 = vmax.f32 %v4519, 0.0
        %v4552 = vmax.f32 %v4520, 0.0
        %v4553 = vmax.f32 %v4521, 0.0
        %v4554 = vmax.f32 %v4522, 0.0
        %v4555 = vmax.f32 %v4523, 0.0
        %v4556 = vmax.f32 %v4524, 0.0
        %v4557 = vmax.f32 %v4525, 0.0
        %v4558 = vmax.f32 %v4526, 0.0
        %v4559 = vmax.f32 %v4527, 0.0
        %v4560 = vmax.f32 %v4528, 0.0
        %v4561 = vmax.f32 %v4529, 0.0
        %v4562 = vmax.f32 %v4530, 0.0
        %v4563 = vmax.f32 %v4531, 0.0
        %v4564 = vmax.f32 %v4532, 0.0
        %v4565 = vmax.f32 %v4533, 0.0
        %v4566 = vmax.f32 %v4534, 0.0
        %v4567 = vmax.f32 %v4535, 0.0
        %v4568 = vmax.f32 %v4536, 0.0
        %v4569 = vmax.f32 %v4537, 0.0
        %v4570 = vmax.f32 %v4538, 0.0
        %v4571 = vmax.f32 %v4539, 0.0
        %v4572 = vmax.f32 %v4540, 0.0
        %v4573 = vmax.f32 %v4541, 0.0
        %v4574 = vmax.f32 %v4542, 0.0
        %v4575 = vmax.f32 %v4543, 0.0
        %v4576 = vmax.f32 %v4544, 0.0
        %v4577 = vmax.f32 %v4545, 0.0
        %v4578 = vmax.f32 %v4546, 0.0
        %v4579 = vmax.f32 %v4547, 0.0
        %v4580 = vmax.f32 %v4548, 0.0
        %4581 = vst.msk [vmem:[%s350] sm:$0xff] %vm351, %v4549
        %4582 = vst.msk [vmem:[%s350 + $0x8] sm:$0xff] %vm351, %v4550
        %4583 = vst.msk [vmem:[%s350 + $0x10] sm:$0xff] %vm351, %v4551
        %4584 = vst.msk [vmem:[%s350 + $0x18] sm:$0xff] %vm351, %v4552
        %4585 = vst.msk [vmem:[%s350 + $0x20] sm:$0xff] %vm351, %v4553
        %4586 = vst.msk [vmem:[%s350 + $0x28] sm:$0xff] %vm351, %v4554
        %4587 = vst.msk [vmem:[%s350 + $0x30] sm:$0xff] %vm351, %v4555
        %4588 = vst.msk [vmem:[%s350 + $0x38] sm:$0xff] %vm351, %v4556
        %4589 = vst.msk [vmem:[%s350 + $0x40] sm:$0xff] %vm351, %v4557
        %4590 = vst.msk [vmem:[%s350 + $0x48] sm:$0xff] %vm351, %v4558
        %4591 = vst.msk [vmem:[%s350 + $0x50] sm:$0xff] %vm351, %v4559
        %4592 = vst.msk [vmem:[%s350 + $0x58] sm:$0xff] %vm351, %v4560
        %4593 = vst.msk [vmem:[%s350 + $0x60] sm:$0xff] %vm351, %v4561
        %4594 = vst.msk [vmem:[%s350 + $0x68] sm:$0xff] %vm351, %v4562
        %4595 = vst.msk [vmem:[%s350 + $0x70] sm:$0xff] %vm351, %v4563
        %4596 = vst.msk [vmem:[%s350 + $0x78] sm:$0xff] %vm351, %v4564
        %4597 = vst.msk [vmem:[%s350 + $0x80] sm:$0xff] %vm351, %v4565
        %4598 = vst.msk [vmem:[%s350 + $0x88] sm:$0xff] %vm351, %v4566
        %4599 = vst.msk [vmem:[%s350 + $0x90] sm:$0xff] %vm351, %v4567
        %4600 = vst.msk [vmem:[%s350 + $0x98] sm:$0xff] %vm351, %v4568
        %4601 = vst.msk [vmem:[%s350 + $0xa0] sm:$0xff] %vm351, %v4569
        %4602 = vst.msk [vmem:[%s350 + $0xa8] sm:$0xff] %vm351, %v4570
        %4603 = vst.msk [vmem:[%s350 + $0xb0] sm:$0xff] %vm351, %v4571
        %4604 = vst.msk [vmem:[%s350 + $0xb8] sm:$0xff] %vm351, %v4572
        %4605 = vst.msk [vmem:[%s350 + $0xc0] sm:$0xff] %vm351, %v4573
        %4606 = vst.msk [vmem:[%s350 + $0xc8] sm:$0xff] %vm351, %v4574
        %4607 = vst.msk [vmem:[%s350 + $0xd0] sm:$0xff] %vm351, %v4575
        %4608 = vst.msk [vmem:[%s350 + $0xd8] sm:$0xff] %vm351, %v4576
        %4609 = vst.msk [vmem:[%s350 + $0xe0] sm:$0xff] %vm351, %v4577
        %4610 = vst.msk [vmem:[%s350 + $0xe8] sm:$0xff] %vm351, %v4578
        %4611 = vst.msk [vmem:[%s350 + $0xf0] sm:$0xff] %vm351, %v4579
        %4612 = vst.msk [vmem:[%s350 + $0xf8] sm:$0xff] %vm351, %v4580
        %s4613 = sand.u32 %s228, 1
        %s4614 = scalar_lea.sflag [#allocation6], %s4613
        %s4615 = sand.u32 %s228, 1
        %s4616 = smul.addr %s4615, 256
        %s4617 = scalar_lea.vmem [#allocation7], %s4616
        // Predicated region
        $region61: #{tpu_custom_call.1} parent=55 // pred_check
          %p4618 = pneg %p238
        $region62: #{tpu_custom_call.1} parent=55 // pred_check_branch
          %4620 = sbr.rel (%p4618) target = $region64
        $region63: #{tpu_custom_call.1} parent=55 // pred_region
          %s4622 = ssub.s32 4096, 4096
          %4623 = vsyncadd %s4614, %s4622
          %s4624 = smul.addr %s26, 32
          %s4625 = smul.addr %s4624, 128
          %s4626 = scalar_lea.hbm %s9, %s4625
          %s4627 = sshll.u32 %s4617, 4
          %s4628 = int_to_ptr.vmem [resolvable:$true] %s4627
          %4633 = dma.vmem_to_hbm [thread:$0]  %s4628, 4096, %s4626, %s4614, 128, 128, 8
        $region64: #{tpu_custom_call.1} parent=55 // pred_fallthru
          _
      $region56: #{tpu_custom_call.1} parent=5 // pred_fallthru
        _
      %p4634 = scmp.le.s32.totalorder 2, %s21
      // Predicated region
      $region65: #{tpu_custom_call.1} parent=5 // pred_check
        %p4635 = pneg %p4634
      $region66: #{tpu_custom_call.1} parent=5 // pred_check_branch
        %4637 = sbr.rel (%p4635) target = $region68
      $region67: #{tpu_custom_call.1} parent=5 // pred_region
        %s4638 = ssub.s32 %s21, 2
        // Predicated region
        $region69: #{tpu_custom_call.1} parent=67 // pred_check
          %p4639 = pneg %p244
        $region70: #{tpu_custom_call.1} parent=67 // pred_check_branch
          %4641 = sbr.rel (%p4639) target = $region72
        $region71: #{tpu_custom_call.1} parent=67 // pred_region
          %s4642 = sand.u32 %s229, 1
          %s4643 = scalar_lea.sflag [#allocation6], %s4642
          %s4644 = sand.u32 %s229, 1
          %s4645 = smul.addr %s4644, 256
          %s4646 = scalar_lea.vmem [#allocation7], %s4645
          %4647 = dma.done %s4643, 4096
        $region72: #{tpu_custom_call.1} parent=67 // pred_fallthru
          _
      $region68: #{tpu_custom_call.1} parent=5 // pred_fallthru
        _
    $region6: #{tpu_custom_call.1} parent=1 // loop_footer
      %s25 = sadd.s32 1, %s21
    $region7: #{tpu_custom_call.1} parent=1 // loop_footer_branch
      %20 = sbr.rel target = $region3
    $region8: #{tpu_custom_call.1} parent=1 // loop_exit
      _
    %4648 = vsyncpa [#allocation5], 1
    %s4649 = scalar_lea.sflag [#allocation5], 1
    %4650 = vsyncpa %s4649, 1
    %4651 = vsyncpa [#allocation6], 1
    %s4652 = scalar_lea.sflag [#allocation6], 1
    %4653 = vsyncpa %s4652, 1

</llo_original>
